<compile_context>
chip_gen: v6e
topology: v6e:2x2x1
jax: 0.10.0
libtpu: 0.0.40
codegen_flags: <defaults>
</compile_context>

<pallas_src>
import jax
import jax.numpy as jnp
from jax.experimental import pallas as pl
from jax.experimental.pallas import tpu as pltpu

IN_FEATURES = 6400
HIDDEN = 1000
HIDDEN_PAD = 1024            # lane-dense (multiple of 128)
OUT_FEATURES = 4

N_CORE = 2                   # outer grid axis -> the 2 TensorCores on v7x
N_INNER = 2                  # inner pipelined axis per core
N_SLABS = N_CORE * N_INNER   # 4 contiguous weight slabs
NH = HIDDEN_PAD // N_SLABS   # 256 hidden columns per slab


def fc1_kernel(x_ref, w1_ref, b1_ref, h_ref):
    """One hidden slab of fc1:  relu(x @ W1_slab + b1_slab).

    x_ref : (B, 6400)   bf16  (full block, grid-invariant -> DMA'd once)
    w1_ref: (6400, 256) bf16  (one contiguous weight slab; leading slab dim squeezed)
    b1_ref: (1, 256)    f32
    h_ref : (B, 256)    bf16  (lane-dense output slab)
    """
    acc = jnp.dot(x_ref[...], w1_ref[...], preferred_element_type=jnp.float32)
    h_ref[...] = jnp.maximum(acc + b1_ref[...], 0.0).astype(h_ref.dtype)


def _dimension_semantics():
    """CORE_PARALLEL on v7x (2 TCs/chip) so the weight stream is sharded across
    both cores' HBM paths; plain PARALLEL (harmless loop) on v5e/v6e."""
    kind = jax.devices()[0].device_kind.lower()
    core_parallel = getattr(pltpu, "CORE_PARALLEL", None)
    if core_parallel is not None and ("v7" in kind or "7x" in kind):
        return (core_parallel, pltpu.ARBITRARY)
    return (pltpu.PARALLEL, pltpu.ARBITRARY)


def _fc1_pallas(xb, w1s, b1p):
    assert w1s.shape == (N_SLABS, IN_FEATURES, NH), w1s.shape
    assert w1s.dtype == jnp.bfloat16
    assert b1p.shape == (1, HIDDEN_PAD), b1p.shape
    B = xb.shape[0]

    bytes_accessed = (w1s.size * 2          # bf16 weight stream (dominant)
                      + xb.size * 2         # bf16 activations
                      + b1p.size * 4        # f32 bias
                      + B * HIDDEN_PAD * 2)  # bf16 hidden writeback
    cost = pl.CostEstimate(
        flops=2 * B * IN_FEATURES * HIDDEN_PAD,
        transcendentals=0,
        bytes_accessed=bytes_accessed,
    )

    grid_spec = pltpu.PrefetchScalarGridSpec(
        num_scalar_prefetch=0,
        grid=(N_CORE, N_INNER),
        in_specs=[
            # x: grid-invariant full block.
            pl.BlockSpec((B, IN_FEATURES), lambda c, j: (0, 0)),
            # W1: one contiguous (6400, 256) slab per step; slab dim squeezed.
            pl.BlockSpec((None, IN_FEATURES, NH),
                         lambda c, j: (c * N_INNER + j, 0, 0)),
            # b1: matching 256-wide bias slice.
            pl.BlockSpec((1, NH), lambda c, j: (0, c * N_INNER + j)),
        ],
        out_specs=pl.BlockSpec((B, NH), lambda c, j: (0, c * N_INNER + j)),
    )
    return pl.pallas_call(
        fc1_kernel,
        out_shape=jax.ShapeDtypeStruct((B, HIDDEN_PAD), jnp.bfloat16),
        grid_spec=grid_spec,
        compiler_params=pltpu.CompilerParams(
            dimension_semantics=_dimension_semantics(),
            vmem_limit_bytes=32 * 1024 * 1024,
        ),
        cost_estimate=cost,
    )(xb, w1s, b1p)


def prepare_params(w1, b1, w2, b2):
    """Pad HIDDEN 1000 -> 1024, cast W1 to bf16 once, and lay W1 out as
    (N_SLABS, 6400, NH) contiguous slabs so each grid step is one contiguous
    HBM DMA. W2 is zero-row padded to (1024, 4) so fc2 needs no slice."""
    w1p = jnp.zeros((IN_FEATURES, HIDDEN_PAD), jnp.bfloat16)
    w1p = w1p.at[:, :HIDDEN].set(w1.astype(jnp.bfloat16))
    w1s = w1p.reshape(IN_FEATURES, N_SLABS, NH).transpose(1, 0, 2)  # (4,6400,256)

    b1p = jnp.zeros((1, HIDDEN_PAD), jnp.float32)
    b1p = b1p.at[:, :HIDDEN].set(b1.astype(jnp.float32))

    w2p = jnp.zeros((HIDDEN_PAD, OUT_FEATURES), jnp.float32)
    w2p = w2p.at[:HIDDEN, :].set(w2.astype(jnp.float32))
    return w1s, b1p, w2p, b2.astype(jnp.float32)


def net_forward(x, w1s, b1p, w2p, b2):
    h = _fc1_pallas(x.astype(jnp.bfloat16), w1s, b1p)     # (B, 1024) bf16
    # fc2 hoisted to plain JAX: <0.01% of the work, keeps the kernel output
    # lane-dense and W2/b2 out of the kernel VMEM budget. Padded rows of w2p
    # are zero, so no slicing of h is needed.
    return jnp.dot(h.astype(jnp.float32), w2p,
                   preferred_element_type=jnp.float32) + b2


def init_params(key):
    """Deterministic init mimicking torch.nn.Linear's U(-1/sqrt(in), 1/sqrt(in))."""
    k1, k2, k3, k4 = jax.random.split(key, 4)
    bound1 = 1.0 / jnp.sqrt(float(IN_FEATURES))
    bound2 = 1.0 / jnp.sqrt(float(HIDDEN))
    w1 = jax.random.uniform(k1, (IN_FEATURES, HIDDEN), jnp.float32, -bound1, bound1)
    b1 = jax.random.uniform(k2, (HIDDEN,), jnp.float32, -bound1, bound1)
    w2 = jax.random.uniform(k3, (HIDDEN, OUT_FEATURES), jnp.float32, -bound2, bound2)
    b2 = jax.random.uniform(k4, (OUT_FEATURES,), jnp.float32, -bound2, bound2)
    return w1, b1, w2, b2


if __name__ == "__main__":
    key = jax.random.PRNGKey(0)
    kx, kp = jax.random.split(key)

    B = 2  # small batch
    x = jax.random.normal(kx, (B, IN_FEATURES), jnp.float32)
    w1, b1, w2, b2 = init_params(kp)

    params = prepare_params(w1, b1, w2, b2)
    fwd = jax.jit(net_forward)
    out = fwd(x, *params)
    out = jax.block_until_ready(out)

    # Pure-JAX reference using the same bf16-rounded inputs for fc1, f32 fc2.
    xb = x.astype(jnp.bfloat16).astype(jnp.float32)
    w1b = w1.astype(jnp.bfloat16).astype(jnp.float32)
    h_ref = jnp.maximum(xb @ w1b + b1, 0.0)
    ref = h_ref @ w2 + b2

    assert out.shape == (B, OUT_FEATURES)
    assert jnp.allclose(out, ref, atol=2e-2, rtol=2e-2)

    print("KERNEL_OK")
</pallas_src>

<mosaic_0001>
module attributes {stable_mosaic.version = 11 : i64} {
  func.func @fc1_kernel(%arg0: i32, %arg1: i32, %arg2: memref<2x6400xbf16, #tpu.memory_space<vmem>>, %arg3: memref<1x6400x256xbf16, #tpu.memory_space<vmem>>, %arg4: memref<1x256xf32, #tpu.memory_space<vmem>>, %arg5: memref<2x256xbf16, #tpu.memory_space<vmem>>) attributes {dimension_semantics = [#tpu.dimension_semantics<parallel>, #tpu.dimension_semantics<arbitrary>], iteration_bounds = array<i64: 2, 2>, scalar_prefetch = 0 : i64, scratch_operands = 0 : i64, tpu.core_type = #tpu.core_type<tc>, window_params = [{pipeline_mode = #tpu.pipeline_mode<synchronous>, transform_indices = @transform_0, window_bounds = array<i64: 2, 6400>}, {transform_indices = @transform_1, window_bounds = array<i64: 1, 6400, 256>}, {transform_indices = @transform_2, window_bounds = array<i64: 1, 256>}, {transform_indices = @transform_3, window_bounds = array<i64: 2, 256>}]} {
    %c0 = arith.constant 0 : index
    %c0_0 = arith.constant 0 : index
    %0 = vector.load %arg2[%c0, %c0_0] : memref<2x6400xbf16, #tpu.memory_space<vmem>>, vector<2x6400xbf16>
    %c0_1 = arith.constant 0 : index
    %c0_2 = arith.constant 0 : index
    %c0_3 = arith.constant 0 : index
    %1 = vector.load %arg3[%c0_1, %c0_2, %c0_3] : memref<1x6400x256xbf16, #tpu.memory_space<vmem>>, vector<1x6400x256xbf16>
    %2 = vector.shape_cast %1 : vector<1x6400x256xbf16> to vector<6400x256xbf16>
    %cst = arith.constant dense<0.000000e+00> : vector<2x256xf32>
    %3 = tpu.matmul %0, %2, %cst {dimension_numbers = #tpu.dot_dimension_numbers<[1], [0], [0], [1], [0, 0, 1, 1], [], []>} : vector<2x6400xbf16>, vector<6400x256xbf16>, vector<2x256xf32> -> vector<2x256xf32>
    %c0_4 = arith.constant 0 : index
    %c0_5 = arith.constant 0 : index
    %4 = vector.load %arg4[%c0_4, %c0_5] : memref<1x256xf32, #tpu.memory_space<vmem>>, vector<1x256xf32>
    %5 = vector.broadcast %4 : vector<1x256xf32> to vector<2x256xf32>
    %6 = arith.addf %3, %5 : vector<2x256xf32>
    %cst_6 = arith.constant 0.000000e+00 : f32
    %7 = vector.broadcast %cst_6 : f32 to vector<2x256xf32>
    %8 = arith.maximumf %6, %7 : vector<2x256xf32>
    %9 = arith.truncf %8 : vector<2x256xf32> to vector<2x256xbf16>
    %c0_7 = arith.constant 0 : index
    %c0_8 = arith.constant 0 : index
    %10 = vector.load %arg5[%c0_7, %c0_8] : memref<2x256xbf16, #tpu.memory_space<vmem>>, vector<2x256xbf16>
    tpu.vector_store %arg5[%c0_7, %c0_8], %9 {strides = array<i32>} : memref<2x256xbf16, #tpu.memory_space<vmem>>, vector<2x256xbf16>,
    return
  }
  func.func @transform_0(%arg0: i32, %arg1: i32) -> (i32, i32) {
    %c0_i32 = arith.constant 0 : i32
    %c0_i32_0 = arith.constant 0 : i32
    %c0_i32_1 = arith.constant 0 : i32
    return %c0_i32, %c0_i32_0 : i32, i32
  }
  func.func @transform_1(%arg0: i32, %arg1: i32) -> (i32, i32, i32) {
    %c2_i32 = arith.constant 2 : i32
    %0 = arith.muli %arg0, %c2_i32 : i32
    %1 = arith.addi %0, %arg1 : i32
    %c0_i32 = arith.constant 0 : i32
    %c0_i32_0 = arith.constant 0 : i32
    %c0_i32_1 = arith.constant 0 : i32
    return %1, %c0_i32, %c0_i32_0 : i32, i32, i32
  }
  func.func @transform_2(%arg0: i32, %arg1: i32) -> (i32, i32) {
    %c2_i32 = arith.constant 2 : i32
    %0 = arith.muli %arg0, %c2_i32 : i32
    %1 = arith.addi %0, %arg1 : i32
    %c0_i32 = arith.constant 0 : i32
    %c0_i32_0 = arith.constant 0 : i32
    return %c0_i32, %1 : i32, i32
  }
  func.func @transform_3(%arg0: i32, %arg1: i32) -> (i32, i32) {
    %c2_i32 = arith.constant 2 : i32
    %0 = arith.muli %arg0, %c2_i32 : i32
    %1 = arith.addi %0, %arg1 : i32
    %c0_i32 = arith.constant 0 : i32
    %c0_i32_0 = arith.constant 0 : i32
    return %c0_i32, %1 : i32, i32
  }
}

</mosaic_0001>

<llo_original>
// kernel: net_forward.1
$region0: #{net_forward.1}
  #allocation0 [shape = 'u32[]', space=smem, size = 0x4, offset = 0x4, fixed_abs, tag = 'smem constant byte address 0x4 - core index']
  #allocation1 [shape = 'u32[144,128]{1,0:T(1,128)}', space=vmem, size = 0x12000, scoped, tag = 'internal scratch']
  %s0 = inlined_call_operand.vmem [shape: bf16[2,6400], index: 0, kind: input, shape index: {}]
  %s1 = inlined_call_operand.hbm [shape: bf16[4,6400,256], index: 1, kind: input, shape index: {}]
  %s2 = inlined_call_operand.hbm [shape: f32[1,1024], index: 2, kind: input, shape index: {}]
  %s3 = inlined_call_operand.vmem [shape: bf16[2,1024], index: 3, kind: output, shape index: {}]
  %s4 = sld [smem:[#allocation0]]
  $region53: #{net_forward.1} parent=0
    _
  %s6 = ssub.s32 1, %s4
  %s7 = scalar_select 0, %s6, %s4
  $region1: #{net_forward.1} parent=0
    #allocation2 [shape = 'u8[6553600]{0}', space=vmem, size = 0x640000, scoped, tag = 'input window, operand 1']
    #allocation3 [shape = 's32[2]{0}', space=sflag, size = 0x8, scoped, tag = 'scoped memory for net_forward.1']
    #allocation4 [shape = 'u8[2048]{0}', space=vmem, size = 0x800, scoped, tag = 'input window, operand 2']
    #allocation5 [shape = 's32[2]{0}', space=sflag, size = 0x8, scoped, tag = 'scoped memory for net_forward.1']
    %8 = vsyncpa [#allocation3], 0
    %s9 = scalar_lea.sflag [#allocation3], 1
    %10 = vsyncpa %s9, 0
    %11 = vsyncpa [#allocation5], 0
    %s12 = scalar_lea.sflag [#allocation5], 1
    %13 = vsyncpa %s12, 0
    loop: start=0, step=1, limit=6
    $region2: #{net_forward.1} parent=1 // loop_pre_header
      _
    $region3: #{net_forward.1} parent=1 // loop_header
      %s15 = sphi 0, %s19
      %p16 = scmp.ge.s32.totalorder %s15, 6
      %s22 = sphi 0, %s34
      %s23 = sphi 0, %s30
      %s24 = sphi 0, %s22
      %s25 = sphi 0, %s23
      %s26 = sphi 0, %s24
      %s27 = sphi 0, %s25
      %s35 = sphi 0, %s35
      %s37 = sphi 0, %s35
      %s38 = sphi 0, %s37
      %s52 = sphi 0, %s38
      %s62 = sphi 0, %s64
      %s65 = sphi 0, %s62
      %s66 = sphi 0, %s65
      %s82 = sphi 0, %s66
      %s92 = sphi 0, %s94
      %s95 = sphi 0, %s92
      %s96 = sphi 0, %s95
      %s112 = sphi 0, %s96
      %s122 = sphi 0, %s124
      %s125 = sphi 0, %s122
      %s126 = sphi 0, %s125
      %s142 = sphi 0, %s126
    $region4: #{net_forward.1} parent=1 // loop_header_branch
      %18 = sbr.rel (%p16) target = $region8
    $region5: #{net_forward.1} parent=1 // loop_body
      %s20 = ssub.s32 %s15, 1
      %s21 = ssub.s32 %s15, 2
      %s28 = sadd.s32 1, %s23
      %p29 = scmp.ge.s32.totalorder %s28, 2
      %s30 = scalar_select %p29, 0, %s28
      %s31 = sadd.s32 1, %s22
      %s32 = scalar_select %p29, %s31, %s22
      %p33 = scmp.ge.s32.totalorder %s32, 2
      %s34 = scalar_select %p33, 0, %s32
      %s36 = sadd.s32 %s35, 1
      %p39 = scmp.eq.s32.totalorder %s15, 3
      %p40 = scmp.ne.s32.totalorder %s35, %s37
      %p41 = scmp.eq.s32.totalorder %s15, 0
      %p42 = por %p40, %p41
      %p43 = scmp.ne.s32.totalorder %s35, %s37
      %p44 = scmp.eq.s32.totalorder %s20, 3
      %p45 = por %p43, %p44
      %p46 = scmp.ne.s32.totalorder %s37, %s38
      %p47 = scmp.eq.s32.totalorder %s20, 0
      %p48 = por %p46, %p47
      %p49 = scmp.ne.s32.totalorder %s37, %s38
      %p50 = scmp.eq.s32.totalorder %s21, 3
      %p51 = por %p49, %p50
      %p53 = scmp.ne.s32.totalorder %s38, %s52
      %p54 = scmp.eq.s32.totalorder %s21, 0
      %p55 = por %p53, %p54
      %s56 = smul.u32 %s22, 2
      %s57 = sadd.s32 %s56, %s23
      %s58 = smul.u32 %s34, 2
      %s59 = sadd.s32 %s58, %s30
      %s60 = ssub.s32 %s57, %s59
      %p61 = scmp.eq.s32.totalorder %s60, 0
      %s63 = sadd.s32 %s62, 1
      %s64 = scalar_select %p61, %s62, %s63
      %p67 = pneg %p61
      %p68 = scmp.eq.s32.totalorder %s15, 3
      %p69 = por %p67, %p68
      %p70 = scmp.ne.s32.totalorder %s62, %s65
      %p71 = scmp.eq.s32.totalorder %s15, 0
      %p72 = por %p70, %p71
      %p73 = scmp.ne.s32.totalorder %s62, %s65
      %p74 = scmp.eq.s32.totalorder %s20, 3
      %p75 = por %p73, %p74
      %p76 = scmp.ne.s32.totalorder %s65, %s66
      %p77 = scmp.eq.s32.totalorder %s20, 0
      %p78 = por %p76, %p77
      %p79 = scmp.ne.s32.totalorder %s65, %s66
      %p80 = scmp.eq.s32.totalorder %s21, 3
      %p81 = por %p79, %p80
      %p83 = scmp.ne.s32.totalorder %s66, %s82
      %p84 = scmp.eq.s32.totalorder %s21, 0
      %p85 = por %p83, %p84
      %s86 = smul.u32 %s22, 2
      %s87 = sadd.s32 %s86, %s23
      %s88 = smul.u32 %s34, 2
      %s89 = sadd.s32 %s88, %s30
      %s90 = ssub.s32 %s87, %s89
      %p91 = scmp.eq.s32.totalorder %s90, 0
      %s93 = sadd.s32 %s92, 1
      %s94 = scalar_select %p91, %s92, %s93
      %p97 = pneg %p91
      %p98 = scmp.eq.s32.totalorder %s15, 3
      %p99 = por %p97, %p98
      %p100 = scmp.ne.s32.totalorder %s92, %s95
      %p101 = scmp.eq.s32.totalorder %s15, 0
      %p102 = por %p100, %p101
      %p103 = scmp.ne.s32.totalorder %s92, %s95
      %p104 = scmp.eq.s32.totalorder %s20, 3
      %p105 = por %p103, %p104
      %p106 = scmp.ne.s32.totalorder %s95, %s96
      %p107 = scmp.eq.s32.totalorder %s20, 0
      %p108 = por %p106, %p107
      %p109 = scmp.ne.s32.totalorder %s95, %s96
      %p110 = scmp.eq.s32.totalorder %s21, 3
      %p111 = por %p109, %p110
      %p113 = scmp.ne.s32.totalorder %s96, %s112
      %p114 = scmp.eq.s32.totalorder %s21, 0
      %p115 = por %p113, %p114
      %s116 = smul.u32 %s22, 2
      %s117 = sadd.s32 %s116, %s23
      %s118 = smul.u32 %s34, 2
      %s119 = sadd.s32 %s118, %s30
      %s120 = ssub.s32 %s117, %s119
      %p121 = scmp.eq.s32.totalorder %s120, 0
      %s123 = sadd.s32 %s122, 1
      %s124 = scalar_select %p121, %s122, %s123
      %p127 = pneg %p121
      %p128 = scmp.eq.s32.totalorder %s15, 3
      %p129 = por %p127, %p128
      %p130 = scmp.ne.s32.totalorder %s122, %s125
      %p131 = scmp.eq.s32.totalorder %s15, 0
      %p132 = por %p130, %p131
      %p133 = scmp.ne.s32.totalorder %s122, %s125
      %p134 = scmp.eq.s32.totalorder %s20, 3
      %p135 = por %p133, %p134
      %p136 = scmp.ne.s32.totalorder %s125, %s126
      %p137 = scmp.eq.s32.totalorder %s20, 0
      %p138 = por %p136, %p137
      %p139 = scmp.ne.s32.totalorder %s125, %s126
      %p140 = scmp.eq.s32.totalorder %s21, 3
      %p141 = por %p139, %p140
      %p143 = scmp.ne.s32.totalorder %s126, %s142
      %p144 = scmp.eq.s32.totalorder %s21, 0
      %p145 = por %p143, %p144
      %p146 = scmp.le.s32.totalorder 1, %s15
      %p147 = scmp.lt.s32.totalorder %s15, 5
      %p148 = pnand %p146, %p147
      %p149 = pneg %p148
      // Predicated region
      $region9: #{net_forward.1} parent=5 // pred_check
        _
      $region10: #{net_forward.1} parent=5 // pred_check_branch
        %151 = sbr.rel (%p148) target = $region12
      $region11: #{net_forward.1} parent=5 // pred_region
        %s152 = ssub.s32 %s15, 1
        // Predicated region
        $region13: #{net_forward.1} parent=11 // pred_check
          %p153 = pneg %p48
        $region14: #{net_forward.1} parent=11 // pred_check_branch
          %155 = sbr.rel (%p153) target = $region16
        $region15: #{net_forward.1} parent=11 // pred_region
          _
        $region16: #{net_forward.1} parent=11 // pred_fallthru
          _
      $region12: #{net_forward.1} parent=5 // pred_fallthru
        _
      %p156 = scmp.lt.s32.totalorder %s15, 4
      // Predicated region
      $region17: #{net_forward.1} parent=5 // pred_check
        %p157 = pneg %p156
      $region18: #{net_forward.1} parent=5 // pred_check_branch
        %159 = sbr.rel (%p157) target = $region20
      $region19: #{net_forward.1} parent=5 // pred_region
        // Predicated region
        $region21: #{net_forward.1} parent=19 // pred_check
          %p160 = pneg %p72
        $region22: #{net_forward.1} parent=19 // pred_check_branch
          %162 = sbr.rel (%p160) target = $region24
        $region23: #{net_forward.1} parent=19 // pred_region
          %s163 = sand.u32 %s62, 1
          %s164 = scalar_lea.sflag [#allocation3], %s163
          %s165 = sand.u32 %s62, 1
          %s166 = smul.addr %s165, 6400
          %s167 = scalar_lea.vmem [#allocation2], %s166
          %s168 = smul.u32 %s22, 2
          %s169 = sadd.s32 %s168, %s23
          %s171 = ssub.s32 102400, 102400
          %172 = vsyncadd %s164, %s171
          %s173 = smul.addr %s169, 1600
          %s174 = smul.addr %s173, 64
          %s175 = scalar_lea.hbm %s1, %s174
          %s176 = sshll.u32 %s167, 4
          %s177 = int_to_ptr.vmem [resolvable:$true] %s176
          %182 = dma.hbm_to_vmem [thread:$0]  %s175, 102400, %s177, %s164, 128, 128, 8
        $region24: #{net_forward.1} parent=19 // pred_fallthru
          _
        // Predicated region
        $region25: #{net_forward.1} parent=19 // pred_check
          %p183 = pneg %p102
        $region26: #{net_forward.1} parent=19 // pred_check_branch
          %185 = sbr.rel (%p183) target = $region28
        $region27: #{net_forward.1} parent=19 // pred_region
          %s186 = sand.u32 %s92, 1
          %s187 = scalar_lea.sflag [#allocation5], %s186
          %s188 = sand.u32 %s92, 1
          %s189 = smul.addr %s188, 2
          %s190 = scalar_lea.vmem [#allocation4], %s189
          %s191 = smul.u32 %s22, 2
          %s192 = sadd.s32 %s191, %s23
          %s193 = smul.u32 2, %s192
          %s195 = ssub.s32 32, 32
          %196 = vsyncadd %s187, %s195
          %s197 = smul.addr %s193, 16
          %s198 = scalar_lea.hbm %s2, %s197
          %s200 = sshll.u32 %s190, 4
          %s201 = int_to_ptr.vmem [resolvable:$true] %s200
          %203 = dma.hbm_to_vmem [thread:$0]  %s198, 32, %s201, %s187
        $region28: #{net_forward.1} parent=19 // pred_fallthru
          _
      $region20: #{net_forward.1} parent=5 // pred_fallthru
        _
      %p204 = scmp.le.s32.totalorder 1, %s15
      %p205 = scmp.lt.s32.totalorder %s15, 5
      %p206 = pnand %p204, %p205
      %p207 = pneg %p206
      // Predicated region
      $region29: #{net_forward.1} parent=5 // pred_check
        _
      $region30: #{net_forward.1} parent=5 // pred_check_branch
        %209 = sbr.rel (%p206) target = $region32
      $region31: #{net_forward.1} parent=5 // pred_region
        %s210 = ssub.s32 %s15, 1
        %s211 = sand.u32 %s65, 1
        %s212 = scalar_lea.sflag [#allocation3], %s211
        %s213 = sand.u32 %s65, 1
        %s214 = smul.addr %s213, 6400
        %s215 = scalar_lea.vmem [#allocation2], %s214
        // Predicated region
        $region33: #{net_forward.1} parent=31 // pred_check
          %p216 = pneg %p78
        $region34: #{net_forward.1} parent=31 // pred_check_branch
          %218 = sbr.rel (%p216) target = $region36
        $region35: #{net_forward.1} parent=31 // pred_region
          %219 = dma.done %s212, 102400
        $region36: #{net_forward.1} parent=31 // pred_fallthru
          _
        %s220 = sand.u32 %s95, 1
        %s221 = scalar_lea.sflag [#allocation5], %s220
        %s222 = sand.u32 %s95, 1
        %s223 = smul.addr %s222, 2
        %s224 = scalar_lea.vmem [#allocation4], %s223
        // Predicated region
        $region37: #{net_forward.1} parent=31 // pred_check
          %p225 = pneg %p108
        $region38: #{net_forward.1} parent=31 // pred_check_branch
          %227 = sbr.rel (%p225) target = $region40
        $region39: #{net_forward.1} parent=31 // pred_region
          %228 = dma.done %s221, 32
        $region40: #{net_forward.1} parent=31 // pred_fallthru
          _
        %p229 = pneg %p48
        %p230 = pneg %p45
        %s231 = sand.u32 %s65, 1
        %s232 = scalar_lea.sflag [#allocation3], %s231
        %s233 = sand.u32 %s65, 1
        %s234 = smul.addr %s233, 6400
        %s235 = scalar_lea.vmem [#allocation2], %s234
        %p236 = pneg %p78
        %p237 = pneg %p75
        %s238 = sand.u32 %s95, 1
        %s239 = scalar_lea.sflag [#allocation5], %s238
        %s240 = sand.u32 %s95, 1
        %s241 = smul.addr %s240, 2
        %s242 = scalar_lea.vmem [#allocation4], %s241
        %p243 = pneg %p108
        %p244 = pneg %p105
        %p245 = pneg %p138
        %p246 = pneg %p135
        %s247 = smul.u32 %s24, 2
        %s248 = sadd.s32 %s247, %s25
        %s249 = smul.u32 2, %s248
        %p250 = scmp.lt.s32.totalorder %s249, 7
        %s251 = scalar_select %p250, %s249, 7
        %s252 = scalar_lea.vmem %s3, %s251
        %s253 = smul.u32 %s24, 2
        %s254 = sadd.s32 %s253, %s25
        %s255 = smul.u32 %s24, 2
        %s256 = sadd.s32 %s255, %s25
        %s257 = smul.u32 2, %s256
        %s258 = smul.u32 %s24, 2
        %s259 = sadd.s32 %s258, %s25
        %s260 = smul.u32 2, %s259
        %p261 = scmp.lt.s32.totalorder %s260, 7
        %s262 = scalar_select %p261, %s260, 7
        %s263 = scalar_lea.vmem %s3, %s262
        %s264 = smul.u32 %s24, 2
        %s265 = sadd.s32 %s264, %s25
        %s266 = smul.u32 2, %s265
        %v267 = vld [vmem:[%s0] sm:$0xff]
        %v268 = vld [vmem:[%s0 + $0x8] sm:$0xff]
        %v269 = vld [vmem:[%s0 + $0x10] sm:$0xff]
        %v270 = vld [vmem:[%s0 + $0x18] sm:$0xff]
        %v271 = vld [vmem:[%s0 + $0x20] sm:$0xff]
        %v272 = vld [vmem:[%s0 + $0x28] sm:$0xff]
        %v273 = vld [vmem:[%s0 + $0x30] sm:$0x3]
        %v274 = vld [vmem:[%s215] sm:$0xff]
        %v275 = vld [vmem:[%s215 + $0x8] sm:$0xff]
        %v276 = vld [vmem:[%s215 + $0x10] sm:$0xff]
        %v277 = vld [vmem:[%s215 + $0x18] sm:$0xff]
        %v278 = vld [vmem:[%s215 + $0x20] sm:$0xff]
        %v279 = vld [vmem:[%s215 + $0x28] sm:$0xff]
        %v280 = vld [vmem:[%s215 + $0x30] sm:$0xff]
        %v281 = vld [vmem:[%s215 + $0x38] sm:$0xff]
        %v282 = vld [vmem:[%s215 + $0x40] sm:$0xff]
        %v283 = vld [vmem:[%s215 + $0x48] sm:$0xff]
        %v284 = vld [vmem:[%s215 + $0x50] sm:$0xff]
        %v285 = vld [vmem:[%s215 + $0x58] sm:$0xff]
        %v286 = vld [vmem:[%s215 + $0x60] sm:$0xff]
        %v287 = vld [vmem:[%s215 + $0x68] sm:$0xff]
        %v288 = vld [vmem:[%s215 + $0x70] sm:$0xff]
        %v289 = vld [vmem:[%s215 + $0x78] sm:$0xff]
        %v290 = vld [vmem:[%s215 + $0x80] sm:$0xff]
        %v291 = vld [vmem:[%s215 + $0x88] sm:$0xff]
        %v292 = vld [vmem:[%s215 + $0x90] sm:$0xff]
        %v293 = vld [vmem:[%s215 + $0x98] sm:$0xff]
        %v294 = vld [vmem:[%s215 + $0xa0] sm:$0xff]
        %v295 = vld [vmem:[%s215 + $0xa8] sm:$0xff]
        %v296 = vld [vmem:[%s215 + $0xb0] sm:$0xff]
        %v297 = vld [vmem:[%s215 + $0xb8] sm:$0xff]
        %v298 = vld [vmem:[%s215 + $0xc0] sm:$0xff]
        %v299 = vld [vmem:[%s215 + $0xc8] sm:$0xff]
        %v300 = vld [vmem:[%s215 + $0xd0] sm:$0xff]
        %v301 = vld [vmem:[%s215 + $0xd8] sm:$0xff]
        %v302 = vld [vmem:[%s215 + $0xe0] sm:$0xff]
        %v303 = vld [vmem:[%s215 + $0xe8] sm:$0xff]
        %v304 = vld [vmem:[%s215 + $0xf0] sm:$0xff]
        %v305 = vld [vmem:[%s215 + $0xf8] sm:$0xff]
        %v306 = vld [vmem:[%s215 + $0x100] sm:$0xff]
        %v307 = vld [vmem:[%s215 + $0x108] sm:$0xff]
        %v308 = vld [vmem:[%s215 + $0x110] sm:$0xff]
        %v309 = vld [vmem:[%s215 + $0x118] sm:$0xff]
        %v310 = vld [vmem:[%s215 + $0x120] sm:$0xff]
        %v311 = vld [vmem:[%s215 + $0x128] sm:$0xff]
        %v312 = vld [vmem:[%s215 + $0x130] sm:$0xff]
        %v313 = vld [vmem:[%s215 + $0x138] sm:$0xff]
        %v314 = vld [vmem:[%s215 + $0x140] sm:$0xff]
        %v315 = vld [vmem:[%s215 + $0x148] sm:$0xff]
        %v316 = vld [vmem:[%s215 + $0x150] sm:$0xff]
        %v317 = vld [vmem:[%s215 + $0x158] sm:$0xff]
        %v318 = vld [vmem:[%s215 + $0x160] sm:$0xff]
        %v319 = vld [vmem:[%s215 + $0x168] sm:$0xff]
        %v320 = vld [vmem:[%s215 + $0x170] sm:$0xff]
        %v321 = vld [vmem:[%s215 + $0x178] sm:$0xff]
        %v322 = vld [vmem:[%s215 + $0x180] sm:$0xff]
        %v323 = vld [vmem:[%s215 + $0x188] sm:$0xff]
        %v324 = vld [vmem:[%s215 + $0x190] sm:$0xff]
        %v325 = vld [vmem:[%s215 + $0x198] sm:$0xff]
        %v326 = vld [vmem:[%s215 + $0x1a0] sm:$0xff]
        %v327 = vld [vmem:[%s215 + $0x1a8] sm:$0xff]
        %v328 = vld [vmem:[%s215 + $0x1b0] sm:$0xff]
        %v329 = vld [vmem:[%s215 + $0x1b8] sm:$0xff]
        %v330 = vld [vmem:[%s215 + $0x1c0] sm:$0xff]
        %v331 = vld [vmem:[%s215 + $0x1c8] sm:$0xff]
        %v332 = vld [vmem:[%s215 + $0x1d0] sm:$0xff]
        %v333 = vld [vmem:[%s215 + $0x1d8] sm:$0xff]
        %v334 = vld [vmem:[%s215 + $0x1e0] sm:$0xff]
        %v335 = vld [vmem:[%s215 + $0x1e8] sm:$0xff]
        %v336 = vld [vmem:[%s215 + $0x1f0] sm:$0xff]
        %v337 = vld [vmem:[%s215 + $0x1f8] sm:$0xff]
        %v338 = vld [vmem:[%s215 + $0x200] sm:$0xff]
        %v339 = vld [vmem:[%s215 + $0x208] sm:$0xff]
        %v340 = vld [vmem:[%s215 + $0x210] sm:$0xff]
        %v341 = vld [vmem:[%s215 + $0x218] sm:$0xff]
        %v342 = vld [vmem:[%s215 + $0x220] sm:$0xff]
        %v343 = vld [vmem:[%s215 + $0x228] sm:$0xff]
        %v344 = vld [vmem:[%s215 + $0x230] sm:$0xff]
        %v345 = vld [vmem:[%s215 + $0x238] sm:$0xff]
        %v346 = vld [vmem:[%s215 + $0x240] sm:$0xff]
        %v347 = vld [vmem:[%s215 + $0x248] sm:$0xff]
        %v348 = vld [vmem:[%s215 + $0x250] sm:$0xff]
        %v349 = vld [vmem:[%s215 + $0x258] sm:$0xff]
        %v350 = vld [vmem:[%s215 + $0x260] sm:$0xff]
        %v351 = vld [vmem:[%s215 + $0x268] sm:$0xff]
        %v352 = vld [vmem:[%s215 + $0x270] sm:$0xff]
        %v353 = vld [vmem:[%s215 + $0x278] sm:$0xff]
        %v354 = vld [vmem:[%s215 + $0x280] sm:$0xff]
        %v355 = vld [vmem:[%s215 + $0x288] sm:$0xff]
        %v356 = vld [vmem:[%s215 + $0x290] sm:$0xff]
        %v357 = vld [vmem:[%s215 + $0x298] sm:$0xff]
        %v358 = vld [vmem:[%s215 + $0x2a0] sm:$0xff]
        %v359 = vld [vmem:[%s215 + $0x2a8] sm:$0xff]
        %v360 = vld [vmem:[%s215 + $0x2b0] sm:$0xff]
        %v361 = vld [vmem:[%s215 + $0x2b8] sm:$0xff]
        %v362 = vld [vmem:[%s215 + $0x2c0] sm:$0xff]
        %v363 = vld [vmem:[%s215 + $0x2c8] sm:$0xff]
        %v364 = vld [vmem:[%s215 + $0x2d0] sm:$0xff]
        %v365 = vld [vmem:[%s215 + $0x2d8] sm:$0xff]
        %v366 = vld [vmem:[%s215 + $0x2e0] sm:$0xff]
        %v367 = vld [vmem:[%s215 + $0x2e8] sm:$0xff]
        %v368 = vld [vmem:[%s215 + $0x2f0] sm:$0xff]
        %v369 = vld [vmem:[%s215 + $0x2f8] sm:$0xff]
        %v370 = vld [vmem:[%s215 + $0x300] sm:$0xff]
        %v371 = vld [vmem:[%s215 + $0x308] sm:$0xff]
        %v372 = vld [vmem:[%s215 + $0x310] sm:$0xff]
        %v373 = vld [vmem:[%s215 + $0x318] sm:$0xff]
        %v374 = vld [vmem:[%s215 + $0x320] sm:$0xff]
        %v375 = vld [vmem:[%s215 + $0x328] sm:$0xff]
        %v376 = vld [vmem:[%s215 + $0x330] sm:$0xff]
        %v377 = vld [vmem:[%s215 + $0x338] sm:$0xff]
        %v378 = vld [vmem:[%s215 + $0x340] sm:$0xff]
        %v379 = vld [vmem:[%s215 + $0x348] sm:$0xff]
        %v380 = vld [vmem:[%s215 + $0x350] sm:$0xff]
        %v381 = vld [vmem:[%s215 + $0x358] sm:$0xff]
        %v382 = vld [vmem:[%s215 + $0x360] sm:$0xff]
        %v383 = vld [vmem:[%s215 + $0x368] sm:$0xff]
        %v384 = vld [vmem:[%s215 + $0x370] sm:$0xff]
        %v385 = vld [vmem:[%s215 + $0x378] sm:$0xff]
        %v386 = vld [vmem:[%s215 + $0x380] sm:$0xff]
        %v387 = vld [vmem:[%s215 + $0x388] sm:$0xff]
        %v388 = vld [vmem:[%s215 + $0x390] sm:$0xff]
        %v389 = vld [vmem:[%s215 + $0x398] sm:$0xff]
        %v390 = vld [vmem:[%s215 + $0x3a0] sm:$0xff]
        %v391 = vld [vmem:[%s215 + $0x3a8] sm:$0xff]
        %v392 = vld [vmem:[%s215 + $0x3b0] sm:$0xff]
        %v393 = vld [vmem:[%s215 + $0x3b8] sm:$0xff]
        %v394 = vld [vmem:[%s215 + $0x3c0] sm:$0xff]
        %v395 = vld [vmem:[%s215 + $0x3c8] sm:$0xff]
        %v396 = vld [vmem:[%s215 + $0x3d0] sm:$0xff]
        %v397 = vld [vmem:[%s215 + $0x3d8] sm:$0xff]
        %v398 = vld [vmem:[%s215 + $0x3e0] sm:$0xff]
        %v399 = vld [vmem:[%s215 + $0x3e8] sm:$0xff]
        %v400 = vld [vmem:[%s215 + $0x3f0] sm:$0xff]
        %v401 = vld [vmem:[%s215 + $0x3f8] sm:$0xff]
        %v402 = vld [vmem:[%s215 + $0x400] sm:$0xff]
        %v403 = vld [vmem:[%s215 + $0x408] sm:$0xff]
        %v404 = vld [vmem:[%s215 + $0x410] sm:$0xff]
        %v405 = vld [vmem:[%s215 + $0x418] sm:$0xff]
        %v406 = vld [vmem:[%s215 + $0x420] sm:$0xff]
        %v407 = vld [vmem:[%s215 + $0x428] sm:$0xff]
        %v408 = vld [vmem:[%s215 + $0x430] sm:$0xff]
        %v409 = vld [vmem:[%s215 + $0x438] sm:$0xff]
        %v410 = vld [vmem:[%s215 + $0x440] sm:$0xff]
        %v411 = vld [vmem:[%s215 + $0x448] sm:$0xff]
        %v412 = vld [vmem:[%s215 + $0x450] sm:$0xff]
        %v413 = vld [vmem:[%s215 + $0x458] sm:$0xff]
        %v414 = vld [vmem:[%s215 + $0x460] sm:$0xff]
        %v415 = vld [vmem:[%s215 + $0x468] sm:$0xff]
        %v416 = vld [vmem:[%s215 + $0x470] sm:$0xff]
        %v417 = vld [vmem:[%s215 + $0x478] sm:$0xff]
        %v418 = vld [vmem:[%s215 + $0x480] sm:$0xff]
        %v419 = vld [vmem:[%s215 + $0x488] sm:$0xff]
        %v420 = vld [vmem:[%s215 + $0x490] sm:$0xff]
        %v421 = vld [vmem:[%s215 + $0x498] sm:$0xff]
        %v422 = vld [vmem:[%s215 + $0x4a0] sm:$0xff]
        %v423 = vld [vmem:[%s215 + $0x4a8] sm:$0xff]
        %v424 = vld [vmem:[%s215 + $0x4b0] sm:$0xff]
        %v425 = vld [vmem:[%s215 + $0x4b8] sm:$0xff]
        %v426 = vld [vmem:[%s215 + $0x4c0] sm:$0xff]
        %v427 = vld [vmem:[%s215 + $0x4c8] sm:$0xff]
        %v428 = vld [vmem:[%s215 + $0x4d0] sm:$0xff]
        %v429 = vld [vmem:[%s215 + $0x4d8] sm:$0xff]
        %v430 = vld [vmem:[%s215 + $0x4e0] sm:$0xff]
        %v431 = vld [vmem:[%s215 + $0x4e8] sm:$0xff]
        %v432 = vld [vmem:[%s215 + $0x4f0] sm:$0xff]
        %v433 = vld [vmem:[%s215 + $0x4f8] sm:$0xff]
        %v434 = vld [vmem:[%s215 + $0x500] sm:$0xff]
        %v435 = vld [vmem:[%s215 + $0x508] sm:$0xff]
        %v436 = vld [vmem:[%s215 + $0x510] sm:$0xff]
        %v437 = vld [vmem:[%s215 + $0x518] sm:$0xff]
        %v438 = vld [vmem:[%s215 + $0x520] sm:$0xff]
        %v439 = vld [vmem:[%s215 + $0x528] sm:$0xff]
        %v440 = vld [vmem:[%s215 + $0x530] sm:$0xff]
        %v441 = vld [vmem:[%s215 + $0x538] sm:$0xff]
        %v442 = vld [vmem:[%s215 + $0x540] sm:$0xff]
        %v443 = vld [vmem:[%s215 + $0x548] sm:$0xff]
        %v444 = vld [vmem:[%s215 + $0x550] sm:$0xff]
        %v445 = vld [vmem:[%s215 + $0x558] sm:$0xff]
        %v446 = vld [vmem:[%s215 + $0x560] sm:$0xff]
        %v447 = vld [vmem:[%s215 + $0x568] sm:$0xff]
        %v448 = vld [vmem:[%s215 + $0x570] sm:$0xff]
        %v449 = vld [vmem:[%s215 + $0x578] sm:$0xff]
        %v450 = vld [vmem:[%s215 + $0x580] sm:$0xff]
        %v451 = vld [vmem:[%s215 + $0x588] sm:$0xff]
        %v452 = vld [vmem:[%s215 + $0x590] sm:$0xff]
        %v453 = vld [vmem:[%s215 + $0x598] sm:$0xff]
        %v454 = vld [vmem:[%s215 + $0x5a0] sm:$0xff]
        %v455 = vld [vmem:[%s215 + $0x5a8] sm:$0xff]
        %v456 = vld [vmem:[%s215 + $0x5b0] sm:$0xff]
        %v457 = vld [vmem:[%s215 + $0x5b8] sm:$0xff]
        %v458 = vld [vmem:[%s215 + $0x5c0] sm:$0xff]
        %v459 = vld [vmem:[%s215 + $0x5c8] sm:$0xff]
        %v460 = vld [vmem:[%s215 + $0x5d0] sm:$0xff]
        %v461 = vld [vmem:[%s215 + $0x5d8] sm:$0xff]
        %v462 = vld [vmem:[%s215 + $0x5e0] sm:$0xff]
        %v463 = vld [vmem:[%s215 + $0x5e8] sm:$0xff]
        %v464 = vld [vmem:[%s215 + $0x5f0] sm:$0xff]
        %v465 = vld [vmem:[%s215 + $0x5f8] sm:$0xff]
        %v466 = vld [vmem:[%s215 + $0x600] sm:$0xff]
        %v467 = vld [vmem:[%s215 + $0x608] sm:$0xff]
        %v468 = vld [vmem:[%s215 + $0x610] sm:$0xff]
        %v469 = vld [vmem:[%s215 + $0x618] sm:$0xff]
        %v470 = vld [vmem:[%s215 + $0x620] sm:$0xff]
        %v471 = vld [vmem:[%s215 + $0x628] sm:$0xff]
        %v472 = vld [vmem:[%s215 + $0x630] sm:$0xff]
        %v473 = vld [vmem:[%s215 + $0x638] sm:$0xff]
        %v474 = vld [vmem:[%s215 + $0x640] sm:$0xff]
        %v475 = vld [vmem:[%s215 + $0x648] sm:$0xff]
        %v476 = vld [vmem:[%s215 + $0x650] sm:$0xff]
        %v477 = vld [vmem:[%s215 + $0x658] sm:$0xff]
        %v478 = vld [vmem:[%s215 + $0x660] sm:$0xff]
        %v479 = vld [vmem:[%s215 + $0x668] sm:$0xff]
        %v480 = vld [vmem:[%s215 + $0x670] sm:$0xff]
        %v481 = vld [vmem:[%s215 + $0x678] sm:$0xff]
        %v482 = vld [vmem:[%s215 + $0x680] sm:$0xff]
        %v483 = vld [vmem:[%s215 + $0x688] sm:$0xff]
        %v484 = vld [vmem:[%s215 + $0x690] sm:$0xff]
        %v485 = vld [vmem:[%s215 + $0x698] sm:$0xff]
        %v486 = vld [vmem:[%s215 + $0x6a0] sm:$0xff]
        %v487 = vld [vmem:[%s215 + $0x6a8] sm:$0xff]
        %v488 = vld [vmem:[%s215 + $0x6b0] sm:$0xff]
        %v489 = vld [vmem:[%s215 + $0x6b8] sm:$0xff]
        %v490 = vld [vmem:[%s215 + $0x6c0] sm:$0xff]
        %v491 = vld [vmem:[%s215 + $0x6c8] sm:$0xff]
        %v492 = vld [vmem:[%s215 + $0x6d0] sm:$0xff]
        %v493 = vld [vmem:[%s215 + $0x6d8] sm:$0xff]
        %v494 = vld [vmem:[%s215 + $0x6e0] sm:$0xff]
        %v495 = vld [vmem:[%s215 + $0x6e8] sm:$0xff]
        %v496 = vld [vmem:[%s215 + $0x6f0] sm:$0xff]
        %v497 = vld [vmem:[%s215 + $0x6f8] sm:$0xff]
        %v498 = vld [vmem:[%s215 + $0x700] sm:$0xff]
        %v499 = vld [vmem:[%s215 + $0x708] sm:$0xff]
        %v500 = vld [vmem:[%s215 + $0x710] sm:$0xff]
        %v501 = vld [vmem:[%s215 + $0x718] sm:$0xff]
        %v502 = vld [vmem:[%s215 + $0x720] sm:$0xff]
        %v503 = vld [vmem:[%s215 + $0x728] sm:$0xff]
        %v504 = vld [vmem:[%s215 + $0x730] sm:$0xff]
        %v505 = vld [vmem:[%s215 + $0x738] sm:$0xff]
        %v506 = vld [vmem:[%s215 + $0x740] sm:$0xff]
        %v507 = vld [vmem:[%s215 + $0x748] sm:$0xff]
        %v508 = vld [vmem:[%s215 + $0x750] sm:$0xff]
        %v509 = vld [vmem:[%s215 + $0x758] sm:$0xff]
        %v510 = vld [vmem:[%s215 + $0x760] sm:$0xff]
        %v511 = vld [vmem:[%s215 + $0x768] sm:$0xff]
        %v512 = vld [vmem:[%s215 + $0x770] sm:$0xff]
        %v513 = vld [vmem:[%s215 + $0x778] sm:$0xff]
        %v514 = vld [vmem:[%s215 + $0x780] sm:$0xff]
        %v515 = vld [vmem:[%s215 + $0x788] sm:$0xff]
        %v516 = vld [vmem:[%s215 + $0x790] sm:$0xff]
        %v517 = vld [vmem:[%s215 + $0x798] sm:$0xff]
        %v518 = vld [vmem:[%s215 + $0x7a0] sm:$0xff]
        %v519 = vld [vmem:[%s215 + $0x7a8] sm:$0xff]
        %v520 = vld [vmem:[%s215 + $0x7b0] sm:$0xff]
        %v521 = vld [vmem:[%s215 + $0x7b8] sm:$0xff]
        %v522 = vld [vmem:[%s215 + $0x7c0] sm:$0xff]
        %v523 = vld [vmem:[%s215 + $0x7c8] sm:$0xff]
        %v524 = vld [vmem:[%s215 + $0x7d0] sm:$0xff]
        %v525 = vld [vmem:[%s215 + $0x7d8] sm:$0xff]
        %v526 = vld [vmem:[%s215 + $0x7e0] sm:$0xff]
        %v527 = vld [vmem:[%s215 + $0x7e8] sm:$0xff]
        %v528 = vld [vmem:[%s215 + $0x7f0] sm:$0xff]
        %v529 = vld [vmem:[%s215 + $0x7f8] sm:$0xff]
        %v530 = vld [vmem:[%s215 + $0x800] sm:$0xff]
        %v531 = vld [vmem:[%s215 + $0x808] sm:$0xff]
        %v532 = vld [vmem:[%s215 + $0x810] sm:$0xff]
        %v533 = vld [vmem:[%s215 + $0x818] sm:$0xff]
        %v534 = vld [vmem:[%s215 + $0x820] sm:$0xff]
        %v535 = vld [vmem:[%s215 + $0x828] sm:$0xff]
        %v536 = vld [vmem:[%s215 + $0x830] sm:$0xff]
        %v537 = vld [vmem:[%s215 + $0x838] sm:$0xff]
        %v538 = vld [vmem:[%s215 + $0x840] sm:$0xff]
        %v539 = vld [vmem:[%s215 + $0x848] sm:$0xff]
        %v540 = vld [vmem:[%s215 + $0x850] sm:$0xff]
        %v541 = vld [vmem:[%s215 + $0x858] sm:$0xff]
        %v542 = vld [vmem:[%s215 + $0x860] sm:$0xff]
        %v543 = vld [vmem:[%s215 + $0x868] sm:$0xff]
        %v544 = vld [vmem:[%s215 + $0x870] sm:$0xff]
        %v545 = vld [vmem:[%s215 + $0x878] sm:$0xff]
        %v546 = vld [vmem:[%s215 + $0x880] sm:$0xff]
        %v547 = vld [vmem:[%s215 + $0x888] sm:$0xff]
        %v548 = vld [vmem:[%s215 + $0x890] sm:$0xff]
        %v549 = vld [vmem:[%s215 + $0x898] sm:$0xff]
        %v550 = vld [vmem:[%s215 + $0x8a0] sm:$0xff]
        %v551 = vld [vmem:[%s215 + $0x8a8] sm:$0xff]
        %v552 = vld [vmem:[%s215 + $0x8b0] sm:$0xff]
        %v553 = vld [vmem:[%s215 + $0x8b8] sm:$0xff]
        %v554 = vld [vmem:[%s215 + $0x8c0] sm:$0xff]
        %v555 = vld [vmem:[%s215 + $0x8c8] sm:$0xff]
        %v556 = vld [vmem:[%s215 + $0x8d0] sm:$0xff]
        %v557 = vld [vmem:[%s215 + $0x8d8] sm:$0xff]
        %v558 = vld [vmem:[%s215 + $0x8e0] sm:$0xff]
        %v559 = vld [vmem:[%s215 + $0x8e8] sm:$0xff]
        %v560 = vld [vmem:[%s215 + $0x8f0] sm:$0xff]
        %v561 = vld [vmem:[%s215 + $0x8f8] sm:$0xff]
        %v562 = vld [vmem:[%s215 + $0x900] sm:$0xff]
        %v563 = vld [vmem:[%s215 + $0x908] sm:$0xff]
        %v564 = vld [vmem:[%s215 + $0x910] sm:$0xff]
        %v565 = vld [vmem:[%s215 + $0x918] sm:$0xff]
        %v566 = vld [vmem:[%s215 + $0x920] sm:$0xff]
        %v567 = vld [vmem:[%s215 + $0x928] sm:$0xff]
        %v568 = vld [vmem:[%s215 + $0x930] sm:$0xff]
        %v569 = vld [vmem:[%s215 + $0x938] sm:$0xff]
        %v570 = vld [vmem:[%s215 + $0x940] sm:$0xff]
        %v571 = vld [vmem:[%s215 + $0x948] sm:$0xff]
        %v572 = vld [vmem:[%s215 + $0x950] sm:$0xff]
        %v573 = vld [vmem:[%s215 + $0x958] sm:$0xff]
        %v574 = vld [vmem:[%s215 + $0x960] sm:$0xff]
        %v575 = vld [vmem:[%s215 + $0x968] sm:$0xff]
        %v576 = vld [vmem:[%s215 + $0x970] sm:$0xff]
        %v577 = vld [vmem:[%s215 + $0x978] sm:$0xff]
        %v578 = vld [vmem:[%s215 + $0x980] sm:$0xff]
        %v579 = vld [vmem:[%s215 + $0x988] sm:$0xff]
        %v580 = vld [vmem:[%s215 + $0x990] sm:$0xff]
        %v581 = vld [vmem:[%s215 + $0x998] sm:$0xff]
        %v582 = vld [vmem:[%s215 + $0x9a0] sm:$0xff]
        %v583 = vld [vmem:[%s215 + $0x9a8] sm:$0xff]
        %v584 = vld [vmem:[%s215 + $0x9b0] sm:$0xff]
        %v585 = vld [vmem:[%s215 + $0x9b8] sm:$0xff]
        %v586 = vld [vmem:[%s215 + $0x9c0] sm:$0xff]
        %v587 = vld [vmem:[%s215 + $0x9c8] sm:$0xff]
        %v588 = vld [vmem:[%s215 + $0x9d0] sm:$0xff]
        %v589 = vld [vmem:[%s215 + $0x9d8] sm:$0xff]
        %v590 = vld [vmem:[%s215 + $0x9e0] sm:$0xff]
        %v591 = vld [vmem:[%s215 + $0x9e8] sm:$0xff]
        %v592 = vld [vmem:[%s215 + $0x9f0] sm:$0xff]
        %v593 = vld [vmem:[%s215 + $0x9f8] sm:$0xff]
        %v594 = vld [vmem:[%s215 + $0xa00] sm:$0xff]
        %v595 = vld [vmem:[%s215 + $0xa08] sm:$0xff]
        %v596 = vld [vmem:[%s215 + $0xa10] sm:$0xff]
        %v597 = vld [vmem:[%s215 + $0xa18] sm:$0xff]
        %v598 = vld [vmem:[%s215 + $0xa20] sm:$0xff]
        %v599 = vld [vmem:[%s215 + $0xa28] sm:$0xff]
        %v600 = vld [vmem:[%s215 + $0xa30] sm:$0xff]
        %v601 = vld [vmem:[%s215 + $0xa38] sm:$0xff]
        %v602 = vld [vmem:[%s215 + $0xa40] sm:$0xff]
        %v603 = vld [vmem:[%s215 + $0xa48] sm:$0xff]
        %v604 = vld [vmem:[%s215 + $0xa50] sm:$0xff]
        %v605 = vld [vmem:[%s215 + $0xa58] sm:$0xff]
        %v606 = vld [vmem:[%s215 + $0xa60] sm:$0xff]
        %v607 = vld [vmem:[%s215 + $0xa68] sm:$0xff]
        %v608 = vld [vmem:[%s215 + $0xa70] sm:$0xff]
        %v609 = vld [vmem:[%s215 + $0xa78] sm:$0xff]
        %v610 = vld [vmem:[%s215 + $0xa80] sm:$0xff]
        %v611 = vld [vmem:[%s215 + $0xa88] sm:$0xff]
        %v612 = vld [vmem:[%s215 + $0xa90] sm:$0xff]
        %v613 = vld [vmem:[%s215 + $0xa98] sm:$0xff]
        %v614 = vld [vmem:[%s215 + $0xaa0] sm:$0xff]
        %v615 = vld [vmem:[%s215 + $0xaa8] sm:$0xff]
        %v616 = vld [vmem:[%s215 + $0xab0] sm:$0xff]
        %v617 = vld [vmem:[%s215 + $0xab8] sm:$0xff]
        %v618 = vld [vmem:[%s215 + $0xac0] sm:$0xff]
        %v619 = vld [vmem:[%s215 + $0xac8] sm:$0xff]
        %v620 = vld [vmem:[%s215 + $0xad0] sm:$0xff]
        %v621 = vld [vmem:[%s215 + $0xad8] sm:$0xff]
        %v622 = vld [vmem:[%s215 + $0xae0] sm:$0xff]
        %v623 = vld [vmem:[%s215 + $0xae8] sm:$0xff]
        %v624 = vld [vmem:[%s215 + $0xaf0] sm:$0xff]
        %v625 = vld [vmem:[%s215 + $0xaf8] sm:$0xff]
        %v626 = vld [vmem:[%s215 + $0xb00] sm:$0xff]
        %v627 = vld [vmem:[%s215 + $0xb08] sm:$0xff]
        %v628 = vld [vmem:[%s215 + $0xb10] sm:$0xff]
        %v629 = vld [vmem:[%s215 + $0xb18] sm:$0xff]
        %v630 = vld [vmem:[%s215 + $0xb20] sm:$0xff]
        %v631 = vld [vmem:[%s215 + $0xb28] sm:$0xff]
        %v632 = vld [vmem:[%s215 + $0xb30] sm:$0xff]
        %v633 = vld [vmem:[%s215 + $0xb38] sm:$0xff]
        %v634 = vld [vmem:[%s215 + $0xb40] sm:$0xff]
        %v635 = vld [vmem:[%s215 + $0xb48] sm:$0xff]
        %v636 = vld [vmem:[%s215 + $0xb50] sm:$0xff]
        %v637 = vld [vmem:[%s215 + $0xb58] sm:$0xff]
        %v638 = vld [vmem:[%s215 + $0xb60] sm:$0xff]
        %v639 = vld [vmem:[%s215 + $0xb68] sm:$0xff]
        %v640 = vld [vmem:[%s215 + $0xb70] sm:$0xff]
        %v641 = vld [vmem:[%s215 + $0xb78] sm:$0xff]
        %v642 = vld [vmem:[%s215 + $0xb80] sm:$0xff]
        %v643 = vld [vmem:[%s215 + $0xb88] sm:$0xff]
        %v644 = vld [vmem:[%s215 + $0xb90] sm:$0xff]
        %v645 = vld [vmem:[%s215 + $0xb98] sm:$0xff]
        %v646 = vld [vmem:[%s215 + $0xba0] sm:$0xff]
        %v647 = vld [vmem:[%s215 + $0xba8] sm:$0xff]
        %v648 = vld [vmem:[%s215 + $0xbb0] sm:$0xff]
        %v649 = vld [vmem:[%s215 + $0xbb8] sm:$0xff]
        %v650 = vld [vmem:[%s215 + $0xbc0] sm:$0xff]
        %v651 = vld [vmem:[%s215 + $0xbc8] sm:$0xff]
        %v652 = vld [vmem:[%s215 + $0xbd0] sm:$0xff]
        %v653 = vld [vmem:[%s215 + $0xbd8] sm:$0xff]
        %v654 = vld [vmem:[%s215 + $0xbe0] sm:$0xff]
        %v655 = vld [vmem:[%s215 + $0xbe8] sm:$0xff]
        %v656 = vld [vmem:[%s215 + $0xbf0] sm:$0xff]
        %v657 = vld [vmem:[%s215 + $0xbf8] sm:$0xff]
        %v658 = vld [vmem:[%s215 + $0xc00] sm:$0xff]
        %v659 = vld [vmem:[%s215 + $0xc08] sm:$0xff]
        %v660 = vld [vmem:[%s215 + $0xc10] sm:$0xff]
        %v661 = vld [vmem:[%s215 + $0xc18] sm:$0xff]
        %v662 = vld [vmem:[%s215 + $0xc20] sm:$0xff]
        %v663 = vld [vmem:[%s215 + $0xc28] sm:$0xff]
        %v664 = vld [vmem:[%s215 + $0xc30] sm:$0xff]
        %v665 = vld [vmem:[%s215 + $0xc38] sm:$0xff]
        %v666 = vld [vmem:[%s215 + $0xc40] sm:$0xff]
        %v667 = vld [vmem:[%s215 + $0xc48] sm:$0xff]
        %v668 = vld [vmem:[%s215 + $0xc50] sm:$0xff]
        %v669 = vld [vmem:[%s215 + $0xc58] sm:$0xff]
        %v670 = vld [vmem:[%s215 + $0xc60] sm:$0xff]
        %v671 = vld [vmem:[%s215 + $0xc68] sm:$0xff]
        %v672 = vld [vmem:[%s215 + $0xc70] sm:$0xff]
        %v673 = vld [vmem:[%s215 + $0xc78] sm:$0xff]
        %v674 = vld [vmem:[%s215 + $0xc80] sm:$0xff]
        %v675 = vld [vmem:[%s215 + $0xc88] sm:$0xff]
        %v676 = vld [vmem:[%s215 + $0xc90] sm:$0xff]
        %v677 = vld [vmem:[%s215 + $0xc98] sm:$0xff]
        %v678 = vld [vmem:[%s215 + $0xca0] sm:$0xff]
        %v679 = vld [vmem:[%s215 + $0xca8] sm:$0xff]
        %v680 = vld [vmem:[%s215 + $0xcb0] sm:$0xff]
        %v681 = vld [vmem:[%s215 + $0xcb8] sm:$0xff]
        %v682 = vld [vmem:[%s215 + $0xcc0] sm:$0xff]
        %v683 = vld [vmem:[%s215 + $0xcc8] sm:$0xff]
        %v684 = vld [vmem:[%s215 + $0xcd0] sm:$0xff]
        %v685 = vld [vmem:[%s215 + $0xcd8] sm:$0xff]
        %v686 = vld [vmem:[%s215 + $0xce0] sm:$0xff]
        %v687 = vld [vmem:[%s215 + $0xce8] sm:$0xff]
        %v688 = vld [vmem:[%s215 + $0xcf0] sm:$0xff]
        %v689 = vld [vmem:[%s215 + $0xcf8] sm:$0xff]
        %v690 = vld [vmem:[%s215 + $0xd00] sm:$0xff]
        %v691 = vld [vmem:[%s215 + $0xd08] sm:$0xff]
        %v692 = vld [vmem:[%s215 + $0xd10] sm:$0xff]
        %v693 = vld [vmem:[%s215 + $0xd18] sm:$0xff]
        %v694 = vld [vmem:[%s215 + $0xd20] sm:$0xff]
        %v695 = vld [vmem:[%s215 + $0xd28] sm:$0xff]
        %v696 = vld [vmem:[%s215 + $0xd30] sm:$0xff]
        %v697 = vld [vmem:[%s215 + $0xd38] sm:$0xff]
        %v698 = vld [vmem:[%s215 + $0xd40] sm:$0xff]
        %v699 = vld [vmem:[%s215 + $0xd48] sm:$0xff]
        %v700 = vld [vmem:[%s215 + $0xd50] sm:$0xff]
        %v701 = vld [vmem:[%s215 + $0xd58] sm:$0xff]
        %v702 = vld [vmem:[%s215 + $0xd60] sm:$0xff]
        %v703 = vld [vmem:[%s215 + $0xd68] sm:$0xff]
        %v704 = vld [vmem:[%s215 + $0xd70] sm:$0xff]
        %v705 = vld [vmem:[%s215 + $0xd78] sm:$0xff]
        %v706 = vld [vmem:[%s215 + $0xd80] sm:$0xff]
        %v707 = vld [vmem:[%s215 + $0xd88] sm:$0xff]
        %v708 = vld [vmem:[%s215 + $0xd90] sm:$0xff]
        %v709 = vld [vmem:[%s215 + $0xd98] sm:$0xff]
        %v710 = vld [vmem:[%s215 + $0xda0] sm:$0xff]
        %v711 = vld [vmem:[%s215 + $0xda8] sm:$0xff]
        %v712 = vld [vmem:[%s215 + $0xdb0] sm:$0xff]
        %v713 = vld [vmem:[%s215 + $0xdb8] sm:$0xff]
        %v714 = vld [vmem:[%s215 + $0xdc0] sm:$0xff]
        %v715 = vld [vmem:[%s215 + $0xdc8] sm:$0xff]
        %v716 = vld [vmem:[%s215 + $0xdd0] sm:$0xff]
        %v717 = vld [vmem:[%s215 + $0xdd8] sm:$0xff]
        %v718 = vld [vmem:[%s215 + $0xde0] sm:$0xff]
        %v719 = vld [vmem:[%s215 + $0xde8] sm:$0xff]
        %v720 = vld [vmem:[%s215 + $0xdf0] sm:$0xff]
        %v721 = vld [vmem:[%s215 + $0xdf8] sm:$0xff]
        %v722 = vld [vmem:[%s215 + $0xe00] sm:$0xff]
        %v723 = vld [vmem:[%s215 + $0xe08] sm:$0xff]
        %v724 = vld [vmem:[%s215 + $0xe10] sm:$0xff]
        %v725 = vld [vmem:[%s215 + $0xe18] sm:$0xff]
        %v726 = vld [vmem:[%s215 + $0xe20] sm:$0xff]
        %v727 = vld [vmem:[%s215 + $0xe28] sm:$0xff]
        %v728 = vld [vmem:[%s215 + $0xe30] sm:$0xff]
        %v729 = vld [vmem:[%s215 + $0xe38] sm:$0xff]
        %v730 = vld [vmem:[%s215 + $0xe40] sm:$0xff]
        %v731 = vld [vmem:[%s215 + $0xe48] sm:$0xff]
        %v732 = vld [vmem:[%s215 + $0xe50] sm:$0xff]
        %v733 = vld [vmem:[%s215 + $0xe58] sm:$0xff]
        %v734 = vld [vmem:[%s215 + $0xe60] sm:$0xff]
        %v735 = vld [vmem:[%s215 + $0xe68] sm:$0xff]
        %v736 = vld [vmem:[%s215 + $0xe70] sm:$0xff]
        %v737 = vld [vmem:[%s215 + $0xe78] sm:$0xff]
        %v738 = vld [vmem:[%s215 + $0xe80] sm:$0xff]
        %v739 = vld [vmem:[%s215 + $0xe88] sm:$0xff]
        %v740 = vld [vmem:[%s215 + $0xe90] sm:$0xff]
        %v741 = vld [vmem:[%s215 + $0xe98] sm:$0xff]
        %v742 = vld [vmem:[%s215 + $0xea0] sm:$0xff]
        %v743 = vld [vmem:[%s215 + $0xea8] sm:$0xff]
        %v744 = vld [vmem:[%s215 + $0xeb0] sm:$0xff]
        %v745 = vld [vmem:[%s215 + $0xeb8] sm:$0xff]
        %v746 = vld [vmem:[%s215 + $0xec0] sm:$0xff]
        %v747 = vld [vmem:[%s215 + $0xec8] sm:$0xff]
        %v748 = vld [vmem:[%s215 + $0xed0] sm:$0xff]
        %v749 = vld [vmem:[%s215 + $0xed8] sm:$0xff]
        %v750 = vld [vmem:[%s215 + $0xee0] sm:$0xff]
        %v751 = vld [vmem:[%s215 + $0xee8] sm:$0xff]
        %v752 = vld [vmem:[%s215 + $0xef0] sm:$0xff]
        %v753 = vld [vmem:[%s215 + $0xef8] sm:$0xff]
        %v754 = vld [vmem:[%s215 + $0xf00] sm:$0xff]
        %v755 = vld [vmem:[%s215 + $0xf08] sm:$0xff]
        %v756 = vld [vmem:[%s215 + $0xf10] sm:$0xff]
        %v757 = vld [vmem:[%s215 + $0xf18] sm:$0xff]
        %v758 = vld [vmem:[%s215 + $0xf20] sm:$0xff]
        %v759 = vld [vmem:[%s215 + $0xf28] sm:$0xff]
        %v760 = vld [vmem:[%s215 + $0xf30] sm:$0xff]
        %v761 = vld [vmem:[%s215 + $0xf38] sm:$0xff]
        %v762 = vld [vmem:[%s215 + $0xf40] sm:$0xff]
        %v763 = vld [vmem:[%s215 + $0xf48] sm:$0xff]
        %v764 = vld [vmem:[%s215 + $0xf50] sm:$0xff]
        %v765 = vld [vmem:[%s215 + $0xf58] sm:$0xff]
        %v766 = vld [vmem:[%s215 + $0xf60] sm:$0xff]
        %v767 = vld [vmem:[%s215 + $0xf68] sm:$0xff]
        %v768 = vld [vmem:[%s215 + $0xf70] sm:$0xff]
        %v769 = vld [vmem:[%s215 + $0xf78] sm:$0xff]
        %v770 = vld [vmem:[%s215 + $0xf80] sm:$0xff]
        %v771 = vld [vmem:[%s215 + $0xf88] sm:$0xff]
        %v772 = vld [vmem:[%s215 + $0xf90] sm:$0xff]
        %v773 = vld [vmem:[%s215 + $0xf98] sm:$0xff]
        %v774 = vld [vmem:[%s215 + $0xfa0] sm:$0xff]
        %v775 = vld [vmem:[%s215 + $0xfa8] sm:$0xff]
        %v776 = vld [vmem:[%s215 + $0xfb0] sm:$0xff]
        %v777 = vld [vmem:[%s215 + $0xfb8] sm:$0xff]
        %v778 = vld [vmem:[%s215 + $0xfc0] sm:$0xff]
        %v779 = vld [vmem:[%s215 + $0xfc8] sm:$0xff]
        %v780 = vld [vmem:[%s215 + $0xfd0] sm:$0xff]
        %v781 = vld [vmem:[%s215 + $0xfd8] sm:$0xff]
        %v782 = vld [vmem:[%s215 + $0xfe0] sm:$0xff]
        %v783 = vld [vmem:[%s215 + $0xfe8] sm:$0xff]
        %v784 = vld [vmem:[%s215 + $0xff0] sm:$0xff]
        %v785 = vld [vmem:[%s215 + $0xff8] sm:$0xff]
        %v786 = vld [vmem:[%s215 + $0x1000] sm:$0xff]
        %v787 = vld [vmem:[%s215 + $0x1008] sm:$0xff]
        %v788 = vld [vmem:[%s215 + $0x1010] sm:$0xff]
        %v789 = vld [vmem:[%s215 + $0x1018] sm:$0xff]
        %v790 = vld [vmem:[%s215 + $0x1020] sm:$0xff]
        %v791 = vld [vmem:[%s215 + $0x1028] sm:$0xff]
        %v792 = vld [vmem:[%s215 + $0x1030] sm:$0xff]
        %v793 = vld [vmem:[%s215 + $0x1038] sm:$0xff]
        %v794 = vld [vmem:[%s215 + $0x1040] sm:$0xff]
        %v795 = vld [vmem:[%s215 + $0x1048] sm:$0xff]
        %v796 = vld [vmem:[%s215 + $0x1050] sm:$0xff]
        %v797 = vld [vmem:[%s215 + $0x1058] sm:$0xff]
        %v798 = vld [vmem:[%s215 + $0x1060] sm:$0xff]
        %v799 = vld [vmem:[%s215 + $0x1068] sm:$0xff]
        %v800 = vld [vmem:[%s215 + $0x1070] sm:$0xff]
        %v801 = vld [vmem:[%s215 + $0x1078] sm:$0xff]
        %v802 = vld [vmem:[%s215 + $0x1080] sm:$0xff]
        %v803 = vld [vmem:[%s215 + $0x1088] sm:$0xff]
        %v804 = vld [vmem:[%s215 + $0x1090] sm:$0xff]
        %v805 = vld [vmem:[%s215 + $0x1098] sm:$0xff]
        %v806 = vld [vmem:[%s215 + $0x10a0] sm:$0xff]
        %v807 = vld [vmem:[%s215 + $0x10a8] sm:$0xff]
        %v808 = vld [vmem:[%s215 + $0x10b0] sm:$0xff]
        %v809 = vld [vmem:[%s215 + $0x10b8] sm:$0xff]
        %v810 = vld [vmem:[%s215 + $0x10c0] sm:$0xff]
        %v811 = vld [vmem:[%s215 + $0x10c8] sm:$0xff]
        %v812 = vld [vmem:[%s215 + $0x10d0] sm:$0xff]
        %v813 = vld [vmem:[%s215 + $0x10d8] sm:$0xff]
        %v814 = vld [vmem:[%s215 + $0x10e0] sm:$0xff]
        %v815 = vld [vmem:[%s215 + $0x10e8] sm:$0xff]
        %v816 = vld [vmem:[%s215 + $0x10f0] sm:$0xff]
        %v817 = vld [vmem:[%s215 + $0x10f8] sm:$0xff]
        %v818 = vld [vmem:[%s215 + $0x1100] sm:$0xff]
        %v819 = vld [vmem:[%s215 + $0x1108] sm:$0xff]
        %v820 = vld [vmem:[%s215 + $0x1110] sm:$0xff]
        %v821 = vld [vmem:[%s215 + $0x1118] sm:$0xff]
        %v822 = vld [vmem:[%s215 + $0x1120] sm:$0xff]
        %v823 = vld [vmem:[%s215 + $0x1128] sm:$0xff]
        %v824 = vld [vmem:[%s215 + $0x1130] sm:$0xff]
        %v825 = vld [vmem:[%s215 + $0x1138] sm:$0xff]
        %v826 = vld [vmem:[%s215 + $0x1140] sm:$0xff]
        %v827 = vld [vmem:[%s215 + $0x1148] sm:$0xff]
        %v828 = vld [vmem:[%s215 + $0x1150] sm:$0xff]
        %v829 = vld [vmem:[%s215 + $0x1158] sm:$0xff]
        %v830 = vld [vmem:[%s215 + $0x1160] sm:$0xff]
        %v831 = vld [vmem:[%s215 + $0x1168] sm:$0xff]
        %v832 = vld [vmem:[%s215 + $0x1170] sm:$0xff]
        %v833 = vld [vmem:[%s215 + $0x1178] sm:$0xff]
        %v834 = vld [vmem:[%s215 + $0x1180] sm:$0xff]
        %v835 = vld [vmem:[%s215 + $0x1188] sm:$0xff]
        %v836 = vld [vmem:[%s215 + $0x1190] sm:$0xff]
        %v837 = vld [vmem:[%s215 + $0x1198] sm:$0xff]
        %v838 = vld [vmem:[%s215 + $0x11a0] sm:$0xff]
        %v839 = vld [vmem:[%s215 + $0x11a8] sm:$0xff]
        %v840 = vld [vmem:[%s215 + $0x11b0] sm:$0xff]
        %v841 = vld [vmem:[%s215 + $0x11b8] sm:$0xff]
        %v842 = vld [vmem:[%s215 + $0x11c0] sm:$0xff]
        %v843 = vld [vmem:[%s215 + $0x11c8] sm:$0xff]
        %v844 = vld [vmem:[%s215 + $0x11d0] sm:$0xff]
        %v845 = vld [vmem:[%s215 + $0x11d8] sm:$0xff]
        %v846 = vld [vmem:[%s215 + $0x11e0] sm:$0xff]
        %v847 = vld [vmem:[%s215 + $0x11e8] sm:$0xff]
        %v848 = vld [vmem:[%s215 + $0x11f0] sm:$0xff]
        %v849 = vld [vmem:[%s215 + $0x11f8] sm:$0xff]
        %v850 = vld [vmem:[%s215 + $0x1200] sm:$0xff]
        %v851 = vld [vmem:[%s215 + $0x1208] sm:$0xff]
        %v852 = vld [vmem:[%s215 + $0x1210] sm:$0xff]
        %v853 = vld [vmem:[%s215 + $0x1218] sm:$0xff]
        %v854 = vld [vmem:[%s215 + $0x1220] sm:$0xff]
        %v855 = vld [vmem:[%s215 + $0x1228] sm:$0xff]
        %v856 = vld [vmem:[%s215 + $0x1230] sm:$0xff]
        %v857 = vld [vmem:[%s215 + $0x1238] sm:$0xff]
        %v858 = vld [vmem:[%s215 + $0x1240] sm:$0xff]
        %v859 = vld [vmem:[%s215 + $0x1248] sm:$0xff]
        %v860 = vld [vmem:[%s215 + $0x1250] sm:$0xff]
        %v861 = vld [vmem:[%s215 + $0x1258] sm:$0xff]
        %v862 = vld [vmem:[%s215 + $0x1260] sm:$0xff]
        %v863 = vld [vmem:[%s215 + $0x1268] sm:$0xff]
        %v864 = vld [vmem:[%s215 + $0x1270] sm:$0xff]
        %v865 = vld [vmem:[%s215 + $0x1278] sm:$0xff]
        %v866 = vld [vmem:[%s215 + $0x1280] sm:$0xff]
        %v867 = vld [vmem:[%s215 + $0x1288] sm:$0xff]
        %v868 = vld [vmem:[%s215 + $0x1290] sm:$0xff]
        %v869 = vld [vmem:[%s215 + $0x1298] sm:$0xff]
        %v870 = vld [vmem:[%s215 + $0x12a0] sm:$0xff]
        %v871 = vld [vmem:[%s215 + $0x12a8] sm:$0xff]
        %v872 = vld [vmem:[%s215 + $0x12b0] sm:$0xff]
        %v873 = vld [vmem:[%s215 + $0x12b8] sm:$0xff]
        %v874 = vld [vmem:[%s215 + $0x12c0] sm:$0xff]
        %v875 = vld [vmem:[%s215 + $0x12c8] sm:$0xff]
        %v876 = vld [vmem:[%s215 + $0x12d0] sm:$0xff]
        %v877 = vld [vmem:[%s215 + $0x12d8] sm:$0xff]
        %v878 = vld [vmem:[%s215 + $0x12e0] sm:$0xff]
        %v879 = vld [vmem:[%s215 + $0x12e8] sm:$0xff]
        %v880 = vld [vmem:[%s215 + $0x12f0] sm:$0xff]
        %v881 = vld [vmem:[%s215 + $0x12f8] sm:$0xff]
        %v882 = vld [vmem:[%s215 + $0x1300] sm:$0xff]
        %v883 = vld [vmem:[%s215 + $0x1308] sm:$0xff]
        %v884 = vld [vmem:[%s215 + $0x1310] sm:$0xff]
        %v885 = vld [vmem:[%s215 + $0x1318] sm:$0xff]
        %v886 = vld [vmem:[%s215 + $0x1320] sm:$0xff]
        %v887 = vld [vmem:[%s215 + $0x1328] sm:$0xff]
        %v888 = vld [vmem:[%s215 + $0x1330] sm:$0xff]
        %v889 = vld [vmem:[%s215 + $0x1338] sm:$0xff]
        %v890 = vld [vmem:[%s215 + $0x1340] sm:$0xff]
        %v891 = vld [vmem:[%s215 + $0x1348] sm:$0xff]
        %v892 = vld [vmem:[%s215 + $0x1350] sm:$0xff]
        %v893 = vld [vmem:[%s215 + $0x1358] sm:$0xff]
        %v894 = vld [vmem:[%s215 + $0x1360] sm:$0xff]
        %v895 = vld [vmem:[%s215 + $0x1368] sm:$0xff]
        %v896 = vld [vmem:[%s215 + $0x1370] sm:$0xff]
        %v897 = vld [vmem:[%s215 + $0x1378] sm:$0xff]
        %v898 = vld [vmem:[%s215 + $0x1380] sm:$0xff]
        %v899 = vld [vmem:[%s215 + $0x1388] sm:$0xff]
        %v900 = vld [vmem:[%s215 + $0x1390] sm:$0xff]
        %v901 = vld [vmem:[%s215 + $0x1398] sm:$0xff]
        %v902 = vld [vmem:[%s215 + $0x13a0] sm:$0xff]
        %v903 = vld [vmem:[%s215 + $0x13a8] sm:$0xff]
        %v904 = vld [vmem:[%s215 + $0x13b0] sm:$0xff]
        %v905 = vld [vmem:[%s215 + $0x13b8] sm:$0xff]
        %v906 = vld [vmem:[%s215 + $0x13c0] sm:$0xff]
        %v907 = vld [vmem:[%s215 + $0x13c8] sm:$0xff]
        %v908 = vld [vmem:[%s215 + $0x13d0] sm:$0xff]
        %v909 = vld [vmem:[%s215 + $0x13d8] sm:$0xff]
        %v910 = vld [vmem:[%s215 + $0x13e0] sm:$0xff]
        %v911 = vld [vmem:[%s215 + $0x13e8] sm:$0xff]
        %v912 = vld [vmem:[%s215 + $0x13f0] sm:$0xff]
        %v913 = vld [vmem:[%s215 + $0x13f8] sm:$0xff]
        %v914 = vld [vmem:[%s215 + $0x1400] sm:$0xff]
        %v915 = vld [vmem:[%s215 + $0x1408] sm:$0xff]
        %v916 = vld [vmem:[%s215 + $0x1410] sm:$0xff]
        %v917 = vld [vmem:[%s215 + $0x1418] sm:$0xff]
        %v918 = vld [vmem:[%s215 + $0x1420] sm:$0xff]
        %v919 = vld [vmem:[%s215 + $0x1428] sm:$0xff]
        %v920 = vld [vmem:[%s215 + $0x1430] sm:$0xff]
        %v921 = vld [vmem:[%s215 + $0x1438] sm:$0xff]
        %v922 = vld [vmem:[%s215 + $0x1440] sm:$0xff]
        %v923 = vld [vmem:[%s215 + $0x1448] sm:$0xff]
        %v924 = vld [vmem:[%s215 + $0x1450] sm:$0xff]
        %v925 = vld [vmem:[%s215 + $0x1458] sm:$0xff]
        %v926 = vld [vmem:[%s215 + $0x1460] sm:$0xff]
        %v927 = vld [vmem:[%s215 + $0x1468] sm:$0xff]
        %v928 = vld [vmem:[%s215 + $0x1470] sm:$0xff]
        %v929 = vld [vmem:[%s215 + $0x1478] sm:$0xff]
        %v930 = vld [vmem:[%s215 + $0x1480] sm:$0xff]
        %v931 = vld [vmem:[%s215 + $0x1488] sm:$0xff]
        %v932 = vld [vmem:[%s215 + $0x1490] sm:$0xff]
        %v933 = vld [vmem:[%s215 + $0x1498] sm:$0xff]
        %v934 = vld [vmem:[%s215 + $0x14a0] sm:$0xff]
        %v935 = vld [vmem:[%s215 + $0x14a8] sm:$0xff]
        %v936 = vld [vmem:[%s215 + $0x14b0] sm:$0xff]
        %v937 = vld [vmem:[%s215 + $0x14b8] sm:$0xff]
        %v938 = vld [vmem:[%s215 + $0x14c0] sm:$0xff]
        %v939 = vld [vmem:[%s215 + $0x14c8] sm:$0xff]
        %v940 = vld [vmem:[%s215 + $0x14d0] sm:$0xff]
        %v941 = vld [vmem:[%s215 + $0x14d8] sm:$0xff]
        %v942 = vld [vmem:[%s215 + $0x14e0] sm:$0xff]
        %v943 = vld [vmem:[%s215 + $0x14e8] sm:$0xff]
        %v944 = vld [vmem:[%s215 + $0x14f0] sm:$0xff]
        %v945 = vld [vmem:[%s215 + $0x14f8] sm:$0xff]
        %v946 = vld [vmem:[%s215 + $0x1500] sm:$0xff]
        %v947 = vld [vmem:[%s215 + $0x1508] sm:$0xff]
        %v948 = vld [vmem:[%s215 + $0x1510] sm:$0xff]
        %v949 = vld [vmem:[%s215 + $0x1518] sm:$0xff]
        %v950 = vld [vmem:[%s215 + $0x1520] sm:$0xff]
        %v951 = vld [vmem:[%s215 + $0x1528] sm:$0xff]
        %v952 = vld [vmem:[%s215 + $0x1530] sm:$0xff]
        %v953 = vld [vmem:[%s215 + $0x1538] sm:$0xff]
        %v954 = vld [vmem:[%s215 + $0x1540] sm:$0xff]
        %v955 = vld [vmem:[%s215 + $0x1548] sm:$0xff]
        %v956 = vld [vmem:[%s215 + $0x1550] sm:$0xff]
        %v957 = vld [vmem:[%s215 + $0x1558] sm:$0xff]
        %v958 = vld [vmem:[%s215 + $0x1560] sm:$0xff]
        %v959 = vld [vmem:[%s215 + $0x1568] sm:$0xff]
        %v960 = vld [vmem:[%s215 + $0x1570] sm:$0xff]
        %v961 = vld [vmem:[%s215 + $0x1578] sm:$0xff]
        %v962 = vld [vmem:[%s215 + $0x1580] sm:$0xff]
        %v963 = vld [vmem:[%s215 + $0x1588] sm:$0xff]
        %v964 = vld [vmem:[%s215 + $0x1590] sm:$0xff]
        %v965 = vld [vmem:[%s215 + $0x1598] sm:$0xff]
        %v966 = vld [vmem:[%s215 + $0x15a0] sm:$0xff]
        %v967 = vld [vmem:[%s215 + $0x15a8] sm:$0xff]
        %v968 = vld [vmem:[%s215 + $0x15b0] sm:$0xff]
        %v969 = vld [vmem:[%s215 + $0x15b8] sm:$0xff]
        %v970 = vld [vmem:[%s215 + $0x15c0] sm:$0xff]
        %v971 = vld [vmem:[%s215 + $0x15c8] sm:$0xff]
        %v972 = vld [vmem:[%s215 + $0x15d0] sm:$0xff]
        %v973 = vld [vmem:[%s215 + $0x15d8] sm:$0xff]
        %v974 = vld [vmem:[%s215 + $0x15e0] sm:$0xff]
        %v975 = vld [vmem:[%s215 + $0x15e8] sm:$0xff]
        %v976 = vld [vmem:[%s215 + $0x15f0] sm:$0xff]
        %v977 = vld [vmem:[%s215 + $0x15f8] sm:$0xff]
        %v978 = vld [vmem:[%s215 + $0x1600] sm:$0xff]
        %v979 = vld [vmem:[%s215 + $0x1608] sm:$0xff]
        %v980 = vld [vmem:[%s215 + $0x1610] sm:$0xff]
        %v981 = vld [vmem:[%s215 + $0x1618] sm:$0xff]
        %v982 = vld [vmem:[%s215 + $0x1620] sm:$0xff]
        %v983 = vld [vmem:[%s215 + $0x1628] sm:$0xff]
        %v984 = vld [vmem:[%s215 + $0x1630] sm:$0xff]
        %v985 = vld [vmem:[%s215 + $0x1638] sm:$0xff]
        %v986 = vld [vmem:[%s215 + $0x1640] sm:$0xff]
        %v987 = vld [vmem:[%s215 + $0x1648] sm:$0xff]
        %v988 = vld [vmem:[%s215 + $0x1650] sm:$0xff]
        %v989 = vld [vmem:[%s215 + $0x1658] sm:$0xff]
        %v990 = vld [vmem:[%s215 + $0x1660] sm:$0xff]
        %v991 = vld [vmem:[%s215 + $0x1668] sm:$0xff]
        %v992 = vld [vmem:[%s215 + $0x1670] sm:$0xff]
        %v993 = vld [vmem:[%s215 + $0x1678] sm:$0xff]
        %v994 = vld [vmem:[%s215 + $0x1680] sm:$0xff]
        %v995 = vld [vmem:[%s215 + $0x1688] sm:$0xff]
        %v996 = vld [vmem:[%s215 + $0x1690] sm:$0xff]
        %v997 = vld [vmem:[%s215 + $0x1698] sm:$0xff]
        %v998 = vld [vmem:[%s215 + $0x16a0] sm:$0xff]
        %v999 = vld [vmem:[%s215 + $0x16a8] sm:$0xff]
        %v1000 = vld [vmem:[%s215 + $0x16b0] sm:$0xff]
        %v1001 = vld [vmem:[%s215 + $0x16b8] sm:$0xff]
        %v1002 = vld [vmem:[%s215 + $0x16c0] sm:$0xff]
        %v1003 = vld [vmem:[%s215 + $0x16c8] sm:$0xff]
        %v1004 = vld [vmem:[%s215 + $0x16d0] sm:$0xff]
        %v1005 = vld [vmem:[%s215 + $0x16d8] sm:$0xff]
        %v1006 = vld [vmem:[%s215 + $0x16e0] sm:$0xff]
        %v1007 = vld [vmem:[%s215 + $0x16e8] sm:$0xff]
        %v1008 = vld [vmem:[%s215 + $0x16f0] sm:$0xff]
        %v1009 = vld [vmem:[%s215 + $0x16f8] sm:$0xff]
        %v1010 = vld [vmem:[%s215 + $0x1700] sm:$0xff]
        %v1011 = vld [vmem:[%s215 + $0x1708] sm:$0xff]
        %v1012 = vld [vmem:[%s215 + $0x1710] sm:$0xff]
        %v1013 = vld [vmem:[%s215 + $0x1718] sm:$0xff]
        %v1014 = vld [vmem:[%s215 + $0x1720] sm:$0xff]
        %v1015 = vld [vmem:[%s215 + $0x1728] sm:$0xff]
        %v1016 = vld [vmem:[%s215 + $0x1730] sm:$0xff]
        %v1017 = vld [vmem:[%s215 + $0x1738] sm:$0xff]
        %v1018 = vld [vmem:[%s215 + $0x1740] sm:$0xff]
        %v1019 = vld [vmem:[%s215 + $0x1748] sm:$0xff]
        %v1020 = vld [vmem:[%s215 + $0x1750] sm:$0xff]
        %v1021 = vld [vmem:[%s215 + $0x1758] sm:$0xff]
        %v1022 = vld [vmem:[%s215 + $0x1760] sm:$0xff]
        %v1023 = vld [vmem:[%s215 + $0x1768] sm:$0xff]
        %v1024 = vld [vmem:[%s215 + $0x1770] sm:$0xff]
        %v1025 = vld [vmem:[%s215 + $0x1778] sm:$0xff]
        %v1026 = vld [vmem:[%s215 + $0x1780] sm:$0xff]
        %v1027 = vld [vmem:[%s215 + $0x1788] sm:$0xff]
        %v1028 = vld [vmem:[%s215 + $0x1790] sm:$0xff]
        %v1029 = vld [vmem:[%s215 + $0x1798] sm:$0xff]
        %v1030 = vld [vmem:[%s215 + $0x17a0] sm:$0xff]
        %v1031 = vld [vmem:[%s215 + $0x17a8] sm:$0xff]
        %v1032 = vld [vmem:[%s215 + $0x17b0] sm:$0xff]
        %v1033 = vld [vmem:[%s215 + $0x17b8] sm:$0xff]
        %v1034 = vld [vmem:[%s215 + $0x17c0] sm:$0xff]
        %v1035 = vld [vmem:[%s215 + $0x17c8] sm:$0xff]
        %v1036 = vld [vmem:[%s215 + $0x17d0] sm:$0xff]
        %v1037 = vld [vmem:[%s215 + $0x17d8] sm:$0xff]
        %v1038 = vld [vmem:[%s215 + $0x17e0] sm:$0xff]
        %v1039 = vld [vmem:[%s215 + $0x17e8] sm:$0xff]
        %v1040 = vld [vmem:[%s215 + $0x17f0] sm:$0xff]
        %v1041 = vld [vmem:[%s215 + $0x17f8] sm:$0xff]
        %v1042 = vld [vmem:[%s215 + $0x1800] sm:$0xff]
        %v1043 = vld [vmem:[%s215 + $0x1808] sm:$0xff]
        %v1044 = vld [vmem:[%s215 + $0x1810] sm:$0xff]
        %v1045 = vld [vmem:[%s215 + $0x1818] sm:$0xff]
        %v1046 = vld [vmem:[%s215 + $0x1820] sm:$0xff]
        %v1047 = vld [vmem:[%s215 + $0x1828] sm:$0xff]
        %v1048 = vld [vmem:[%s215 + $0x1830] sm:$0xff]
        %v1049 = vld [vmem:[%s215 + $0x1838] sm:$0xff]
        %v1050 = vld [vmem:[%s215 + $0x1840] sm:$0xff]
        %v1051 = vld [vmem:[%s215 + $0x1848] sm:$0xff]
        %v1052 = vld [vmem:[%s215 + $0x1850] sm:$0xff]
        %v1053 = vld [vmem:[%s215 + $0x1858] sm:$0xff]
        %v1054 = vld [vmem:[%s215 + $0x1860] sm:$0xff]
        %v1055 = vld [vmem:[%s215 + $0x1868] sm:$0xff]
        %v1056 = vld [vmem:[%s215 + $0x1870] sm:$0xff]
        %v1057 = vld [vmem:[%s215 + $0x1878] sm:$0xff]
        %v1058 = vld [vmem:[%s215 + $0x1880] sm:$0xff]
        %v1059 = vld [vmem:[%s215 + $0x1888] sm:$0xff]
        %v1060 = vld [vmem:[%s215 + $0x1890] sm:$0xff]
        %v1061 = vld [vmem:[%s215 + $0x1898] sm:$0xff]
        %v1062 = vld [vmem:[%s215 + $0x18a0] sm:$0xff]
        %v1063 = vld [vmem:[%s215 + $0x18a8] sm:$0xff]
        %v1064 = vld [vmem:[%s215 + $0x18b0] sm:$0xff]
        %v1065 = vld [vmem:[%s215 + $0x18b8] sm:$0xff]
        %v1066 = vld [vmem:[%s215 + $0x18c0] sm:$0xff]
        %v1067 = vld [vmem:[%s215 + $0x18c8] sm:$0xff]
        %v1068 = vld [vmem:[%s215 + $0x18d0] sm:$0xff]
        %v1069 = vld [vmem:[%s215 + $0x18d8] sm:$0xff]
        %v1070 = vld [vmem:[%s215 + $0x18e0] sm:$0xff]
        %v1071 = vld [vmem:[%s215 + $0x18e8] sm:$0xff]
        %v1072 = vld [vmem:[%s215 + $0x18f0] sm:$0xff]
        %v1073 = vld [vmem:[%s215 + $0x18f8] sm:$0xff]
        %v1074 = vld [vmem:[%s224] sm:$0x3]
        %v1076 = vlaneseq
        %v1077 = vshrl.u32 %v1076, 7
        %v1078 = vsub.s32 0, %v1077
        %v1079 = vrot.slane %v1074, %v1078
        %v1080 = vlaneseq
        %v1081 = vshrl.u32 %v1080, 7
        %v1082 = vsub.s32 1, %v1081
        %v1083 = vrot.slane %v1074, %v1082
        %v1093 = vcombine.high %v267, %v267
        %v1095 = vunpack.c.l.s4 1966171168
        %v1096 = vunpack.c.0.s8 %v1095
        %v1097 = vlaneseq
        %v1098 = vshrl.u32 %v1097, 7
        %v1099 = vsub.s32 %v1096, %v1098
        %v1100 = vrot.slane %v267, %v1099
        %v1102 = vunpack.c.l.s4 1966171168
        %v1103 = vunpack.c.0.s8 %v1102
        %v1104 = vlaneseq
        %v1105 = vshrl.u32 %v1104, 7
        %v1106 = vsub.s32 %v1103, %v1105
        %v1107 = vrot.slane %v1093, %v1106
        %v1108 = vcombine.high %v1100, %v1100
        %v1109 = vcombine.high %v1107, %v1107
        %v1111 = vunpack.c.l.s4 1966171168
        %v1112 = vunpack.c.0.s8 %v1111
        %v1113 = vlaneseq
        %v1114 = vshrl.u32 %v1113, 7
        %v1115 = vsub.s32 %v1112, %v1114
        %v1116 = vrot.slane %v1100, %v1115
        %v1118 = vunpack.c.l.s4 1966171168
        %v1119 = vunpack.c.0.s8 %v1118
        %v1120 = vlaneseq
        %v1121 = vshrl.u32 %v1120, 7
        %v1122 = vsub.s32 %v1119, %v1121
        %v1123 = vrot.slane %v1107, %v1122
        %v1125 = vunpack.c.l.s4 1966171168
        %v1126 = vunpack.c.0.s8 %v1125
        %v1127 = vlaneseq
        %v1128 = vshrl.u32 %v1127, 7
        %v1129 = vsub.s32 %v1126, %v1128
        %v1130 = vrot.slane %v1108, %v1129
        %v1132 = vunpack.c.l.s4 1966171168
        %v1133 = vunpack.c.0.s8 %v1132
        %v1134 = vlaneseq
        %v1135 = vshrl.u32 %v1134, 7
        %v1136 = vsub.s32 %v1133, %v1135
        %v1137 = vrot.slane %v1109, %v1136
        %v1138 = vcombine.high %v1116, %v1116
        %v1139 = vcombine.high %v1123, %v1123
        %v1140 = vcombine.high %v1130, %v1130
        %v1141 = vcombine.high %v1137, %v1137
        %v1142 = vcombine.high %v268, %v268
        %v1144 = vunpack.c.l.s4 1966171168
        %v1145 = vunpack.c.0.s8 %v1144
        %v1146 = vlaneseq
        %v1147 = vshrl.u32 %v1146, 7
        %v1148 = vsub.s32 %v1145, %v1147
        %v1149 = vrot.slane %v268, %v1148
        %v1151 = vunpack.c.l.s4 1966171168
        %v1152 = vunpack.c.0.s8 %v1151
        %v1153 = vlaneseq
        %v1154 = vshrl.u32 %v1153, 7
        %v1155 = vsub.s32 %v1152, %v1154
        %v1156 = vrot.slane %v1142, %v1155
        %v1157 = vcombine.high %v1149, %v1149
        %v1158 = vcombine.high %v1156, %v1156
        %v1160 = vunpack.c.l.s4 1966171168
        %v1161 = vunpack.c.0.s8 %v1160
        %v1162 = vlaneseq
        %v1163 = vshrl.u32 %v1162, 7
        %v1164 = vsub.s32 %v1161, %v1163
        %v1165 = vrot.slane %v1149, %v1164
        %v1167 = vunpack.c.l.s4 1966171168
        %v1168 = vunpack.c.0.s8 %v1167
        %v1169 = vlaneseq
        %v1170 = vshrl.u32 %v1169, 7
        %v1171 = vsub.s32 %v1168, %v1170
        %v1172 = vrot.slane %v1156, %v1171
        %v1174 = vunpack.c.l.s4 1966171168
        %v1175 = vunpack.c.0.s8 %v1174
        %v1176 = vlaneseq
        %v1177 = vshrl.u32 %v1176, 7
        %v1178 = vsub.s32 %v1175, %v1177
        %v1179 = vrot.slane %v1157, %v1178
        %v1181 = vunpack.c.l.s4 1966171168
        %v1182 = vunpack.c.0.s8 %v1181
        %v1183 = vlaneseq
        %v1184 = vshrl.u32 %v1183, 7
        %v1185 = vsub.s32 %v1182, %v1184
        %v1186 = vrot.slane %v1158, %v1185
        %v1187 = vcombine.high %v1165, %v1165
        %v1188 = vcombine.high %v1172, %v1172
        %v1189 = vcombine.high %v1179, %v1179
        %v1190 = vcombine.high %v1186, %v1186
        %v1191 = vcombine.high %v269, %v269
        %v1193 = vunpack.c.l.s4 1966171168
        %v1194 = vunpack.c.0.s8 %v1193
        %v1195 = vlaneseq
        %v1196 = vshrl.u32 %v1195, 7
        %v1197 = vsub.s32 %v1194, %v1196
        %v1198 = vrot.slane %v269, %v1197
        %v1200 = vunpack.c.l.s4 1966171168
        %v1201 = vunpack.c.0.s8 %v1200
        %v1202 = vlaneseq
        %v1203 = vshrl.u32 %v1202, 7
        %v1204 = vsub.s32 %v1201, %v1203
        %v1205 = vrot.slane %v1191, %v1204
        %v1206 = vcombine.high %v1198, %v1198
        %v1207 = vcombine.high %v1205, %v1205
        %v1209 = vunpack.c.l.s4 1966171168
        %v1210 = vunpack.c.0.s8 %v1209
        %v1211 = vlaneseq
        %v1212 = vshrl.u32 %v1211, 7
        %v1213 = vsub.s32 %v1210, %v1212
        %v1214 = vrot.slane %v1198, %v1213
        %v1216 = vunpack.c.l.s4 1966171168
        %v1217 = vunpack.c.0.s8 %v1216
        %v1218 = vlaneseq
        %v1219 = vshrl.u32 %v1218, 7
        %v1220 = vsub.s32 %v1217, %v1219
        %v1221 = vrot.slane %v1205, %v1220
        %v1223 = vunpack.c.l.s4 1966171168
        %v1224 = vunpack.c.0.s8 %v1223
        %v1225 = vlaneseq
        %v1226 = vshrl.u32 %v1225, 7
        %v1227 = vsub.s32 %v1224, %v1226
        %v1228 = vrot.slane %v1206, %v1227
        %v1230 = vunpack.c.l.s4 1966171168
        %v1231 = vunpack.c.0.s8 %v1230
        %v1232 = vlaneseq
        %v1233 = vshrl.u32 %v1232, 7
        %v1234 = vsub.s32 %v1231, %v1233
        %v1235 = vrot.slane %v1207, %v1234
        %v1236 = vcombine.high %v1214, %v1214
        %v1237 = vcombine.high %v1221, %v1221
        %v1238 = vcombine.high %v1228, %v1228
        %v1239 = vcombine.high %v1235, %v1235
        %v1240 = vcombine.high %v270, %v270
        %v1242 = vunpack.c.l.s4 1966171168
        %v1243 = vunpack.c.0.s8 %v1242
        %v1244 = vlaneseq
        %v1245 = vshrl.u32 %v1244, 7
        %v1246 = vsub.s32 %v1243, %v1245
        %v1247 = vrot.slane %v270, %v1246
        %v1249 = vunpack.c.l.s4 1966171168
        %v1250 = vunpack.c.0.s8 %v1249
        %v1251 = vlaneseq
        %v1252 = vshrl.u32 %v1251, 7
        %v1253 = vsub.s32 %v1250, %v1252
        %v1254 = vrot.slane %v1240, %v1253
        %v1255 = vcombine.high %v1247, %v1247
        %v1256 = vcombine.high %v1254, %v1254
        %v1258 = vunpack.c.l.s4 1966171168
        %v1259 = vunpack.c.0.s8 %v1258
        %v1260 = vlaneseq
        %v1261 = vshrl.u32 %v1260, 7
        %v1262 = vsub.s32 %v1259, %v1261
        %v1263 = vrot.slane %v1247, %v1262
        %v1265 = vunpack.c.l.s4 1966171168
        %v1266 = vunpack.c.0.s8 %v1265
        %v1267 = vlaneseq
        %v1268 = vshrl.u32 %v1267, 7
        %v1269 = vsub.s32 %v1266, %v1268
        %v1270 = vrot.slane %v1254, %v1269
        %v1272 = vunpack.c.l.s4 1966171168
        %v1273 = vunpack.c.0.s8 %v1272
        %v1274 = vlaneseq
        %v1275 = vshrl.u32 %v1274, 7
        %v1276 = vsub.s32 %v1273, %v1275
        %v1277 = vrot.slane %v1255, %v1276
        %v1279 = vunpack.c.l.s4 1966171168
        %v1280 = vunpack.c.0.s8 %v1279
        %v1281 = vlaneseq
        %v1282 = vshrl.u32 %v1281, 7
        %v1283 = vsub.s32 %v1280, %v1282
        %v1284 = vrot.slane %v1256, %v1283
        %v1285 = vcombine.high %v1263, %v1263
        %v1286 = vcombine.high %v1270, %v1270
        %v1287 = vcombine.high %v1277, %v1277
        %v1288 = vcombine.high %v1284, %v1284
        %v1289 = vcombine.high %v271, %v271
        %v1291 = vunpack.c.l.s4 1966171168
        %v1292 = vunpack.c.0.s8 %v1291
        %v1293 = vlaneseq
        %v1294 = vshrl.u32 %v1293, 7
        %v1295 = vsub.s32 %v1292, %v1294
        %v1296 = vrot.slane %v271, %v1295
        %v1298 = vunpack.c.l.s4 1966171168
        %v1299 = vunpack.c.0.s8 %v1298
        %v1300 = vlaneseq
        %v1301 = vshrl.u32 %v1300, 7
        %v1302 = vsub.s32 %v1299, %v1301
        %v1303 = vrot.slane %v1289, %v1302
        %v1304 = vcombine.high %v1296, %v1296
        %v1305 = vcombine.high %v1303, %v1303
        %v1307 = vunpack.c.l.s4 1966171168
        %v1308 = vunpack.c.0.s8 %v1307
        %v1309 = vlaneseq
        %v1310 = vshrl.u32 %v1309, 7
        %v1311 = vsub.s32 %v1308, %v1310
        %v1312 = vrot.slane %v1296, %v1311
        %v1314 = vunpack.c.l.s4 1966171168
        %v1315 = vunpack.c.0.s8 %v1314
        %v1316 = vlaneseq
        %v1317 = vshrl.u32 %v1316, 7
        %v1318 = vsub.s32 %v1315, %v1317
        %v1319 = vrot.slane %v1303, %v1318
        %v1321 = vunpack.c.l.s4 1966171168
        %v1322 = vunpack.c.0.s8 %v1321
        %v1323 = vlaneseq
        %v1324 = vshrl.u32 %v1323, 7
        %v1325 = vsub.s32 %v1322, %v1324
        %v1326 = vrot.slane %v1304, %v1325
        %v1328 = vunpack.c.l.s4 1966171168
        %v1329 = vunpack.c.0.s8 %v1328
        %v1330 = vlaneseq
        %v1331 = vshrl.u32 %v1330, 7
        %v1332 = vsub.s32 %v1329, %v1331
        %v1333 = vrot.slane %v1305, %v1332
        %v1334 = vcombine.high %v1312, %v1312
        %v1335 = vcombine.high %v1319, %v1319
        %v1336 = vcombine.high %v1326, %v1326
        %v1337 = vcombine.high %v1333, %v1333
        %v1338 = vcombine.high %v272, %v272
        %v1340 = vunpack.c.l.s4 1966171168
        %v1341 = vunpack.c.0.s8 %v1340
        %v1342 = vlaneseq
        %v1343 = vshrl.u32 %v1342, 7
        %v1344 = vsub.s32 %v1341, %v1343
        %v1345 = vrot.slane %v272, %v1344
        %v1347 = vunpack.c.l.s4 1966171168
        %v1348 = vunpack.c.0.s8 %v1347
        %v1349 = vlaneseq
        %v1350 = vshrl.u32 %v1349, 7
        %v1351 = vsub.s32 %v1348, %v1350
        %v1352 = vrot.slane %v1338, %v1351
        %v1353 = vcombine.high %v1345, %v1345
        %v1354 = vcombine.high %v1352, %v1352
        %v1356 = vunpack.c.l.s4 1966171168
        %v1357 = vunpack.c.0.s8 %v1356
        %v1358 = vlaneseq
        %v1359 = vshrl.u32 %v1358, 7
        %v1360 = vsub.s32 %v1357, %v1359
        %v1361 = vrot.slane %v1345, %v1360
        %v1363 = vunpack.c.l.s4 1966171168
        %v1364 = vunpack.c.0.s8 %v1363
        %v1365 = vlaneseq
        %v1366 = vshrl.u32 %v1365, 7
        %v1367 = vsub.s32 %v1364, %v1366
        %v1368 = vrot.slane %v1352, %v1367
        %v1370 = vunpack.c.l.s4 1966171168
        %v1371 = vunpack.c.0.s8 %v1370
        %v1372 = vlaneseq
        %v1373 = vshrl.u32 %v1372, 7
        %v1374 = vsub.s32 %v1371, %v1373
        %v1375 = vrot.slane %v1353, %v1374
        %v1377 = vunpack.c.l.s4 1966171168
        %v1378 = vunpack.c.0.s8 %v1377
        %v1379 = vlaneseq
        %v1380 = vshrl.u32 %v1379, 7
        %v1381 = vsub.s32 %v1378, %v1380
        %v1382 = vrot.slane %v1354, %v1381
        %v1383 = vcombine.high %v1361, %v1361
        %v1384 = vcombine.high %v1368, %v1368
        %v1385 = vcombine.high %v1375, %v1375
        %v1386 = vcombine.high %v1382, %v1382
        %v1388 = vunpack.c.l.s4 1966171168
        %v1389 = vunpack.c.0.s8 %v1388
        %v1390 = vlaneseq
        %v1391 = vshrl.u32 %v1390, 7
        %v1392 = vsub.s32 %v1389, %v1391
        %v1393 = vrot.slane %v273, %v1392
        %v1394 = vcombine.high %v1393, %v1393
        %v1396 = vunpack.c.l.s4 1966171168
        %v1397 = vunpack.c.0.s8 %v1396
        %v1398 = vlaneseq
        %v1399 = vshrl.u32 %v1398, 7
        %v1400 = vsub.s32 %v1397, %v1399
        %v1401 = vrot.slane %v1393, %v1400
        %v1403 = vunpack.c.l.s4 1966171168
        %v1404 = vunpack.c.0.s8 %v1403
        %v1405 = vlaneseq
        %v1406 = vshrl.u32 %v1405, 7
        %v1407 = vsub.s32 %v1404, %v1406
        %v1408 = vrot.slane %v1394, %v1407
        %v2259 = vunpack.c.l.b16 %v274
        %v2260 = vunpack.c.h.b16 %v274
        %v2261 = vunpack.c.l.b16 %v275
        %v2262 = vunpack.c.h.b16 %v275
        %v2263 = vunpack.c.l.b16 %v276
        %v2264 = vunpack.c.h.b16 %v276
        %v2265 = vunpack.c.l.b16 %v277
        %v2266 = vunpack.c.h.b16 %v277
        %v2267 = vunpack.c.l.b16 %v278
        %v2268 = vunpack.c.h.b16 %v278
        %v2269 = vunpack.c.l.b16 %v279
        %v2270 = vunpack.c.h.b16 %v279
        %v2271 = vunpack.c.l.b16 %v280
        %v2272 = vunpack.c.h.b16 %v280
        %v2273 = vunpack.c.l.b16 %v281
        %v2274 = vunpack.c.h.b16 %v281
        %v2275 = vunpack.c.l.b16 %v282
        %v2276 = vunpack.c.h.b16 %v282
        %v2277 = vunpack.c.l.b16 %v283
        %v2278 = vunpack.c.h.b16 %v283
        %v2279 = vunpack.c.l.b16 %v284
        %v2280 = vunpack.c.h.b16 %v284
        %v2281 = vunpack.c.l.b16 %v285
        %v2282 = vunpack.c.h.b16 %v285
        %v2283 = vunpack.c.l.b16 %v286
        %v2284 = vunpack.c.h.b16 %v286
        %v2285 = vunpack.c.l.b16 %v287
        %v2286 = vunpack.c.h.b16 %v287
        %v2287 = vunpack.c.l.b16 %v288
        %v2288 = vunpack.c.h.b16 %v288
        %v2289 = vunpack.c.l.b16 %v289
        %v2290 = vunpack.c.h.b16 %v289
        %v2291 = vunpack.c.l.b16 %v290
        %v2292 = vunpack.c.h.b16 %v290
        %v2293 = vunpack.c.l.b16 %v291
        %v2294 = vunpack.c.h.b16 %v291
        %v2295 = vunpack.c.l.b16 %v292
        %v2296 = vunpack.c.h.b16 %v292
        %v2297 = vunpack.c.l.b16 %v293
        %v2298 = vunpack.c.h.b16 %v293
        %v2299 = vunpack.c.l.b16 %v294
        %v2300 = vunpack.c.h.b16 %v294
        %v2301 = vunpack.c.l.b16 %v295
        %v2302 = vunpack.c.h.b16 %v295
        %v2303 = vunpack.c.l.b16 %v296
        %v2304 = vunpack.c.h.b16 %v296
        %v2305 = vunpack.c.l.b16 %v297
        %v2306 = vunpack.c.h.b16 %v297
        %v2307 = vunpack.c.l.b16 %v298
        %v2308 = vunpack.c.h.b16 %v298
        %v2309 = vunpack.c.l.b16 %v299
        %v2310 = vunpack.c.h.b16 %v299
        %v2311 = vunpack.c.l.b16 %v300
        %v2312 = vunpack.c.h.b16 %v300
        %v2313 = vunpack.c.l.b16 %v301
        %v2314 = vunpack.c.h.b16 %v301
        %v2315 = vunpack.c.l.b16 %v302
        %v2316 = vunpack.c.h.b16 %v302
        %v2317 = vunpack.c.l.b16 %v303
        %v2318 = vunpack.c.h.b16 %v303
        %v2319 = vunpack.c.l.b16 %v304
        %v2320 = vunpack.c.h.b16 %v304
        %v2321 = vunpack.c.l.b16 %v305
        %v2322 = vunpack.c.h.b16 %v305
        %v2323 = vunpack.c.l.b16 %v306
        %v2324 = vunpack.c.h.b16 %v306
        %v2325 = vunpack.c.l.b16 %v307
        %v2326 = vunpack.c.h.b16 %v307
        %v2327 = vunpack.c.l.b16 %v308
        %v2328 = vunpack.c.h.b16 %v308
        %v2329 = vunpack.c.l.b16 %v309
        %v2330 = vunpack.c.h.b16 %v309
        %v2331 = vunpack.c.l.b16 %v310
        %v2332 = vunpack.c.h.b16 %v310
        %v2333 = vunpack.c.l.b16 %v311
        %v2334 = vunpack.c.h.b16 %v311
        %v2335 = vunpack.c.l.b16 %v312
        %v2336 = vunpack.c.h.b16 %v312
        %v2337 = vunpack.c.l.b16 %v313
        %v2338 = vunpack.c.h.b16 %v313
        %v2339 = vunpack.c.l.b16 %v314
        %v2340 = vunpack.c.h.b16 %v314
        %v2341 = vunpack.c.l.b16 %v315
        %v2342 = vunpack.c.h.b16 %v315
        %v2343 = vunpack.c.l.b16 %v316
        %v2344 = vunpack.c.h.b16 %v316
        %v2345 = vunpack.c.l.b16 %v317
        %v2346 = vunpack.c.h.b16 %v317
        %v2347 = vunpack.c.l.b16 %v318
        %v2348 = vunpack.c.h.b16 %v318
        %v2349 = vunpack.c.l.b16 %v319
        %v2350 = vunpack.c.h.b16 %v319
        %v2351 = vunpack.c.l.b16 %v320
        %v2352 = vunpack.c.h.b16 %v320
        %v2353 = vunpack.c.l.b16 %v321
        %v2354 = vunpack.c.h.b16 %v321
        %v2355 = vunpack.c.l.b16 %v322
        %v2356 = vunpack.c.h.b16 %v322
        %v2357 = vunpack.c.l.b16 %v323
        %v2358 = vunpack.c.h.b16 %v323
        %v2359 = vunpack.c.l.b16 %v324
        %v2360 = vunpack.c.h.b16 %v324
        %v2361 = vunpack.c.l.b16 %v325
        %v2362 = vunpack.c.h.b16 %v325
        %v2363 = vunpack.c.l.b16 %v326
        %v2364 = vunpack.c.h.b16 %v326
        %v2365 = vunpack.c.l.b16 %v327
        %v2366 = vunpack.c.h.b16 %v327
        %v2367 = vunpack.c.l.b16 %v328
        %v2368 = vunpack.c.h.b16 %v328
        %v2369 = vunpack.c.l.b16 %v329
        %v2370 = vunpack.c.h.b16 %v329
        %v2371 = vunpack.c.l.b16 %v330
        %v2372 = vunpack.c.h.b16 %v330
        %v2373 = vunpack.c.l.b16 %v331
        %v2374 = vunpack.c.h.b16 %v331
        %v2375 = vunpack.c.l.b16 %v332
        %v2376 = vunpack.c.h.b16 %v332
        %v2377 = vunpack.c.l.b16 %v333
        %v2378 = vunpack.c.h.b16 %v333
        %v2379 = vunpack.c.l.b16 %v334
        %v2380 = vunpack.c.h.b16 %v334
        %v2381 = vunpack.c.l.b16 %v335
        %v2382 = vunpack.c.h.b16 %v335
        %v2383 = vunpack.c.l.b16 %v336
        %v2384 = vunpack.c.h.b16 %v336
        %v2385 = vunpack.c.l.b16 %v337
        %v2386 = vunpack.c.h.b16 %v337
        %v2387 = vunpack.c.l.b16 %v338
        %v2388 = vunpack.c.h.b16 %v338
        %v2389 = vunpack.c.l.b16 %v339
        %v2390 = vunpack.c.h.b16 %v339
        %v2391 = vunpack.c.l.b16 %v340
        %v2392 = vunpack.c.h.b16 %v340
        %v2393 = vunpack.c.l.b16 %v341
        %v2394 = vunpack.c.h.b16 %v341
        %v2395 = vunpack.c.l.b16 %v342
        %v2396 = vunpack.c.h.b16 %v342
        %v2397 = vunpack.c.l.b16 %v343
        %v2398 = vunpack.c.h.b16 %v343
        %v2399 = vunpack.c.l.b16 %v344
        %v2400 = vunpack.c.h.b16 %v344
        %v2401 = vunpack.c.l.b16 %v345
        %v2402 = vunpack.c.h.b16 %v345
        %v2403 = vunpack.c.l.b16 %v346
        %v2404 = vunpack.c.h.b16 %v346
        %v2405 = vunpack.c.l.b16 %v347
        %v2406 = vunpack.c.h.b16 %v347
        %v2407 = vunpack.c.l.b16 %v348
        %v2408 = vunpack.c.h.b16 %v348
        %v2409 = vunpack.c.l.b16 %v349
        %v2410 = vunpack.c.h.b16 %v349
        %v2411 = vunpack.c.l.b16 %v350
        %v2412 = vunpack.c.h.b16 %v350
        %v2413 = vunpack.c.l.b16 %v351
        %v2414 = vunpack.c.h.b16 %v351
        %v2415 = vunpack.c.l.b16 %v352
        %v2416 = vunpack.c.h.b16 %v352
        %v2417 = vunpack.c.l.b16 %v353
        %v2418 = vunpack.c.h.b16 %v353
        %v2419 = vunpack.c.l.b16 %v354
        %v2420 = vunpack.c.h.b16 %v354
        %v2421 = vunpack.c.l.b16 %v355
        %v2422 = vunpack.c.h.b16 %v355
        %v2423 = vunpack.c.l.b16 %v356
        %v2424 = vunpack.c.h.b16 %v356
        %v2425 = vunpack.c.l.b16 %v357
        %v2426 = vunpack.c.h.b16 %v357
        %v2427 = vunpack.c.l.b16 %v358
        %v2428 = vunpack.c.h.b16 %v358
        %v2429 = vunpack.c.l.b16 %v359
        %v2430 = vunpack.c.h.b16 %v359
        %v2431 = vunpack.c.l.b16 %v360
        %v2432 = vunpack.c.h.b16 %v360
        %v2433 = vunpack.c.l.b16 %v361
        %v2434 = vunpack.c.h.b16 %v361
        %v2435 = vunpack.c.l.b16 %v362
        %v2436 = vunpack.c.h.b16 %v362
        %v2437 = vunpack.c.l.b16 %v363
        %v2438 = vunpack.c.h.b16 %v363
        %v2439 = vunpack.c.l.b16 %v364
        %v2440 = vunpack.c.h.b16 %v364
        %v2441 = vunpack.c.l.b16 %v365
        %v2442 = vunpack.c.h.b16 %v365
        %v2443 = vunpack.c.l.b16 %v366
        %v2444 = vunpack.c.h.b16 %v366
        %v2445 = vunpack.c.l.b16 %v367
        %v2446 = vunpack.c.h.b16 %v367
        %v2447 = vunpack.c.l.b16 %v368
        %v2448 = vunpack.c.h.b16 %v368
        %v2449 = vunpack.c.l.b16 %v369
        %v2450 = vunpack.c.h.b16 %v369
        %v2451 = vunpack.c.l.b16 %v370
        %v2452 = vunpack.c.h.b16 %v370
        %v2453 = vunpack.c.l.b16 %v371
        %v2454 = vunpack.c.h.b16 %v371
        %v2455 = vunpack.c.l.b16 %v372
        %v2456 = vunpack.c.h.b16 %v372
        %v2457 = vunpack.c.l.b16 %v373
        %v2458 = vunpack.c.h.b16 %v373
        %v2459 = vunpack.c.l.b16 %v374
        %v2460 = vunpack.c.h.b16 %v374
        %v2461 = vunpack.c.l.b16 %v375
        %v2462 = vunpack.c.h.b16 %v375
        %v2463 = vunpack.c.l.b16 %v376
        %v2464 = vunpack.c.h.b16 %v376
        %v2465 = vunpack.c.l.b16 %v377
        %v2466 = vunpack.c.h.b16 %v377
        %v2467 = vunpack.c.l.b16 %v378
        %v2468 = vunpack.c.h.b16 %v378
        %v2469 = vunpack.c.l.b16 %v379
        %v2470 = vunpack.c.h.b16 %v379
        %v2471 = vunpack.c.l.b16 %v380
        %v2472 = vunpack.c.h.b16 %v380
        %v2473 = vunpack.c.l.b16 %v381
        %v2474 = vunpack.c.h.b16 %v381
        %v2475 = vunpack.c.l.b16 %v382
        %v2476 = vunpack.c.h.b16 %v382
        %v2477 = vunpack.c.l.b16 %v383
        %v2478 = vunpack.c.h.b16 %v383
        %v2479 = vunpack.c.l.b16 %v384
        %v2480 = vunpack.c.h.b16 %v384
        %v2481 = vunpack.c.l.b16 %v385
        %v2482 = vunpack.c.h.b16 %v385
        %v2483 = vunpack.c.l.b16 %v386
        %v2484 = vunpack.c.h.b16 %v386
        %v2485 = vunpack.c.l.b16 %v387
        %v2486 = vunpack.c.h.b16 %v387
        %v2487 = vunpack.c.l.b16 %v388
        %v2488 = vunpack.c.h.b16 %v388
        %v2489 = vunpack.c.l.b16 %v389
        %v2490 = vunpack.c.h.b16 %v389
        %v2491 = vunpack.c.l.b16 %v390
        %v2492 = vunpack.c.h.b16 %v390
        %v2493 = vunpack.c.l.b16 %v391
        %v2494 = vunpack.c.h.b16 %v391
        %v2495 = vunpack.c.l.b16 %v392
        %v2496 = vunpack.c.h.b16 %v392
        %v2497 = vunpack.c.l.b16 %v393
        %v2498 = vunpack.c.h.b16 %v393
        %v2499 = vunpack.c.l.b16 %v394
        %v2500 = vunpack.c.h.b16 %v394
        %v2501 = vunpack.c.l.b16 %v395
        %v2502 = vunpack.c.h.b16 %v395
        %v2503 = vunpack.c.l.b16 %v396
        %v2504 = vunpack.c.h.b16 %v396
        %v2505 = vunpack.c.l.b16 %v397
        %v2506 = vunpack.c.h.b16 %v397
        %v2507 = vunpack.c.l.b16 %v398
        %v2508 = vunpack.c.h.b16 %v398
        %v2509 = vunpack.c.l.b16 %v399
        %v2510 = vunpack.c.h.b16 %v399
        %v2511 = vunpack.c.l.b16 %v400
        %v2512 = vunpack.c.h.b16 %v400
        %v2513 = vunpack.c.l.b16 %v401
        %v2514 = vunpack.c.h.b16 %v401
        %v2515 = vunpack.c.l.b16 %v402
        %v2516 = vunpack.c.h.b16 %v402
        %v2517 = vunpack.c.l.b16 %v403
        %v2518 = vunpack.c.h.b16 %v403
        %v2519 = vunpack.c.l.b16 %v404
        %v2520 = vunpack.c.h.b16 %v404
        %v2521 = vunpack.c.l.b16 %v405
        %v2522 = vunpack.c.h.b16 %v405
        %v2523 = vunpack.c.l.b16 %v406
        %v2524 = vunpack.c.h.b16 %v406
        %v2525 = vunpack.c.l.b16 %v407
        %v2526 = vunpack.c.h.b16 %v407
        %v2527 = vunpack.c.l.b16 %v408
        %v2528 = vunpack.c.h.b16 %v408
        %v2529 = vunpack.c.l.b16 %v409
        %v2530 = vunpack.c.h.b16 %v409
        %v2531 = vunpack.c.l.b16 %v410
        %v2532 = vunpack.c.h.b16 %v410
        %v2533 = vunpack.c.l.b16 %v411
        %v2534 = vunpack.c.h.b16 %v411
        %v2535 = vunpack.c.l.b16 %v412
        %v2536 = vunpack.c.h.b16 %v412
        %v2537 = vunpack.c.l.b16 %v413
        %v2538 = vunpack.c.h.b16 %v413
        %v2539 = vunpack.c.l.b16 %v414
        %v2540 = vunpack.c.h.b16 %v414
        %v2541 = vunpack.c.l.b16 %v415
        %v2542 = vunpack.c.h.b16 %v415
        %v2543 = vunpack.c.l.b16 %v416
        %v2544 = vunpack.c.h.b16 %v416
        %v2545 = vunpack.c.l.b16 %v417
        %v2546 = vunpack.c.h.b16 %v417
        %v2547 = vunpack.c.l.b16 %v418
        %v2548 = vunpack.c.h.b16 %v418
        %v2549 = vunpack.c.l.b16 %v419
        %v2550 = vunpack.c.h.b16 %v419
        %v2551 = vunpack.c.l.b16 %v420
        %v2552 = vunpack.c.h.b16 %v420
        %v2553 = vunpack.c.l.b16 %v421
        %v2554 = vunpack.c.h.b16 %v421
        %v2555 = vunpack.c.l.b16 %v422
        %v2556 = vunpack.c.h.b16 %v422
        %v2557 = vunpack.c.l.b16 %v423
        %v2558 = vunpack.c.h.b16 %v423
        %v2559 = vunpack.c.l.b16 %v424
        %v2560 = vunpack.c.h.b16 %v424
        %v2561 = vunpack.c.l.b16 %v425
        %v2562 = vunpack.c.h.b16 %v425
        %v2563 = vunpack.c.l.b16 %v426
        %v2564 = vunpack.c.h.b16 %v426
        %v2565 = vunpack.c.l.b16 %v427
        %v2566 = vunpack.c.h.b16 %v427
        %v2567 = vunpack.c.l.b16 %v428
        %v2568 = vunpack.c.h.b16 %v428
        %v2569 = vunpack.c.l.b16 %v429
        %v2570 = vunpack.c.h.b16 %v429
        %v2571 = vunpack.c.l.b16 %v430
        %v2572 = vunpack.c.h.b16 %v430
        %v2573 = vunpack.c.l.b16 %v431
        %v2574 = vunpack.c.h.b16 %v431
        %v2575 = vunpack.c.l.b16 %v432
        %v2576 = vunpack.c.h.b16 %v432
        %v2577 = vunpack.c.l.b16 %v433
        %v2578 = vunpack.c.h.b16 %v433
        %v2579 = vunpack.c.l.b16 %v434
        %v2580 = vunpack.c.h.b16 %v434
        %v2581 = vunpack.c.l.b16 %v435
        %v2582 = vunpack.c.h.b16 %v435
        %v2583 = vunpack.c.l.b16 %v436
        %v2584 = vunpack.c.h.b16 %v436
        %v2585 = vunpack.c.l.b16 %v437
        %v2586 = vunpack.c.h.b16 %v437
        %v2587 = vunpack.c.l.b16 %v438
        %v2588 = vunpack.c.h.b16 %v438
        %v2589 = vunpack.c.l.b16 %v439
        %v2590 = vunpack.c.h.b16 %v439
        %v2591 = vunpack.c.l.b16 %v440
        %v2592 = vunpack.c.h.b16 %v440
        %v2593 = vunpack.c.l.b16 %v441
        %v2594 = vunpack.c.h.b16 %v441
        %v2595 = vunpack.c.l.b16 %v442
        %v2596 = vunpack.c.h.b16 %v442
        %v2597 = vunpack.c.l.b16 %v443
        %v2598 = vunpack.c.h.b16 %v443
        %v2599 = vunpack.c.l.b16 %v444
        %v2600 = vunpack.c.h.b16 %v444
        %v2601 = vunpack.c.l.b16 %v445
        %v2602 = vunpack.c.h.b16 %v445
        %v2603 = vunpack.c.l.b16 %v446
        %v2604 = vunpack.c.h.b16 %v446
        %v2605 = vunpack.c.l.b16 %v447
        %v2606 = vunpack.c.h.b16 %v447
        %v2607 = vunpack.c.l.b16 %v448
        %v2608 = vunpack.c.h.b16 %v448
        %v2609 = vunpack.c.l.b16 %v449
        %v2610 = vunpack.c.h.b16 %v449
        %v2611 = vunpack.c.l.b16 %v450
        %v2612 = vunpack.c.h.b16 %v450
        %v2613 = vunpack.c.l.b16 %v451
        %v2614 = vunpack.c.h.b16 %v451
        %v2615 = vunpack.c.l.b16 %v452
        %v2616 = vunpack.c.h.b16 %v452
        %v2617 = vunpack.c.l.b16 %v453
        %v2618 = vunpack.c.h.b16 %v453
        %v2619 = vunpack.c.l.b16 %v454
        %v2620 = vunpack.c.h.b16 %v454
        %v2621 = vunpack.c.l.b16 %v455
        %v2622 = vunpack.c.h.b16 %v455
        %v2623 = vunpack.c.l.b16 %v456
        %v2624 = vunpack.c.h.b16 %v456
        %v2625 = vunpack.c.l.b16 %v457
        %v2626 = vunpack.c.h.b16 %v457
        %v2627 = vunpack.c.l.b16 %v458
        %v2628 = vunpack.c.h.b16 %v458
        %v2629 = vunpack.c.l.b16 %v459
        %v2630 = vunpack.c.h.b16 %v459
        %v2631 = vunpack.c.l.b16 %v460
        %v2632 = vunpack.c.h.b16 %v460
        %v2633 = vunpack.c.l.b16 %v461
        %v2634 = vunpack.c.h.b16 %v461
        %v2635 = vunpack.c.l.b16 %v462
        %v2636 = vunpack.c.h.b16 %v462
        %v2637 = vunpack.c.l.b16 %v463
        %v2638 = vunpack.c.h.b16 %v463
        %v2639 = vunpack.c.l.b16 %v464
        %v2640 = vunpack.c.h.b16 %v464
        %v2641 = vunpack.c.l.b16 %v465
        %v2642 = vunpack.c.h.b16 %v465
        %v2643 = vunpack.c.l.b16 %v466
        %v2644 = vunpack.c.h.b16 %v466
        %v2645 = vunpack.c.l.b16 %v467
        %v2646 = vunpack.c.h.b16 %v467
        %v2647 = vunpack.c.l.b16 %v468
        %v2648 = vunpack.c.h.b16 %v468
        %v2649 = vunpack.c.l.b16 %v469
        %v2650 = vunpack.c.h.b16 %v469
        %v2651 = vunpack.c.l.b16 %v470
        %v2652 = vunpack.c.h.b16 %v470
        %v2653 = vunpack.c.l.b16 %v471
        %v2654 = vunpack.c.h.b16 %v471
        %v2655 = vunpack.c.l.b16 %v472
        %v2656 = vunpack.c.h.b16 %v472
        %v2657 = vunpack.c.l.b16 %v473
        %v2658 = vunpack.c.h.b16 %v473
        %v2659 = vunpack.c.l.b16 %v474
        %v2660 = vunpack.c.h.b16 %v474
        %v2661 = vunpack.c.l.b16 %v475
        %v2662 = vunpack.c.h.b16 %v475
        %v2663 = vunpack.c.l.b16 %v476
        %v2664 = vunpack.c.h.b16 %v476
        %v2665 = vunpack.c.l.b16 %v477
        %v2666 = vunpack.c.h.b16 %v477
        %v2667 = vunpack.c.l.b16 %v478
        %v2668 = vunpack.c.h.b16 %v478
        %v2669 = vunpack.c.l.b16 %v479
        %v2670 = vunpack.c.h.b16 %v479
        %v2671 = vunpack.c.l.b16 %v480
        %v2672 = vunpack.c.h.b16 %v480
        %v2673 = vunpack.c.l.b16 %v481
        %v2674 = vunpack.c.h.b16 %v481
        %v2675 = vunpack.c.l.b16 %v482
        %v2676 = vunpack.c.h.b16 %v482
        %v2677 = vunpack.c.l.b16 %v483
        %v2678 = vunpack.c.h.b16 %v483
        %v2679 = vunpack.c.l.b16 %v484
        %v2680 = vunpack.c.h.b16 %v484
        %v2681 = vunpack.c.l.b16 %v485
        %v2682 = vunpack.c.h.b16 %v485
        %v2683 = vunpack.c.l.b16 %v486
        %v2684 = vunpack.c.h.b16 %v486
        %v2685 = vunpack.c.l.b16 %v487
        %v2686 = vunpack.c.h.b16 %v487
        %v2687 = vunpack.c.l.b16 %v488
        %v2688 = vunpack.c.h.b16 %v488
        %v2689 = vunpack.c.l.b16 %v489
        %v2690 = vunpack.c.h.b16 %v489
        %v2691 = vunpack.c.l.b16 %v490
        %v2692 = vunpack.c.h.b16 %v490
        %v2693 = vunpack.c.l.b16 %v491
        %v2694 = vunpack.c.h.b16 %v491
        %v2695 = vunpack.c.l.b16 %v492
        %v2696 = vunpack.c.h.b16 %v492
        %v2697 = vunpack.c.l.b16 %v493
        %v2698 = vunpack.c.h.b16 %v493
        %v2699 = vunpack.c.l.b16 %v494
        %v2700 = vunpack.c.h.b16 %v494
        %v2701 = vunpack.c.l.b16 %v495
        %v2702 = vunpack.c.h.b16 %v495
        %v2703 = vunpack.c.l.b16 %v496
        %v2704 = vunpack.c.h.b16 %v496
        %v2705 = vunpack.c.l.b16 %v497
        %v2706 = vunpack.c.h.b16 %v497
        %v2707 = vunpack.c.l.b16 %v498
        %v2708 = vunpack.c.h.b16 %v498
        %v2709 = vunpack.c.l.b16 %v499
        %v2710 = vunpack.c.h.b16 %v499
        %v2711 = vunpack.c.l.b16 %v500
        %v2712 = vunpack.c.h.b16 %v500
        %v2713 = vunpack.c.l.b16 %v501
        %v2714 = vunpack.c.h.b16 %v501
        %v2715 = vunpack.c.l.b16 %v502
        %v2716 = vunpack.c.h.b16 %v502
        %v2717 = vunpack.c.l.b16 %v503
        %v2718 = vunpack.c.h.b16 %v503
        %v2719 = vunpack.c.l.b16 %v504
        %v2720 = vunpack.c.h.b16 %v504
        %v2721 = vunpack.c.l.b16 %v505
        %v2722 = vunpack.c.h.b16 %v505
        %v2723 = vunpack.c.l.b16 %v506
        %v2724 = vunpack.c.h.b16 %v506
        %v2725 = vunpack.c.l.b16 %v507
        %v2726 = vunpack.c.h.b16 %v507
        %v2727 = vunpack.c.l.b16 %v508
        %v2728 = vunpack.c.h.b16 %v508
        %v2729 = vunpack.c.l.b16 %v509
        %v2730 = vunpack.c.h.b16 %v509
        %v2731 = vunpack.c.l.b16 %v510
        %v2732 = vunpack.c.h.b16 %v510
        %v2733 = vunpack.c.l.b16 %v511
        %v2734 = vunpack.c.h.b16 %v511
        %v2735 = vunpack.c.l.b16 %v512
        %v2736 = vunpack.c.h.b16 %v512
        %v2737 = vunpack.c.l.b16 %v513
        %v2738 = vunpack.c.h.b16 %v513
        %v2739 = vunpack.c.l.b16 %v514
        %v2740 = vunpack.c.h.b16 %v514
        %v2741 = vunpack.c.l.b16 %v515
        %v2742 = vunpack.c.h.b16 %v515
        %v2743 = vunpack.c.l.b16 %v516
        %v2744 = vunpack.c.h.b16 %v516
        %v2745 = vunpack.c.l.b16 %v517
        %v2746 = vunpack.c.h.b16 %v517
        %v2747 = vunpack.c.l.b16 %v518
        %v2748 = vunpack.c.h.b16 %v518
        %v2749 = vunpack.c.l.b16 %v519
        %v2750 = vunpack.c.h.b16 %v519
        %v2751 = vunpack.c.l.b16 %v520
        %v2752 = vunpack.c.h.b16 %v520
        %v2753 = vunpack.c.l.b16 %v521
        %v2754 = vunpack.c.h.b16 %v521
        %v2755 = vunpack.c.l.b16 %v522
        %v2756 = vunpack.c.h.b16 %v522
        %v2757 = vunpack.c.l.b16 %v523
        %v2758 = vunpack.c.h.b16 %v523
        %v2759 = vunpack.c.l.b16 %v524
        %v2760 = vunpack.c.h.b16 %v524
        %v2761 = vunpack.c.l.b16 %v525
        %v2762 = vunpack.c.h.b16 %v525
        %v2763 = vunpack.c.l.b16 %v526
        %v2764 = vunpack.c.h.b16 %v526
        %v2765 = vunpack.c.l.b16 %v527
        %v2766 = vunpack.c.h.b16 %v527
        %v2767 = vunpack.c.l.b16 %v528
        %v2768 = vunpack.c.h.b16 %v528
        %v2769 = vunpack.c.l.b16 %v529
        %v2770 = vunpack.c.h.b16 %v529
        %v2771 = vunpack.c.l.b16 %v530
        %v2772 = vunpack.c.h.b16 %v530
        %v2773 = vunpack.c.l.b16 %v531
        %v2774 = vunpack.c.h.b16 %v531
        %v2775 = vunpack.c.l.b16 %v532
        %v2776 = vunpack.c.h.b16 %v532
        %v2777 = vunpack.c.l.b16 %v533
        %v2778 = vunpack.c.h.b16 %v533
        %v2779 = vunpack.c.l.b16 %v534
        %v2780 = vunpack.c.h.b16 %v534
        %v2781 = vunpack.c.l.b16 %v535
        %v2782 = vunpack.c.h.b16 %v535
        %v2783 = vunpack.c.l.b16 %v536
        %v2784 = vunpack.c.h.b16 %v536
        %v2785 = vunpack.c.l.b16 %v537
        %v2786 = vunpack.c.h.b16 %v537
        %v2787 = vunpack.c.l.b16 %v538
        %v2788 = vunpack.c.h.b16 %v538
        %v2789 = vunpack.c.l.b16 %v539
        %v2790 = vunpack.c.h.b16 %v539
        %v2791 = vunpack.c.l.b16 %v540
        %v2792 = vunpack.c.h.b16 %v540
        %v2793 = vunpack.c.l.b16 %v541
        %v2794 = vunpack.c.h.b16 %v541
        %v2795 = vunpack.c.l.b16 %v542
        %v2796 = vunpack.c.h.b16 %v542
        %v2797 = vunpack.c.l.b16 %v543
        %v2798 = vunpack.c.h.b16 %v543
        %v2799 = vunpack.c.l.b16 %v544
        %v2800 = vunpack.c.h.b16 %v544
        %v2801 = vunpack.c.l.b16 %v545
        %v2802 = vunpack.c.h.b16 %v545
        %v2803 = vunpack.c.l.b16 %v546
        %v2804 = vunpack.c.h.b16 %v546
        %v2805 = vunpack.c.l.b16 %v547
        %v2806 = vunpack.c.h.b16 %v547
        %v2807 = vunpack.c.l.b16 %v548
        %v2808 = vunpack.c.h.b16 %v548
        %v2809 = vunpack.c.l.b16 %v549
        %v2810 = vunpack.c.h.b16 %v549
        %v2811 = vunpack.c.l.b16 %v550
        %v2812 = vunpack.c.h.b16 %v550
        %v2813 = vunpack.c.l.b16 %v551
        %v2814 = vunpack.c.h.b16 %v551
        %v2815 = vunpack.c.l.b16 %v552
        %v2816 = vunpack.c.h.b16 %v552
        %v2817 = vunpack.c.l.b16 %v553
        %v2818 = vunpack.c.h.b16 %v553
        %v2819 = vunpack.c.l.b16 %v554
        %v2820 = vunpack.c.h.b16 %v554
        %v2821 = vunpack.c.l.b16 %v555
        %v2822 = vunpack.c.h.b16 %v555
        %v2823 = vunpack.c.l.b16 %v556
        %v2824 = vunpack.c.h.b16 %v556
        %v2825 = vunpack.c.l.b16 %v557
        %v2826 = vunpack.c.h.b16 %v557
        %v2827 = vunpack.c.l.b16 %v558
        %v2828 = vunpack.c.h.b16 %v558
        %v2829 = vunpack.c.l.b16 %v559
        %v2830 = vunpack.c.h.b16 %v559
        %v2831 = vunpack.c.l.b16 %v560
        %v2832 = vunpack.c.h.b16 %v560
        %v2833 = vunpack.c.l.b16 %v561
        %v2834 = vunpack.c.h.b16 %v561
        %v2835 = vunpack.c.l.b16 %v562
        %v2836 = vunpack.c.h.b16 %v562
        %v2837 = vunpack.c.l.b16 %v563
        %v2838 = vunpack.c.h.b16 %v563
        %v2839 = vunpack.c.l.b16 %v564
        %v2840 = vunpack.c.h.b16 %v564
        %v2841 = vunpack.c.l.b16 %v565
        %v2842 = vunpack.c.h.b16 %v565
        %v2843 = vunpack.c.l.b16 %v566
        %v2844 = vunpack.c.h.b16 %v566
        %v2845 = vunpack.c.l.b16 %v567
        %v2846 = vunpack.c.h.b16 %v567
        %v2847 = vunpack.c.l.b16 %v568
        %v2848 = vunpack.c.h.b16 %v568
        %v2849 = vunpack.c.l.b16 %v569
        %v2850 = vunpack.c.h.b16 %v569
        %v2851 = vunpack.c.l.b16 %v570
        %v2852 = vunpack.c.h.b16 %v570
        %v2853 = vunpack.c.l.b16 %v571
        %v2854 = vunpack.c.h.b16 %v571
        %v2855 = vunpack.c.l.b16 %v572
        %v2856 = vunpack.c.h.b16 %v572
        %v2857 = vunpack.c.l.b16 %v573
        %v2858 = vunpack.c.h.b16 %v573
        %v2859 = vunpack.c.l.b16 %v574
        %v2860 = vunpack.c.h.b16 %v574
        %v2861 = vunpack.c.l.b16 %v575
        %v2862 = vunpack.c.h.b16 %v575
        %v2863 = vunpack.c.l.b16 %v576
        %v2864 = vunpack.c.h.b16 %v576
        %v2865 = vunpack.c.l.b16 %v577
        %v2866 = vunpack.c.h.b16 %v577
        %v2867 = vunpack.c.l.b16 %v578
        %v2868 = vunpack.c.h.b16 %v578
        %v2869 = vunpack.c.l.b16 %v579
        %v2870 = vunpack.c.h.b16 %v579
        %v2871 = vunpack.c.l.b16 %v580
        %v2872 = vunpack.c.h.b16 %v580
        %v2873 = vunpack.c.l.b16 %v581
        %v2874 = vunpack.c.h.b16 %v581
        %v2875 = vunpack.c.l.b16 %v582
        %v2876 = vunpack.c.h.b16 %v582
        %v2877 = vunpack.c.l.b16 %v583
        %v2878 = vunpack.c.h.b16 %v583
        %v2879 = vunpack.c.l.b16 %v584
        %v2880 = vunpack.c.h.b16 %v584
        %v2881 = vunpack.c.l.b16 %v585
        %v2882 = vunpack.c.h.b16 %v585
        %v2883 = vunpack.c.l.b16 %v586
        %v2884 = vunpack.c.h.b16 %v586
        %v2885 = vunpack.c.l.b16 %v587
        %v2886 = vunpack.c.h.b16 %v587
        %v2887 = vunpack.c.l.b16 %v588
        %v2888 = vunpack.c.h.b16 %v588
        %v2889 = vunpack.c.l.b16 %v589
        %v2890 = vunpack.c.h.b16 %v589
        %v2891 = vunpack.c.l.b16 %v590
        %v2892 = vunpack.c.h.b16 %v590
        %v2893 = vunpack.c.l.b16 %v591
        %v2894 = vunpack.c.h.b16 %v591
        %v2895 = vunpack.c.l.b16 %v592
        %v2896 = vunpack.c.h.b16 %v592
        %v2897 = vunpack.c.l.b16 %v593
        %v2898 = vunpack.c.h.b16 %v593
        %v2899 = vunpack.c.l.b16 %v594
        %v2900 = vunpack.c.h.b16 %v594
        %v2901 = vunpack.c.l.b16 %v595
        %v2902 = vunpack.c.h.b16 %v595
        %v2903 = vunpack.c.l.b16 %v596
        %v2904 = vunpack.c.h.b16 %v596
        %v2905 = vunpack.c.l.b16 %v597
        %v2906 = vunpack.c.h.b16 %v597
        %v2907 = vunpack.c.l.b16 %v598
        %v2908 = vunpack.c.h.b16 %v598
        %v2909 = vunpack.c.l.b16 %v599
        %v2910 = vunpack.c.h.b16 %v599
        %v2911 = vunpack.c.l.b16 %v600
        %v2912 = vunpack.c.h.b16 %v600
        %v2913 = vunpack.c.l.b16 %v601
        %v2914 = vunpack.c.h.b16 %v601
        %v2915 = vunpack.c.l.b16 %v602
        %v2916 = vunpack.c.h.b16 %v602
        %v2917 = vunpack.c.l.b16 %v603
        %v2918 = vunpack.c.h.b16 %v603
        %v2919 = vunpack.c.l.b16 %v604
        %v2920 = vunpack.c.h.b16 %v604
        %v2921 = vunpack.c.l.b16 %v605
        %v2922 = vunpack.c.h.b16 %v605
        %v2923 = vunpack.c.l.b16 %v606
        %v2924 = vunpack.c.h.b16 %v606
        %v2925 = vunpack.c.l.b16 %v607
        %v2926 = vunpack.c.h.b16 %v607
        %v2927 = vunpack.c.l.b16 %v608
        %v2928 = vunpack.c.h.b16 %v608
        %v2929 = vunpack.c.l.b16 %v609
        %v2930 = vunpack.c.h.b16 %v609
        %v2931 = vunpack.c.l.b16 %v610
        %v2932 = vunpack.c.h.b16 %v610
        %v2933 = vunpack.c.l.b16 %v611
        %v2934 = vunpack.c.h.b16 %v611
        %v2935 = vunpack.c.l.b16 %v612
        %v2936 = vunpack.c.h.b16 %v612
        %v2937 = vunpack.c.l.b16 %v613
        %v2938 = vunpack.c.h.b16 %v613
        %v2939 = vunpack.c.l.b16 %v614
        %v2940 = vunpack.c.h.b16 %v614
        %v2941 = vunpack.c.l.b16 %v615
        %v2942 = vunpack.c.h.b16 %v615
        %v2943 = vunpack.c.l.b16 %v616
        %v2944 = vunpack.c.h.b16 %v616
        %v2945 = vunpack.c.l.b16 %v617
        %v2946 = vunpack.c.h.b16 %v617
        %v2947 = vunpack.c.l.b16 %v618
        %v2948 = vunpack.c.h.b16 %v618
        %v2949 = vunpack.c.l.b16 %v619
        %v2950 = vunpack.c.h.b16 %v619
        %v2951 = vunpack.c.l.b16 %v620
        %v2952 = vunpack.c.h.b16 %v620
        %v2953 = vunpack.c.l.b16 %v621
        %v2954 = vunpack.c.h.b16 %v621
        %v2955 = vunpack.c.l.b16 %v622
        %v2956 = vunpack.c.h.b16 %v622
        %v2957 = vunpack.c.l.b16 %v623
        %v2958 = vunpack.c.h.b16 %v623
        %v2959 = vunpack.c.l.b16 %v624
        %v2960 = vunpack.c.h.b16 %v624
        %v2961 = vunpack.c.l.b16 %v625
        %v2962 = vunpack.c.h.b16 %v625
        %v2963 = vunpack.c.l.b16 %v626
        %v2964 = vunpack.c.h.b16 %v626
        %v2965 = vunpack.c.l.b16 %v627
        %v2966 = vunpack.c.h.b16 %v627
        %v2967 = vunpack.c.l.b16 %v628
        %v2968 = vunpack.c.h.b16 %v628
        %v2969 = vunpack.c.l.b16 %v629
        %v2970 = vunpack.c.h.b16 %v629
        %v2971 = vunpack.c.l.b16 %v630
        %v2972 = vunpack.c.h.b16 %v630
        %v2973 = vunpack.c.l.b16 %v631
        %v2974 = vunpack.c.h.b16 %v631
        %v2975 = vunpack.c.l.b16 %v632
        %v2976 = vunpack.c.h.b16 %v632
        %v2977 = vunpack.c.l.b16 %v633
        %v2978 = vunpack.c.h.b16 %v633
        %v2979 = vunpack.c.l.b16 %v634
        %v2980 = vunpack.c.h.b16 %v634
        %v2981 = vunpack.c.l.b16 %v635
        %v2982 = vunpack.c.h.b16 %v635
        %v2983 = vunpack.c.l.b16 %v636
        %v2984 = vunpack.c.h.b16 %v636
        %v2985 = vunpack.c.l.b16 %v637
        %v2986 = vunpack.c.h.b16 %v637
        %v2987 = vunpack.c.l.b16 %v638
        %v2988 = vunpack.c.h.b16 %v638
        %v2989 = vunpack.c.l.b16 %v639
        %v2990 = vunpack.c.h.b16 %v639
        %v2991 = vunpack.c.l.b16 %v640
        %v2992 = vunpack.c.h.b16 %v640
        %v2993 = vunpack.c.l.b16 %v641
        %v2994 = vunpack.c.h.b16 %v641
        %v2995 = vunpack.c.l.b16 %v642
        %v2996 = vunpack.c.h.b16 %v642
        %v2997 = vunpack.c.l.b16 %v643
        %v2998 = vunpack.c.h.b16 %v643
        %v2999 = vunpack.c.l.b16 %v644
        %v3000 = vunpack.c.h.b16 %v644
        %v3001 = vunpack.c.l.b16 %v645
        %v3002 = vunpack.c.h.b16 %v645
        %v3003 = vunpack.c.l.b16 %v646
        %v3004 = vunpack.c.h.b16 %v646
        %v3005 = vunpack.c.l.b16 %v647
        %v3006 = vunpack.c.h.b16 %v647
        %v3007 = vunpack.c.l.b16 %v648
        %v3008 = vunpack.c.h.b16 %v648
        %v3009 = vunpack.c.l.b16 %v649
        %v3010 = vunpack.c.h.b16 %v649
        %v3011 = vunpack.c.l.b16 %v650
        %v3012 = vunpack.c.h.b16 %v650
        %v3013 = vunpack.c.l.b16 %v651
        %v3014 = vunpack.c.h.b16 %v651
        %v3015 = vunpack.c.l.b16 %v652
        %v3016 = vunpack.c.h.b16 %v652
        %v3017 = vunpack.c.l.b16 %v653
        %v3018 = vunpack.c.h.b16 %v653
        %v3019 = vunpack.c.l.b16 %v654
        %v3020 = vunpack.c.h.b16 %v654
        %v3021 = vunpack.c.l.b16 %v655
        %v3022 = vunpack.c.h.b16 %v655
        %v3023 = vunpack.c.l.b16 %v656
        %v3024 = vunpack.c.h.b16 %v656
        %v3025 = vunpack.c.l.b16 %v657
        %v3026 = vunpack.c.h.b16 %v657
        %v3027 = vunpack.c.l.b16 %v658
        %v3028 = vunpack.c.h.b16 %v658
        %v3029 = vunpack.c.l.b16 %v659
        %v3030 = vunpack.c.h.b16 %v659
        %v3031 = vunpack.c.l.b16 %v660
        %v3032 = vunpack.c.h.b16 %v660
        %v3033 = vunpack.c.l.b16 %v661
        %v3034 = vunpack.c.h.b16 %v661
        %v3035 = vunpack.c.l.b16 %v662
        %v3036 = vunpack.c.h.b16 %v662
        %v3037 = vunpack.c.l.b16 %v663
        %v3038 = vunpack.c.h.b16 %v663
        %v3039 = vunpack.c.l.b16 %v664
        %v3040 = vunpack.c.h.b16 %v664
        %v3041 = vunpack.c.l.b16 %v665
        %v3042 = vunpack.c.h.b16 %v665
        %v3043 = vunpack.c.l.b16 %v666
        %v3044 = vunpack.c.h.b16 %v666
        %v3045 = vunpack.c.l.b16 %v667
        %v3046 = vunpack.c.h.b16 %v667
        %v3047 = vunpack.c.l.b16 %v668
        %v3048 = vunpack.c.h.b16 %v668
        %v3049 = vunpack.c.l.b16 %v669
        %v3050 = vunpack.c.h.b16 %v669
        %v3051 = vunpack.c.l.b16 %v670
        %v3052 = vunpack.c.h.b16 %v670
        %v3053 = vunpack.c.l.b16 %v671
        %v3054 = vunpack.c.h.b16 %v671
        %v3055 = vunpack.c.l.b16 %v672
        %v3056 = vunpack.c.h.b16 %v672
        %v3057 = vunpack.c.l.b16 %v673
        %v3058 = vunpack.c.h.b16 %v673
        %v3059 = vunpack.c.l.b16 %v674
        %v3060 = vunpack.c.h.b16 %v674
        %v3061 = vunpack.c.l.b16 %v675
        %v3062 = vunpack.c.h.b16 %v675
        %v3063 = vunpack.c.l.b16 %v676
        %v3064 = vunpack.c.h.b16 %v676
        %v3065 = vunpack.c.l.b16 %v677
        %v3066 = vunpack.c.h.b16 %v677
        %v3067 = vunpack.c.l.b16 %v678
        %v3068 = vunpack.c.h.b16 %v678
        %v3069 = vunpack.c.l.b16 %v679
        %v3070 = vunpack.c.h.b16 %v679
        %v3071 = vunpack.c.l.b16 %v680
        %v3072 = vunpack.c.h.b16 %v680
        %v3073 = vunpack.c.l.b16 %v681
        %v3074 = vunpack.c.h.b16 %v681
        %v3075 = vunpack.c.l.b16 %v682
        %v3076 = vunpack.c.h.b16 %v682
        %v3077 = vunpack.c.l.b16 %v683
        %v3078 = vunpack.c.h.b16 %v683
        %v3079 = vunpack.c.l.b16 %v684
        %v3080 = vunpack.c.h.b16 %v684
        %v3081 = vunpack.c.l.b16 %v685
        %v3082 = vunpack.c.h.b16 %v685
        %v3083 = vunpack.c.l.b16 %v686
        %v3084 = vunpack.c.h.b16 %v686
        %v3085 = vunpack.c.l.b16 %v687
        %v3086 = vunpack.c.h.b16 %v687
        %v3087 = vunpack.c.l.b16 %v688
        %v3088 = vunpack.c.h.b16 %v688
        %v3089 = vunpack.c.l.b16 %v689
        %v3090 = vunpack.c.h.b16 %v689
        %v3091 = vunpack.c.l.b16 %v690
        %v3092 = vunpack.c.h.b16 %v690
        %v3093 = vunpack.c.l.b16 %v691
        %v3094 = vunpack.c.h.b16 %v691
        %v3095 = vunpack.c.l.b16 %v692
        %v3096 = vunpack.c.h.b16 %v692
        %v3097 = vunpack.c.l.b16 %v693
        %v3098 = vunpack.c.h.b16 %v693
        %v3099 = vunpack.c.l.b16 %v694
        %v3100 = vunpack.c.h.b16 %v694
        %v3101 = vunpack.c.l.b16 %v695
        %v3102 = vunpack.c.h.b16 %v695
        %v3103 = vunpack.c.l.b16 %v696
        %v3104 = vunpack.c.h.b16 %v696
        %v3105 = vunpack.c.l.b16 %v697
        %v3106 = vunpack.c.h.b16 %v697
        %v3107 = vunpack.c.l.b16 %v698
        %v3108 = vunpack.c.h.b16 %v698
        %v3109 = vunpack.c.l.b16 %v699
        %v3110 = vunpack.c.h.b16 %v699
        %v3111 = vunpack.c.l.b16 %v700
        %v3112 = vunpack.c.h.b16 %v700
        %v3113 = vunpack.c.l.b16 %v701
        %v3114 = vunpack.c.h.b16 %v701
        %v3115 = vunpack.c.l.b16 %v702
        %v3116 = vunpack.c.h.b16 %v702
        %v3117 = vunpack.c.l.b16 %v703
        %v3118 = vunpack.c.h.b16 %v703
        %v3119 = vunpack.c.l.b16 %v704
        %v3120 = vunpack.c.h.b16 %v704
        %v3121 = vunpack.c.l.b16 %v705
        %v3122 = vunpack.c.h.b16 %v705
        %v3123 = vunpack.c.l.b16 %v706
        %v3124 = vunpack.c.h.b16 %v706
        %v3125 = vunpack.c.l.b16 %v707
        %v3126 = vunpack.c.h.b16 %v707
        %v3127 = vunpack.c.l.b16 %v708
        %v3128 = vunpack.c.h.b16 %v708
        %v3129 = vunpack.c.l.b16 %v709
        %v3130 = vunpack.c.h.b16 %v709
        %v3131 = vunpack.c.l.b16 %v710
        %v3132 = vunpack.c.h.b16 %v710
        %v3133 = vunpack.c.l.b16 %v711
        %v3134 = vunpack.c.h.b16 %v711
        %v3135 = vunpack.c.l.b16 %v712
        %v3136 = vunpack.c.h.b16 %v712
        %v3137 = vunpack.c.l.b16 %v713
        %v3138 = vunpack.c.h.b16 %v713
        %v3139 = vunpack.c.l.b16 %v714
        %v3140 = vunpack.c.h.b16 %v714
        %v3141 = vunpack.c.l.b16 %v715
        %v3142 = vunpack.c.h.b16 %v715
        %v3143 = vunpack.c.l.b16 %v716
        %v3144 = vunpack.c.h.b16 %v716
        %v3145 = vunpack.c.l.b16 %v717
        %v3146 = vunpack.c.h.b16 %v717
        %v3147 = vunpack.c.l.b16 %v718
        %v3148 = vunpack.c.h.b16 %v718
        %v3149 = vunpack.c.l.b16 %v719
        %v3150 = vunpack.c.h.b16 %v719
        %v3151 = vunpack.c.l.b16 %v720
        %v3152 = vunpack.c.h.b16 %v720
        %v3153 = vunpack.c.l.b16 %v721
        %v3154 = vunpack.c.h.b16 %v721
        %v3155 = vunpack.c.l.b16 %v722
        %v3156 = vunpack.c.h.b16 %v722
        %v3157 = vunpack.c.l.b16 %v723
        %v3158 = vunpack.c.h.b16 %v723
        %v3159 = vunpack.c.l.b16 %v724
        %v3160 = vunpack.c.h.b16 %v724
        %v3161 = vunpack.c.l.b16 %v725
        %v3162 = vunpack.c.h.b16 %v725
        %v3163 = vunpack.c.l.b16 %v726
        %v3164 = vunpack.c.h.b16 %v726
        %v3165 = vunpack.c.l.b16 %v727
        %v3166 = vunpack.c.h.b16 %v727
        %v3167 = vunpack.c.l.b16 %v728
        %v3168 = vunpack.c.h.b16 %v728
        %v3169 = vunpack.c.l.b16 %v729
        %v3170 = vunpack.c.h.b16 %v729
        %v3171 = vunpack.c.l.b16 %v730
        %v3172 = vunpack.c.h.b16 %v730
        %v3173 = vunpack.c.l.b16 %v731
        %v3174 = vunpack.c.h.b16 %v731
        %v3175 = vunpack.c.l.b16 %v732
        %v3176 = vunpack.c.h.b16 %v732
        %v3177 = vunpack.c.l.b16 %v733
        %v3178 = vunpack.c.h.b16 %v733
        %v3179 = vunpack.c.l.b16 %v734
        %v3180 = vunpack.c.h.b16 %v734
        %v3181 = vunpack.c.l.b16 %v735
        %v3182 = vunpack.c.h.b16 %v735
        %v3183 = vunpack.c.l.b16 %v736
        %v3184 = vunpack.c.h.b16 %v736
        %v3185 = vunpack.c.l.b16 %v737
        %v3186 = vunpack.c.h.b16 %v737
        %v3187 = vunpack.c.l.b16 %v738
        %v3188 = vunpack.c.h.b16 %v738
        %v3189 = vunpack.c.l.b16 %v739
        %v3190 = vunpack.c.h.b16 %v739
        %v3191 = vunpack.c.l.b16 %v740
        %v3192 = vunpack.c.h.b16 %v740
        %v3193 = vunpack.c.l.b16 %v741
        %v3194 = vunpack.c.h.b16 %v741
        %v3195 = vunpack.c.l.b16 %v742
        %v3196 = vunpack.c.h.b16 %v742
        %v3197 = vunpack.c.l.b16 %v743
        %v3198 = vunpack.c.h.b16 %v743
        %v3199 = vunpack.c.l.b16 %v744
        %v3200 = vunpack.c.h.b16 %v744
        %v3201 = vunpack.c.l.b16 %v745
        %v3202 = vunpack.c.h.b16 %v745
        %v3203 = vunpack.c.l.b16 %v746
        %v3204 = vunpack.c.h.b16 %v746
        %v3205 = vunpack.c.l.b16 %v747
        %v3206 = vunpack.c.h.b16 %v747
        %v3207 = vunpack.c.l.b16 %v748
        %v3208 = vunpack.c.h.b16 %v748
        %v3209 = vunpack.c.l.b16 %v749
        %v3210 = vunpack.c.h.b16 %v749
        %v3211 = vunpack.c.l.b16 %v750
        %v3212 = vunpack.c.h.b16 %v750
        %v3213 = vunpack.c.l.b16 %v751
        %v3214 = vunpack.c.h.b16 %v751
        %v3215 = vunpack.c.l.b16 %v752
        %v3216 = vunpack.c.h.b16 %v752
        %v3217 = vunpack.c.l.b16 %v753
        %v3218 = vunpack.c.h.b16 %v753
        %v3219 = vunpack.c.l.b16 %v754
        %v3220 = vunpack.c.h.b16 %v754
        %v3221 = vunpack.c.l.b16 %v755
        %v3222 = vunpack.c.h.b16 %v755
        %v3223 = vunpack.c.l.b16 %v756
        %v3224 = vunpack.c.h.b16 %v756
        %v3225 = vunpack.c.l.b16 %v757
        %v3226 = vunpack.c.h.b16 %v757
        %v3227 = vunpack.c.l.b16 %v758
        %v3228 = vunpack.c.h.b16 %v758
        %v3229 = vunpack.c.l.b16 %v759
        %v3230 = vunpack.c.h.b16 %v759
        %v3231 = vunpack.c.l.b16 %v760
        %v3232 = vunpack.c.h.b16 %v760
        %v3233 = vunpack.c.l.b16 %v761
        %v3234 = vunpack.c.h.b16 %v761
        %v3235 = vunpack.c.l.b16 %v762
        %v3236 = vunpack.c.h.b16 %v762
        %v3237 = vunpack.c.l.b16 %v763
        %v3238 = vunpack.c.h.b16 %v763
        %v3239 = vunpack.c.l.b16 %v764
        %v3240 = vunpack.c.h.b16 %v764
        %v3241 = vunpack.c.l.b16 %v765
        %v3242 = vunpack.c.h.b16 %v765
        %v3243 = vunpack.c.l.b16 %v766
        %v3244 = vunpack.c.h.b16 %v766
        %v3245 = vunpack.c.l.b16 %v767
        %v3246 = vunpack.c.h.b16 %v767
        %v3247 = vunpack.c.l.b16 %v768
        %v3248 = vunpack.c.h.b16 %v768
        %v3249 = vunpack.c.l.b16 %v769
        %v3250 = vunpack.c.h.b16 %v769
        %v3251 = vunpack.c.l.b16 %v770
        %v3252 = vunpack.c.h.b16 %v770
        %v3253 = vunpack.c.l.b16 %v771
        %v3254 = vunpack.c.h.b16 %v771
        %v3255 = vunpack.c.l.b16 %v772
        %v3256 = vunpack.c.h.b16 %v772
        %v3257 = vunpack.c.l.b16 %v773
        %v3258 = vunpack.c.h.b16 %v773
        %v3259 = vunpack.c.l.b16 %v774
        %v3260 = vunpack.c.h.b16 %v774
        %v3261 = vunpack.c.l.b16 %v775
        %v3262 = vunpack.c.h.b16 %v775
        %v3263 = vunpack.c.l.b16 %v776
        %v3264 = vunpack.c.h.b16 %v776
        %v3265 = vunpack.c.l.b16 %v777
        %v3266 = vunpack.c.h.b16 %v777
        %v3267 = vunpack.c.l.b16 %v778
        %v3268 = vunpack.c.h.b16 %v778
        %v3269 = vunpack.c.l.b16 %v779
        %v3270 = vunpack.c.h.b16 %v779
        %v3271 = vunpack.c.l.b16 %v780
        %v3272 = vunpack.c.h.b16 %v780
        %v3273 = vunpack.c.l.b16 %v781
        %v3274 = vunpack.c.h.b16 %v781
        %v3275 = vunpack.c.l.b16 %v782
        %v3276 = vunpack.c.h.b16 %v782
        %v3277 = vunpack.c.l.b16 %v783
        %v3278 = vunpack.c.h.b16 %v783
        %v3279 = vunpack.c.l.b16 %v784
        %v3280 = vunpack.c.h.b16 %v784
        %v3281 = vunpack.c.l.b16 %v785
        %v3282 = vunpack.c.h.b16 %v785
        %v3283 = vunpack.c.l.b16 %v786
        %v3284 = vunpack.c.h.b16 %v786
        %v3285 = vunpack.c.l.b16 %v787
        %v3286 = vunpack.c.h.b16 %v787
        %v3287 = vunpack.c.l.b16 %v788
        %v3288 = vunpack.c.h.b16 %v788
        %v3289 = vunpack.c.l.b16 %v789
        %v3290 = vunpack.c.h.b16 %v789
        %v3291 = vunpack.c.l.b16 %v790
        %v3292 = vunpack.c.h.b16 %v790
        %v3293 = vunpack.c.l.b16 %v791
        %v3294 = vunpack.c.h.b16 %v791
        %v3295 = vunpack.c.l.b16 %v792
        %v3296 = vunpack.c.h.b16 %v792
        %v3297 = vunpack.c.l.b16 %v793
        %v3298 = vunpack.c.h.b16 %v793
        %v3299 = vunpack.c.l.b16 %v794
        %v3300 = vunpack.c.h.b16 %v794
        %v3301 = vunpack.c.l.b16 %v795
        %v3302 = vunpack.c.h.b16 %v795
        %v3303 = vunpack.c.l.b16 %v796
        %v3304 = vunpack.c.h.b16 %v796
        %v3305 = vunpack.c.l.b16 %v797
        %v3306 = vunpack.c.h.b16 %v797
        %v3307 = vunpack.c.l.b16 %v798
        %v3308 = vunpack.c.h.b16 %v798
        %v3309 = vunpack.c.l.b16 %v799
        %v3310 = vunpack.c.h.b16 %v799
        %v3311 = vunpack.c.l.b16 %v800
        %v3312 = vunpack.c.h.b16 %v800
        %v3313 = vunpack.c.l.b16 %v801
        %v3314 = vunpack.c.h.b16 %v801
        %v3315 = vunpack.c.l.b16 %v802
        %v3316 = vunpack.c.h.b16 %v802
        %v3317 = vunpack.c.l.b16 %v803
        %v3318 = vunpack.c.h.b16 %v803
        %v3319 = vunpack.c.l.b16 %v804
        %v3320 = vunpack.c.h.b16 %v804
        %v3321 = vunpack.c.l.b16 %v805
        %v3322 = vunpack.c.h.b16 %v805
        %v3323 = vunpack.c.l.b16 %v806
        %v3324 = vunpack.c.h.b16 %v806
        %v3325 = vunpack.c.l.b16 %v807
        %v3326 = vunpack.c.h.b16 %v807
        %v3327 = vunpack.c.l.b16 %v808
        %v3328 = vunpack.c.h.b16 %v808
        %v3329 = vunpack.c.l.b16 %v809
        %v3330 = vunpack.c.h.b16 %v809
        %v3331 = vunpack.c.l.b16 %v810
        %v3332 = vunpack.c.h.b16 %v810
        %v3333 = vunpack.c.l.b16 %v811
        %v3334 = vunpack.c.h.b16 %v811
        %v3335 = vunpack.c.l.b16 %v812
        %v3336 = vunpack.c.h.b16 %v812
        %v3337 = vunpack.c.l.b16 %v813
        %v3338 = vunpack.c.h.b16 %v813
        %v3339 = vunpack.c.l.b16 %v814
        %v3340 = vunpack.c.h.b16 %v814
        %v3341 = vunpack.c.l.b16 %v815
        %v3342 = vunpack.c.h.b16 %v815
        %v3343 = vunpack.c.l.b16 %v816
        %v3344 = vunpack.c.h.b16 %v816
        %v3345 = vunpack.c.l.b16 %v817
        %v3346 = vunpack.c.h.b16 %v817
        %v3347 = vunpack.c.l.b16 %v818
        %v3348 = vunpack.c.h.b16 %v818
        %v3349 = vunpack.c.l.b16 %v819
        %v3350 = vunpack.c.h.b16 %v819
        %v3351 = vunpack.c.l.b16 %v820
        %v3352 = vunpack.c.h.b16 %v820
        %v3353 = vunpack.c.l.b16 %v821
        %v3354 = vunpack.c.h.b16 %v821
        %v3355 = vunpack.c.l.b16 %v822
        %v3356 = vunpack.c.h.b16 %v822
        %v3357 = vunpack.c.l.b16 %v823
        %v3358 = vunpack.c.h.b16 %v823
        %v3359 = vunpack.c.l.b16 %v824
        %v3360 = vunpack.c.h.b16 %v824
        %v3361 = vunpack.c.l.b16 %v825
        %v3362 = vunpack.c.h.b16 %v825
        %v3363 = vunpack.c.l.b16 %v826
        %v3364 = vunpack.c.h.b16 %v826
        %v3365 = vunpack.c.l.b16 %v827
        %v3366 = vunpack.c.h.b16 %v827
        %v3367 = vunpack.c.l.b16 %v828
        %v3368 = vunpack.c.h.b16 %v828
        %v3369 = vunpack.c.l.b16 %v829
        %v3370 = vunpack.c.h.b16 %v829
        %v3371 = vunpack.c.l.b16 %v830
        %v3372 = vunpack.c.h.b16 %v830
        %v3373 = vunpack.c.l.b16 %v831
        %v3374 = vunpack.c.h.b16 %v831
        %v3375 = vunpack.c.l.b16 %v832
        %v3376 = vunpack.c.h.b16 %v832
        %v3377 = vunpack.c.l.b16 %v833
        %v3378 = vunpack.c.h.b16 %v833
        %v3379 = vunpack.c.l.b16 %v834
        %v3380 = vunpack.c.h.b16 %v834
        %v3381 = vunpack.c.l.b16 %v835
        %v3382 = vunpack.c.h.b16 %v835
        %v3383 = vunpack.c.l.b16 %v836
        %v3384 = vunpack.c.h.b16 %v836
        %v3385 = vunpack.c.l.b16 %v837
        %v3386 = vunpack.c.h.b16 %v837
        %v3387 = vunpack.c.l.b16 %v838
        %v3388 = vunpack.c.h.b16 %v838
        %v3389 = vunpack.c.l.b16 %v839
        %v3390 = vunpack.c.h.b16 %v839
        %v3391 = vunpack.c.l.b16 %v840
        %v3392 = vunpack.c.h.b16 %v840
        %v3393 = vunpack.c.l.b16 %v841
        %v3394 = vunpack.c.h.b16 %v841
        %v3395 = vunpack.c.l.b16 %v842
        %v3396 = vunpack.c.h.b16 %v842
        %v3397 = vunpack.c.l.b16 %v843
        %v3398 = vunpack.c.h.b16 %v843
        %v3399 = vunpack.c.l.b16 %v844
        %v3400 = vunpack.c.h.b16 %v844
        %v3401 = vunpack.c.l.b16 %v845
        %v3402 = vunpack.c.h.b16 %v845
        %v3403 = vunpack.c.l.b16 %v846
        %v3404 = vunpack.c.h.b16 %v846
        %v3405 = vunpack.c.l.b16 %v847
        %v3406 = vunpack.c.h.b16 %v847
        %v3407 = vunpack.c.l.b16 %v848
        %v3408 = vunpack.c.h.b16 %v848
        %v3409 = vunpack.c.l.b16 %v849
        %v3410 = vunpack.c.h.b16 %v849
        %v3411 = vunpack.c.l.b16 %v850
        %v3412 = vunpack.c.h.b16 %v850
        %v3413 = vunpack.c.l.b16 %v851
        %v3414 = vunpack.c.h.b16 %v851
        %v3415 = vunpack.c.l.b16 %v852
        %v3416 = vunpack.c.h.b16 %v852
        %v3417 = vunpack.c.l.b16 %v853
        %v3418 = vunpack.c.h.b16 %v853
        %v3419 = vunpack.c.l.b16 %v854
        %v3420 = vunpack.c.h.b16 %v854
        %v3421 = vunpack.c.l.b16 %v855
        %v3422 = vunpack.c.h.b16 %v855
        %v3423 = vunpack.c.l.b16 %v856
        %v3424 = vunpack.c.h.b16 %v856
        %v3425 = vunpack.c.l.b16 %v857
        %v3426 = vunpack.c.h.b16 %v857
        %v3427 = vunpack.c.l.b16 %v858
        %v3428 = vunpack.c.h.b16 %v858
        %v3429 = vunpack.c.l.b16 %v859
        %v3430 = vunpack.c.h.b16 %v859
        %v3431 = vunpack.c.l.b16 %v860
        %v3432 = vunpack.c.h.b16 %v860
        %v3433 = vunpack.c.l.b16 %v861
        %v3434 = vunpack.c.h.b16 %v861
        %v3435 = vunpack.c.l.b16 %v862
        %v3436 = vunpack.c.h.b16 %v862
        %v3437 = vunpack.c.l.b16 %v863
        %v3438 = vunpack.c.h.b16 %v863
        %v3439 = vunpack.c.l.b16 %v864
        %v3440 = vunpack.c.h.b16 %v864
        %v3441 = vunpack.c.l.b16 %v865
        %v3442 = vunpack.c.h.b16 %v865
        %v3443 = vunpack.c.l.b16 %v866
        %v3444 = vunpack.c.h.b16 %v866
        %v3445 = vunpack.c.l.b16 %v867
        %v3446 = vunpack.c.h.b16 %v867
        %v3447 = vunpack.c.l.b16 %v868
        %v3448 = vunpack.c.h.b16 %v868
        %v3449 = vunpack.c.l.b16 %v869
        %v3450 = vunpack.c.h.b16 %v869
        %v3451 = vunpack.c.l.b16 %v870
        %v3452 = vunpack.c.h.b16 %v870
        %v3453 = vunpack.c.l.b16 %v871
        %v3454 = vunpack.c.h.b16 %v871
        %v3455 = vunpack.c.l.b16 %v872
        %v3456 = vunpack.c.h.b16 %v872
        %v3457 = vunpack.c.l.b16 %v873
        %v3458 = vunpack.c.h.b16 %v873
        %v3459 = vunpack.c.l.b16 %v874
        %v3460 = vunpack.c.h.b16 %v874
        %v3461 = vunpack.c.l.b16 %v875
        %v3462 = vunpack.c.h.b16 %v875
        %v3463 = vunpack.c.l.b16 %v876
        %v3464 = vunpack.c.h.b16 %v876
        %v3465 = vunpack.c.l.b16 %v877
        %v3466 = vunpack.c.h.b16 %v877
        %v3467 = vunpack.c.l.b16 %v878
        %v3468 = vunpack.c.h.b16 %v878
        %v3469 = vunpack.c.l.b16 %v879
        %v3470 = vunpack.c.h.b16 %v879
        %v3471 = vunpack.c.l.b16 %v880
        %v3472 = vunpack.c.h.b16 %v880
        %v3473 = vunpack.c.l.b16 %v881
        %v3474 = vunpack.c.h.b16 %v881
        %v3475 = vunpack.c.l.b16 %v882
        %v3476 = vunpack.c.h.b16 %v882
        %v3477 = vunpack.c.l.b16 %v883
        %v3478 = vunpack.c.h.b16 %v883
        %v3479 = vunpack.c.l.b16 %v884
        %v3480 = vunpack.c.h.b16 %v884
        %v3481 = vunpack.c.l.b16 %v885
        %v3482 = vunpack.c.h.b16 %v885
        %v3483 = vunpack.c.l.b16 %v886
        %v3484 = vunpack.c.h.b16 %v886
        %v3485 = vunpack.c.l.b16 %v887
        %v3486 = vunpack.c.h.b16 %v887
        %v3487 = vunpack.c.l.b16 %v888
        %v3488 = vunpack.c.h.b16 %v888
        %v3489 = vunpack.c.l.b16 %v889
        %v3490 = vunpack.c.h.b16 %v889
        %v3491 = vunpack.c.l.b16 %v890
        %v3492 = vunpack.c.h.b16 %v890
        %v3493 = vunpack.c.l.b16 %v891
        %v3494 = vunpack.c.h.b16 %v891
        %v3495 = vunpack.c.l.b16 %v892
        %v3496 = vunpack.c.h.b16 %v892
        %v3497 = vunpack.c.l.b16 %v893
        %v3498 = vunpack.c.h.b16 %v893
        %v3499 = vunpack.c.l.b16 %v894
        %v3500 = vunpack.c.h.b16 %v894
        %v3501 = vunpack.c.l.b16 %v895
        %v3502 = vunpack.c.h.b16 %v895
        %v3503 = vunpack.c.l.b16 %v896
        %v3504 = vunpack.c.h.b16 %v896
        %v3505 = vunpack.c.l.b16 %v897
        %v3506 = vunpack.c.h.b16 %v897
        %v3507 = vunpack.c.l.b16 %v898
        %v3508 = vunpack.c.h.b16 %v898
        %v3509 = vunpack.c.l.b16 %v899
        %v3510 = vunpack.c.h.b16 %v899
        %v3511 = vunpack.c.l.b16 %v900
        %v3512 = vunpack.c.h.b16 %v900
        %v3513 = vunpack.c.l.b16 %v901
        %v3514 = vunpack.c.h.b16 %v901
        %v3515 = vunpack.c.l.b16 %v902
        %v3516 = vunpack.c.h.b16 %v902
        %v3517 = vunpack.c.l.b16 %v903
        %v3518 = vunpack.c.h.b16 %v903
        %v3519 = vunpack.c.l.b16 %v904
        %v3520 = vunpack.c.h.b16 %v904
        %v3521 = vunpack.c.l.b16 %v905
        %v3522 = vunpack.c.h.b16 %v905
        %v3523 = vunpack.c.l.b16 %v906
        %v3524 = vunpack.c.h.b16 %v906
        %v3525 = vunpack.c.l.b16 %v907
        %v3526 = vunpack.c.h.b16 %v907
        %v3527 = vunpack.c.l.b16 %v908
        %v3528 = vunpack.c.h.b16 %v908
        %v3529 = vunpack.c.l.b16 %v909
        %v3530 = vunpack.c.h.b16 %v909
        %v3531 = vunpack.c.l.b16 %v910
        %v3532 = vunpack.c.h.b16 %v910
        %v3533 = vunpack.c.l.b16 %v911
        %v3534 = vunpack.c.h.b16 %v911
        %v3535 = vunpack.c.l.b16 %v912
        %v3536 = vunpack.c.h.b16 %v912
        %v3537 = vunpack.c.l.b16 %v913
        %v3538 = vunpack.c.h.b16 %v913
        %v3539 = vunpack.c.l.b16 %v914
        %v3540 = vunpack.c.h.b16 %v914
        %v3541 = vunpack.c.l.b16 %v915
        %v3542 = vunpack.c.h.b16 %v915
        %v3543 = vunpack.c.l.b16 %v916
        %v3544 = vunpack.c.h.b16 %v916
        %v3545 = vunpack.c.l.b16 %v917
        %v3546 = vunpack.c.h.b16 %v917
        %v3547 = vunpack.c.l.b16 %v918
        %v3548 = vunpack.c.h.b16 %v918
        %v3549 = vunpack.c.l.b16 %v919
        %v3550 = vunpack.c.h.b16 %v919
        %v3551 = vunpack.c.l.b16 %v920
        %v3552 = vunpack.c.h.b16 %v920
        %v3553 = vunpack.c.l.b16 %v921
        %v3554 = vunpack.c.h.b16 %v921
        %v3555 = vunpack.c.l.b16 %v922
        %v3556 = vunpack.c.h.b16 %v922
        %v3557 = vunpack.c.l.b16 %v923
        %v3558 = vunpack.c.h.b16 %v923
        %v3559 = vunpack.c.l.b16 %v924
        %v3560 = vunpack.c.h.b16 %v924
        %v3561 = vunpack.c.l.b16 %v925
        %v3562 = vunpack.c.h.b16 %v925
        %v3563 = vunpack.c.l.b16 %v926
        %v3564 = vunpack.c.h.b16 %v926
        %v3565 = vunpack.c.l.b16 %v927
        %v3566 = vunpack.c.h.b16 %v927
        %v3567 = vunpack.c.l.b16 %v928
        %v3568 = vunpack.c.h.b16 %v928
        %v3569 = vunpack.c.l.b16 %v929
        %v3570 = vunpack.c.h.b16 %v929
        %v3571 = vunpack.c.l.b16 %v930
        %v3572 = vunpack.c.h.b16 %v930
        %v3573 = vunpack.c.l.b16 %v931
        %v3574 = vunpack.c.h.b16 %v931
        %v3575 = vunpack.c.l.b16 %v932
        %v3576 = vunpack.c.h.b16 %v932
        %v3577 = vunpack.c.l.b16 %v933
        %v3578 = vunpack.c.h.b16 %v933
        %v3579 = vunpack.c.l.b16 %v934
        %v3580 = vunpack.c.h.b16 %v934
        %v3581 = vunpack.c.l.b16 %v935
        %v3582 = vunpack.c.h.b16 %v935
        %v3583 = vunpack.c.l.b16 %v936
        %v3584 = vunpack.c.h.b16 %v936
        %v3585 = vunpack.c.l.b16 %v937
        %v3586 = vunpack.c.h.b16 %v937
        %v3587 = vunpack.c.l.b16 %v938
        %v3588 = vunpack.c.h.b16 %v938
        %v3589 = vunpack.c.l.b16 %v939
        %v3590 = vunpack.c.h.b16 %v939
        %v3591 = vunpack.c.l.b16 %v940
        %v3592 = vunpack.c.h.b16 %v940
        %v3593 = vunpack.c.l.b16 %v941
        %v3594 = vunpack.c.h.b16 %v941
        %v3595 = vunpack.c.l.b16 %v942
        %v3596 = vunpack.c.h.b16 %v942
        %v3597 = vunpack.c.l.b16 %v943
        %v3598 = vunpack.c.h.b16 %v943
        %v3599 = vunpack.c.l.b16 %v944
        %v3600 = vunpack.c.h.b16 %v944
        %v3601 = vunpack.c.l.b16 %v945
        %v3602 = vunpack.c.h.b16 %v945
        %v3603 = vunpack.c.l.b16 %v946
        %v3604 = vunpack.c.h.b16 %v946
        %v3605 = vunpack.c.l.b16 %v947
        %v3606 = vunpack.c.h.b16 %v947
        %v3607 = vunpack.c.l.b16 %v948
        %v3608 = vunpack.c.h.b16 %v948
        %v3609 = vunpack.c.l.b16 %v949
        %v3610 = vunpack.c.h.b16 %v949
        %v3611 = vunpack.c.l.b16 %v950
        %v3612 = vunpack.c.h.b16 %v950
        %v3613 = vunpack.c.l.b16 %v951
        %v3614 = vunpack.c.h.b16 %v951
        %v3615 = vunpack.c.l.b16 %v952
        %v3616 = vunpack.c.h.b16 %v952
        %v3617 = vunpack.c.l.b16 %v953
        %v3618 = vunpack.c.h.b16 %v953
        %v3619 = vunpack.c.l.b16 %v954
        %v3620 = vunpack.c.h.b16 %v954
        %v3621 = vunpack.c.l.b16 %v955
        %v3622 = vunpack.c.h.b16 %v955
        %v3623 = vunpack.c.l.b16 %v956
        %v3624 = vunpack.c.h.b16 %v956
        %v3625 = vunpack.c.l.b16 %v957
        %v3626 = vunpack.c.h.b16 %v957
        %v3627 = vunpack.c.l.b16 %v958
        %v3628 = vunpack.c.h.b16 %v958
        %v3629 = vunpack.c.l.b16 %v959
        %v3630 = vunpack.c.h.b16 %v959
        %v3631 = vunpack.c.l.b16 %v960
        %v3632 = vunpack.c.h.b16 %v960
        %v3633 = vunpack.c.l.b16 %v961
        %v3634 = vunpack.c.h.b16 %v961
        %v3635 = vunpack.c.l.b16 %v962
        %v3636 = vunpack.c.h.b16 %v962
        %v3637 = vunpack.c.l.b16 %v963
        %v3638 = vunpack.c.h.b16 %v963
        %v3639 = vunpack.c.l.b16 %v964
        %v3640 = vunpack.c.h.b16 %v964
        %v3641 = vunpack.c.l.b16 %v965
        %v3642 = vunpack.c.h.b16 %v965
        %v3643 = vunpack.c.l.b16 %v966
        %v3644 = vunpack.c.h.b16 %v966
        %v3645 = vunpack.c.l.b16 %v967
        %v3646 = vunpack.c.h.b16 %v967
        %v3647 = vunpack.c.l.b16 %v968
        %v3648 = vunpack.c.h.b16 %v968
        %v3649 = vunpack.c.l.b16 %v969
        %v3650 = vunpack.c.h.b16 %v969
        %v3651 = vunpack.c.l.b16 %v970
        %v3652 = vunpack.c.h.b16 %v970
        %v3653 = vunpack.c.l.b16 %v971
        %v3654 = vunpack.c.h.b16 %v971
        %v3655 = vunpack.c.l.b16 %v972
        %v3656 = vunpack.c.h.b16 %v972
        %v3657 = vunpack.c.l.b16 %v973
        %v3658 = vunpack.c.h.b16 %v973
        %v3659 = vunpack.c.l.b16 %v974
        %v3660 = vunpack.c.h.b16 %v974
        %v3661 = vunpack.c.l.b16 %v975
        %v3662 = vunpack.c.h.b16 %v975
        %v3663 = vunpack.c.l.b16 %v976
        %v3664 = vunpack.c.h.b16 %v976
        %v3665 = vunpack.c.l.b16 %v977
        %v3666 = vunpack.c.h.b16 %v977
        %v3667 = vunpack.c.l.b16 %v978
        %v3668 = vunpack.c.h.b16 %v978
        %v3669 = vunpack.c.l.b16 %v979
        %v3670 = vunpack.c.h.b16 %v979
        %v3671 = vunpack.c.l.b16 %v980
        %v3672 = vunpack.c.h.b16 %v980
        %v3673 = vunpack.c.l.b16 %v981
        %v3674 = vunpack.c.h.b16 %v981
        %v3675 = vunpack.c.l.b16 %v982
        %v3676 = vunpack.c.h.b16 %v982
        %v3677 = vunpack.c.l.b16 %v983
        %v3678 = vunpack.c.h.b16 %v983
        %v3679 = vunpack.c.l.b16 %v984
        %v3680 = vunpack.c.h.b16 %v984
        %v3681 = vunpack.c.l.b16 %v985
        %v3682 = vunpack.c.h.b16 %v985
        %v3683 = vunpack.c.l.b16 %v986
        %v3684 = vunpack.c.h.b16 %v986
        %v3685 = vunpack.c.l.b16 %v987
        %v3686 = vunpack.c.h.b16 %v987
        %v3687 = vunpack.c.l.b16 %v988
        %v3688 = vunpack.c.h.b16 %v988
        %v3689 = vunpack.c.l.b16 %v989
        %v3690 = vunpack.c.h.b16 %v989
        %v3691 = vunpack.c.l.b16 %v990
        %v3692 = vunpack.c.h.b16 %v990
        %v3693 = vunpack.c.l.b16 %v991
        %v3694 = vunpack.c.h.b16 %v991
        %v3695 = vunpack.c.l.b16 %v992
        %v3696 = vunpack.c.h.b16 %v992
        %v3697 = vunpack.c.l.b16 %v993
        %v3698 = vunpack.c.h.b16 %v993
        %v3699 = vunpack.c.l.b16 %v994
        %v3700 = vunpack.c.h.b16 %v994
        %v3701 = vunpack.c.l.b16 %v995
        %v3702 = vunpack.c.h.b16 %v995
        %v3703 = vunpack.c.l.b16 %v996
        %v3704 = vunpack.c.h.b16 %v996
        %v3705 = vunpack.c.l.b16 %v997
        %v3706 = vunpack.c.h.b16 %v997
        %v3707 = vunpack.c.l.b16 %v998
        %v3708 = vunpack.c.h.b16 %v998
        %v3709 = vunpack.c.l.b16 %v999
        %v3710 = vunpack.c.h.b16 %v999
        %v3711 = vunpack.c.l.b16 %v1000
        %v3712 = vunpack.c.h.b16 %v1000
        %v3713 = vunpack.c.l.b16 %v1001
        %v3714 = vunpack.c.h.b16 %v1001
        %v3715 = vunpack.c.l.b16 %v1002
        %v3716 = vunpack.c.h.b16 %v1002
        %v3717 = vunpack.c.l.b16 %v1003
        %v3718 = vunpack.c.h.b16 %v1003
        %v3719 = vunpack.c.l.b16 %v1004
        %v3720 = vunpack.c.h.b16 %v1004
        %v3721 = vunpack.c.l.b16 %v1005
        %v3722 = vunpack.c.h.b16 %v1005
        %v3723 = vunpack.c.l.b16 %v1006
        %v3724 = vunpack.c.h.b16 %v1006
        %v3725 = vunpack.c.l.b16 %v1007
        %v3726 = vunpack.c.h.b16 %v1007
        %v3727 = vunpack.c.l.b16 %v1008
        %v3728 = vunpack.c.h.b16 %v1008
        %v3729 = vunpack.c.l.b16 %v1009
        %v3730 = vunpack.c.h.b16 %v1009
        %v3731 = vunpack.c.l.b16 %v1010
        %v3732 = vunpack.c.h.b16 %v1010
        %v3733 = vunpack.c.l.b16 %v1011
        %v3734 = vunpack.c.h.b16 %v1011
        %v3735 = vunpack.c.l.b16 %v1012
        %v3736 = vunpack.c.h.b16 %v1012
        %v3737 = vunpack.c.l.b16 %v1013
        %v3738 = vunpack.c.h.b16 %v1013
        %v3739 = vunpack.c.l.b16 %v1014
        %v3740 = vunpack.c.h.b16 %v1014
        %v3741 = vunpack.c.l.b16 %v1015
        %v3742 = vunpack.c.h.b16 %v1015
        %v3743 = vunpack.c.l.b16 %v1016
        %v3744 = vunpack.c.h.b16 %v1016
        %v3745 = vunpack.c.l.b16 %v1017
        %v3746 = vunpack.c.h.b16 %v1017
        %v3747 = vunpack.c.l.b16 %v1018
        %v3748 = vunpack.c.h.b16 %v1018
        %v3749 = vunpack.c.l.b16 %v1019
        %v3750 = vunpack.c.h.b16 %v1019
        %v3751 = vunpack.c.l.b16 %v1020
        %v3752 = vunpack.c.h.b16 %v1020
        %v3753 = vunpack.c.l.b16 %v1021
        %v3754 = vunpack.c.h.b16 %v1021
        %v3755 = vunpack.c.l.b16 %v1022
        %v3756 = vunpack.c.h.b16 %v1022
        %v3757 = vunpack.c.l.b16 %v1023
        %v3758 = vunpack.c.h.b16 %v1023
        %v3759 = vunpack.c.l.b16 %v1024
        %v3760 = vunpack.c.h.b16 %v1024
        %v3761 = vunpack.c.l.b16 %v1025
        %v3762 = vunpack.c.h.b16 %v1025
        %v3763 = vunpack.c.l.b16 %v1026
        %v3764 = vunpack.c.h.b16 %v1026
        %v3765 = vunpack.c.l.b16 %v1027
        %v3766 = vunpack.c.h.b16 %v1027
        %v3767 = vunpack.c.l.b16 %v1028
        %v3768 = vunpack.c.h.b16 %v1028
        %v3769 = vunpack.c.l.b16 %v1029
        %v3770 = vunpack.c.h.b16 %v1029
        %v3771 = vunpack.c.l.b16 %v1030
        %v3772 = vunpack.c.h.b16 %v1030
        %v3773 = vunpack.c.l.b16 %v1031
        %v3774 = vunpack.c.h.b16 %v1031
        %v3775 = vunpack.c.l.b16 %v1032
        %v3776 = vunpack.c.h.b16 %v1032
        %v3777 = vunpack.c.l.b16 %v1033
        %v3778 = vunpack.c.h.b16 %v1033
        %v3779 = vunpack.c.l.b16 %v1034
        %v3780 = vunpack.c.h.b16 %v1034
        %v3781 = vunpack.c.l.b16 %v1035
        %v3782 = vunpack.c.h.b16 %v1035
        %v3783 = vunpack.c.l.b16 %v1036
        %v3784 = vunpack.c.h.b16 %v1036
        %v3785 = vunpack.c.l.b16 %v1037
        %v3786 = vunpack.c.h.b16 %v1037
        %v3787 = vunpack.c.l.b16 %v1038
        %v3788 = vunpack.c.h.b16 %v1038
        %v3789 = vunpack.c.l.b16 %v1039
        %v3790 = vunpack.c.h.b16 %v1039
        %v3791 = vunpack.c.l.b16 %v1040
        %v3792 = vunpack.c.h.b16 %v1040
        %v3793 = vunpack.c.l.b16 %v1041
        %v3794 = vunpack.c.h.b16 %v1041
        %v3795 = vunpack.c.l.b16 %v1042
        %v3796 = vunpack.c.h.b16 %v1042
        %v3797 = vunpack.c.l.b16 %v1043
        %v3798 = vunpack.c.h.b16 %v1043
        %v3799 = vunpack.c.l.b16 %v1044
        %v3800 = vunpack.c.h.b16 %v1044
        %v3801 = vunpack.c.l.b16 %v1045
        %v3802 = vunpack.c.h.b16 %v1045
        %v3803 = vunpack.c.l.b16 %v1046
        %v3804 = vunpack.c.h.b16 %v1046
        %v3805 = vunpack.c.l.b16 %v1047
        %v3806 = vunpack.c.h.b16 %v1047
        %v3807 = vunpack.c.l.b16 %v1048
        %v3808 = vunpack.c.h.b16 %v1048
        %v3809 = vunpack.c.l.b16 %v1049
        %v3810 = vunpack.c.h.b16 %v1049
        %v3811 = vunpack.c.l.b16 %v1050
        %v3812 = vunpack.c.h.b16 %v1050
        %v3813 = vunpack.c.l.b16 %v1051
        %v3814 = vunpack.c.h.b16 %v1051
        %v3815 = vunpack.c.l.b16 %v1052
        %v3816 = vunpack.c.h.b16 %v1052
        %v3817 = vunpack.c.l.b16 %v1053
        %v3818 = vunpack.c.h.b16 %v1053
        %v3819 = vunpack.c.l.b16 %v1054
        %v3820 = vunpack.c.h.b16 %v1054
        %v3821 = vunpack.c.l.b16 %v1055
        %v3822 = vunpack.c.h.b16 %v1055
        %v3823 = vunpack.c.l.b16 %v1056
        %v3824 = vunpack.c.h.b16 %v1056
        %v3825 = vunpack.c.l.b16 %v1057
        %v3826 = vunpack.c.h.b16 %v1057
        %v3827 = vunpack.c.l.b16 %v1058
        %v3828 = vunpack.c.h.b16 %v1058
        %v3829 = vunpack.c.l.b16 %v1059
        %v3830 = vunpack.c.h.b16 %v1059
        %v3831 = vunpack.c.l.b16 %v1060
        %v3832 = vunpack.c.h.b16 %v1060
        %v3833 = vunpack.c.l.b16 %v1061
        %v3834 = vunpack.c.h.b16 %v1061
        %v3835 = vunpack.c.l.b16 %v1062
        %v3836 = vunpack.c.h.b16 %v1062
        %v3837 = vunpack.c.l.b16 %v1063
        %v3838 = vunpack.c.h.b16 %v1063
        %v3839 = vunpack.c.l.b16 %v1064
        %v3840 = vunpack.c.h.b16 %v1064
        %v3841 = vunpack.c.l.b16 %v1065
        %v3842 = vunpack.c.h.b16 %v1065
        %v3843 = vunpack.c.l.b16 %v1066
        %v3844 = vunpack.c.h.b16 %v1066
        %v3845 = vunpack.c.l.b16 %v1067
        %v3846 = vunpack.c.h.b16 %v1067
        %v3847 = vunpack.c.l.b16 %v1068
        %v3848 = vunpack.c.h.b16 %v1068
        %v3849 = vunpack.c.l.b16 %v1069
        %v3850 = vunpack.c.h.b16 %v1069
        %v3851 = vunpack.c.l.b16 %v1070
        %v3852 = vunpack.c.h.b16 %v1070
        %v3853 = vunpack.c.l.b16 %v1071
        %v3854 = vunpack.c.h.b16 %v1071
        %v3855 = vunpack.c.l.b16 %v1072
        %v3856 = vunpack.c.h.b16 %v1072
        %v3857 = vunpack.c.l.b16 %v1073
        %v3858 = vunpack.c.h.b16 %v1073
        %v3859 = vpack.c.b16 %v2261, %v2259
        %v3860 = vpack.c.b16 %v2262, %v2260
        %v3861 = vpack.c.b16 %v2265, %v2263
        %v3862 = vpack.c.b16 %v2266, %v2264
        %v3863 = vpack.c.b16 %v2269, %v2267
        %v3864 = vpack.c.b16 %v2270, %v2268
        %v3865 = vpack.c.b16 %v2273, %v2271
        %v3866 = vpack.c.b16 %v2274, %v2272
        %v3867 = vpack.c.b16 %v2277, %v2275
        %v3868 = vpack.c.b16 %v2278, %v2276
        %v3869 = vpack.c.b16 %v2281, %v2279
        %v3870 = vpack.c.b16 %v2282, %v2280
        %v3871 = vpack.c.b16 %v2285, %v2283
        %v3872 = vpack.c.b16 %v2286, %v2284
        %v3873 = vpack.c.b16 %v2289, %v2287
        %v3874 = vpack.c.b16 %v2290, %v2288
        %v3875 = vpack.c.b16 %v2293, %v2291
        %v3876 = vpack.c.b16 %v2294, %v2292
        %v3877 = vpack.c.b16 %v2297, %v2295
        %v3878 = vpack.c.b16 %v2298, %v2296
        %v3879 = vpack.c.b16 %v2301, %v2299
        %v3880 = vpack.c.b16 %v2302, %v2300
        %v3881 = vpack.c.b16 %v2305, %v2303
        %v3882 = vpack.c.b16 %v2306, %v2304
        %v3883 = vpack.c.b16 %v2309, %v2307
        %v3884 = vpack.c.b16 %v2310, %v2308
        %v3885 = vpack.c.b16 %v2313, %v2311
        %v3886 = vpack.c.b16 %v2314, %v2312
        %v3887 = vpack.c.b16 %v2317, %v2315
        %v3888 = vpack.c.b16 %v2318, %v2316
        %v3889 = vpack.c.b16 %v2321, %v2319
        %v3890 = vpack.c.b16 %v2322, %v2320
        %v3891 = vpack.c.b16 %v2325, %v2323
        %v3892 = vpack.c.b16 %v2326, %v2324
        %v3893 = vpack.c.b16 %v2329, %v2327
        %v3894 = vpack.c.b16 %v2330, %v2328
        %v3895 = vpack.c.b16 %v2333, %v2331
        %v3896 = vpack.c.b16 %v2334, %v2332
        %v3897 = vpack.c.b16 %v2337, %v2335
        %v3898 = vpack.c.b16 %v2338, %v2336
        %v3899 = vpack.c.b16 %v2341, %v2339
        %v3900 = vpack.c.b16 %v2342, %v2340
        %v3901 = vpack.c.b16 %v2345, %v2343
        %v3902 = vpack.c.b16 %v2346, %v2344
        %v3903 = vpack.c.b16 %v2349, %v2347
        %v3904 = vpack.c.b16 %v2350, %v2348
        %v3905 = vpack.c.b16 %v2353, %v2351
        %v3906 = vpack.c.b16 %v2354, %v2352
        %v3907 = vpack.c.b16 %v2357, %v2355
        %v3908 = vpack.c.b16 %v2358, %v2356
        %v3909 = vpack.c.b16 %v2361, %v2359
        %v3910 = vpack.c.b16 %v2362, %v2360
        %v3911 = vpack.c.b16 %v2365, %v2363
        %v3912 = vpack.c.b16 %v2366, %v2364
        %v3913 = vpack.c.b16 %v2369, %v2367
        %v3914 = vpack.c.b16 %v2370, %v2368
        %v3915 = vpack.c.b16 %v2373, %v2371
        %v3916 = vpack.c.b16 %v2374, %v2372
        %v3917 = vpack.c.b16 %v2377, %v2375
        %v3918 = vpack.c.b16 %v2378, %v2376
        %v3919 = vpack.c.b16 %v2381, %v2379
        %v3920 = vpack.c.b16 %v2382, %v2380
        %v3921 = vpack.c.b16 %v2385, %v2383
        %v3922 = vpack.c.b16 %v2386, %v2384
        %v3923 = vpack.c.b16 %v2389, %v2387
        %v3924 = vpack.c.b16 %v2390, %v2388
        %v3925 = vpack.c.b16 %v2393, %v2391
        %v3926 = vpack.c.b16 %v2394, %v2392
        %v3927 = vpack.c.b16 %v2397, %v2395
        %v3928 = vpack.c.b16 %v2398, %v2396
        %v3929 = vpack.c.b16 %v2401, %v2399
        %v3930 = vpack.c.b16 %v2402, %v2400
        %v3931 = vpack.c.b16 %v2405, %v2403
        %v3932 = vpack.c.b16 %v2406, %v2404
        %v3933 = vpack.c.b16 %v2409, %v2407
        %v3934 = vpack.c.b16 %v2410, %v2408
        %v3935 = vpack.c.b16 %v2413, %v2411
        %v3936 = vpack.c.b16 %v2414, %v2412
        %v3937 = vpack.c.b16 %v2417, %v2415
        %v3938 = vpack.c.b16 %v2418, %v2416
        %v3939 = vpack.c.b16 %v2421, %v2419
        %v3940 = vpack.c.b16 %v2422, %v2420
        %v3941 = vpack.c.b16 %v2425, %v2423
        %v3942 = vpack.c.b16 %v2426, %v2424
        %v3943 = vpack.c.b16 %v2429, %v2427
        %v3944 = vpack.c.b16 %v2430, %v2428
        %v3945 = vpack.c.b16 %v2433, %v2431
        %v3946 = vpack.c.b16 %v2434, %v2432
        %v3947 = vpack.c.b16 %v2437, %v2435
        %v3948 = vpack.c.b16 %v2438, %v2436
        %v3949 = vpack.c.b16 %v2441, %v2439
        %v3950 = vpack.c.b16 %v2442, %v2440
        %v3951 = vpack.c.b16 %v2445, %v2443
        %v3952 = vpack.c.b16 %v2446, %v2444
        %v3953 = vpack.c.b16 %v2449, %v2447
        %v3954 = vpack.c.b16 %v2450, %v2448
        %v3955 = vpack.c.b16 %v2453, %v2451
        %v3956 = vpack.c.b16 %v2454, %v2452
        %v3957 = vpack.c.b16 %v2457, %v2455
        %v3958 = vpack.c.b16 %v2458, %v2456
        %v3959 = vpack.c.b16 %v2461, %v2459
        %v3960 = vpack.c.b16 %v2462, %v2460
        %v3961 = vpack.c.b16 %v2465, %v2463
        %v3962 = vpack.c.b16 %v2466, %v2464
        %v3963 = vpack.c.b16 %v2469, %v2467
        %v3964 = vpack.c.b16 %v2470, %v2468
        %v3965 = vpack.c.b16 %v2473, %v2471
        %v3966 = vpack.c.b16 %v2474, %v2472
        %v3967 = vpack.c.b16 %v2477, %v2475
        %v3968 = vpack.c.b16 %v2478, %v2476
        %v3969 = vpack.c.b16 %v2481, %v2479
        %v3970 = vpack.c.b16 %v2482, %v2480
        %v3971 = vpack.c.b16 %v2485, %v2483
        %v3972 = vpack.c.b16 %v2486, %v2484
        %v3973 = vpack.c.b16 %v2489, %v2487
        %v3974 = vpack.c.b16 %v2490, %v2488
        %v3975 = vpack.c.b16 %v2493, %v2491
        %v3976 = vpack.c.b16 %v2494, %v2492
        %v3977 = vpack.c.b16 %v2497, %v2495
        %v3978 = vpack.c.b16 %v2498, %v2496
        %v3979 = vpack.c.b16 %v2501, %v2499
        %v3980 = vpack.c.b16 %v2502, %v2500
        %v3981 = vpack.c.b16 %v2505, %v2503
        %v3982 = vpack.c.b16 %v2506, %v2504
        %v3983 = vpack.c.b16 %v2509, %v2507
        %v3984 = vpack.c.b16 %v2510, %v2508
        %v3985 = vpack.c.b16 %v2513, %v2511
        %v3986 = vpack.c.b16 %v2514, %v2512
        %v3987 = vpack.c.b16 %v2517, %v2515
        %v3988 = vpack.c.b16 %v2518, %v2516
        %v3989 = vpack.c.b16 %v2521, %v2519
        %v3990 = vpack.c.b16 %v2522, %v2520
        %v3991 = vpack.c.b16 %v2525, %v2523
        %v3992 = vpack.c.b16 %v2526, %v2524
        %v3993 = vpack.c.b16 %v2529, %v2527
        %v3994 = vpack.c.b16 %v2530, %v2528
        %v3995 = vpack.c.b16 %v2533, %v2531
        %v3996 = vpack.c.b16 %v2534, %v2532
        %v3997 = vpack.c.b16 %v2537, %v2535
        %v3998 = vpack.c.b16 %v2538, %v2536
        %v3999 = vpack.c.b16 %v2541, %v2539
        %v4000 = vpack.c.b16 %v2542, %v2540
        %v4001 = vpack.c.b16 %v2545, %v2543
        %v4002 = vpack.c.b16 %v2546, %v2544
        %v4003 = vpack.c.b16 %v2549, %v2547
        %v4004 = vpack.c.b16 %v2550, %v2548
        %v4005 = vpack.c.b16 %v2553, %v2551
        %v4006 = vpack.c.b16 %v2554, %v2552
        %v4007 = vpack.c.b16 %v2557, %v2555
        %v4008 = vpack.c.b16 %v2558, %v2556
        %v4009 = vpack.c.b16 %v2561, %v2559
        %v4010 = vpack.c.b16 %v2562, %v2560
        %v4011 = vpack.c.b16 %v2565, %v2563
        %v4012 = vpack.c.b16 %v2566, %v2564
        %v4013 = vpack.c.b16 %v2569, %v2567
        %v4014 = vpack.c.b16 %v2570, %v2568
        %v4015 = vpack.c.b16 %v2573, %v2571
        %v4016 = vpack.c.b16 %v2574, %v2572
        %v4017 = vpack.c.b16 %v2577, %v2575
        %v4018 = vpack.c.b16 %v2578, %v2576
        %v4019 = vpack.c.b16 %v2581, %v2579
        %v4020 = vpack.c.b16 %v2582, %v2580
        %v4021 = vpack.c.b16 %v2585, %v2583
        %v4022 = vpack.c.b16 %v2586, %v2584
        %v4023 = vpack.c.b16 %v2589, %v2587
        %v4024 = vpack.c.b16 %v2590, %v2588
        %v4025 = vpack.c.b16 %v2593, %v2591
        %v4026 = vpack.c.b16 %v2594, %v2592
        %v4027 = vpack.c.b16 %v2597, %v2595
        %v4028 = vpack.c.b16 %v2598, %v2596
        %v4029 = vpack.c.b16 %v2601, %v2599
        %v4030 = vpack.c.b16 %v2602, %v2600
        %v4031 = vpack.c.b16 %v2605, %v2603
        %v4032 = vpack.c.b16 %v2606, %v2604
        %v4033 = vpack.c.b16 %v2609, %v2607
        %v4034 = vpack.c.b16 %v2610, %v2608
        %v4035 = vpack.c.b16 %v2613, %v2611
        %v4036 = vpack.c.b16 %v2614, %v2612
        %v4037 = vpack.c.b16 %v2617, %v2615
        %v4038 = vpack.c.b16 %v2618, %v2616
        %v4039 = vpack.c.b16 %v2621, %v2619
        %v4040 = vpack.c.b16 %v2622, %v2620
        %v4041 = vpack.c.b16 %v2625, %v2623
        %v4042 = vpack.c.b16 %v2626, %v2624
        %v4043 = vpack.c.b16 %v2629, %v2627
        %v4044 = vpack.c.b16 %v2630, %v2628
        %v4045 = vpack.c.b16 %v2633, %v2631
        %v4046 = vpack.c.b16 %v2634, %v2632
        %v4047 = vpack.c.b16 %v2637, %v2635
        %v4048 = vpack.c.b16 %v2638, %v2636
        %v4049 = vpack.c.b16 %v2641, %v2639
        %v4050 = vpack.c.b16 %v2642, %v2640
        %v4051 = vpack.c.b16 %v2645, %v2643
        %v4052 = vpack.c.b16 %v2646, %v2644
        %v4053 = vpack.c.b16 %v2649, %v2647
        %v4054 = vpack.c.b16 %v2650, %v2648
        %v4055 = vpack.c.b16 %v2653, %v2651
        %v4056 = vpack.c.b16 %v2654, %v2652
        %v4057 = vpack.c.b16 %v2657, %v2655
        %v4058 = vpack.c.b16 %v2658, %v2656
        %v4059 = vpack.c.b16 %v2661, %v2659
        %v4060 = vpack.c.b16 %v2662, %v2660
        %v4061 = vpack.c.b16 %v2665, %v2663
        %v4062 = vpack.c.b16 %v2666, %v2664
        %v4063 = vpack.c.b16 %v2669, %v2667
        %v4064 = vpack.c.b16 %v2670, %v2668
        %v4065 = vpack.c.b16 %v2673, %v2671
        %v4066 = vpack.c.b16 %v2674, %v2672
        %v4067 = vpack.c.b16 %v2677, %v2675
        %v4068 = vpack.c.b16 %v2678, %v2676
        %v4069 = vpack.c.b16 %v2681, %v2679
        %v4070 = vpack.c.b16 %v2682, %v2680
        %v4071 = vpack.c.b16 %v2685, %v2683
        %v4072 = vpack.c.b16 %v2686, %v2684
        %v4073 = vpack.c.b16 %v2689, %v2687
        %v4074 = vpack.c.b16 %v2690, %v2688
        %v4075 = vpack.c.b16 %v2693, %v2691
        %v4076 = vpack.c.b16 %v2694, %v2692
        %v4077 = vpack.c.b16 %v2697, %v2695
        %v4078 = vpack.c.b16 %v2698, %v2696
        %v4079 = vpack.c.b16 %v2701, %v2699
        %v4080 = vpack.c.b16 %v2702, %v2700
        %v4081 = vpack.c.b16 %v2705, %v2703
        %v4082 = vpack.c.b16 %v2706, %v2704
        %v4083 = vpack.c.b16 %v2709, %v2707
        %v4084 = vpack.c.b16 %v2710, %v2708
        %v4085 = vpack.c.b16 %v2713, %v2711
        %v4086 = vpack.c.b16 %v2714, %v2712
        %v4087 = vpack.c.b16 %v2717, %v2715
        %v4088 = vpack.c.b16 %v2718, %v2716
        %v4089 = vpack.c.b16 %v2721, %v2719
        %v4090 = vpack.c.b16 %v2722, %v2720
        %v4091 = vpack.c.b16 %v2725, %v2723
        %v4092 = vpack.c.b16 %v2726, %v2724
        %v4093 = vpack.c.b16 %v2729, %v2727
        %v4094 = vpack.c.b16 %v2730, %v2728
        %v4095 = vpack.c.b16 %v2733, %v2731
        %v4096 = vpack.c.b16 %v2734, %v2732
        %v4097 = vpack.c.b16 %v2737, %v2735
        %v4098 = vpack.c.b16 %v2738, %v2736
        %v4099 = vpack.c.b16 %v2741, %v2739
        %v4100 = vpack.c.b16 %v2742, %v2740
        %v4101 = vpack.c.b16 %v2745, %v2743
        %v4102 = vpack.c.b16 %v2746, %v2744
        %v4103 = vpack.c.b16 %v2749, %v2747
        %v4104 = vpack.c.b16 %v2750, %v2748
        %v4105 = vpack.c.b16 %v2753, %v2751
        %v4106 = vpack.c.b16 %v2754, %v2752
        %v4107 = vpack.c.b16 %v2757, %v2755
        %v4108 = vpack.c.b16 %v2758, %v2756
        %v4109 = vpack.c.b16 %v2761, %v2759
        %v4110 = vpack.c.b16 %v2762, %v2760
        %v4111 = vpack.c.b16 %v2765, %v2763
        %v4112 = vpack.c.b16 %v2766, %v2764
        %v4113 = vpack.c.b16 %v2769, %v2767
        %v4114 = vpack.c.b16 %v2770, %v2768
        %v4115 = vpack.c.b16 %v2773, %v2771
        %v4116 = vpack.c.b16 %v2774, %v2772
        %v4117 = vpack.c.b16 %v2777, %v2775
        %v4118 = vpack.c.b16 %v2778, %v2776
        %v4119 = vpack.c.b16 %v2781, %v2779
        %v4120 = vpack.c.b16 %v2782, %v2780
        %v4121 = vpack.c.b16 %v2785, %v2783
        %v4122 = vpack.c.b16 %v2786, %v2784
        %v4123 = vpack.c.b16 %v2789, %v2787
        %v4124 = vpack.c.b16 %v2790, %v2788
        %v4125 = vpack.c.b16 %v2793, %v2791
        %v4126 = vpack.c.b16 %v2794, %v2792
        %v4127 = vpack.c.b16 %v2797, %v2795
        %v4128 = vpack.c.b16 %v2798, %v2796
        %v4129 = vpack.c.b16 %v2801, %v2799
        %v4130 = vpack.c.b16 %v2802, %v2800
        %v4131 = vpack.c.b16 %v2805, %v2803
        %v4132 = vpack.c.b16 %v2806, %v2804
        %v4133 = vpack.c.b16 %v2809, %v2807
        %v4134 = vpack.c.b16 %v2810, %v2808
        %v4135 = vpack.c.b16 %v2813, %v2811
        %v4136 = vpack.c.b16 %v2814, %v2812
        %v4137 = vpack.c.b16 %v2817, %v2815
        %v4138 = vpack.c.b16 %v2818, %v2816
        %v4139 = vpack.c.b16 %v2821, %v2819
        %v4140 = vpack.c.b16 %v2822, %v2820
        %v4141 = vpack.c.b16 %v2825, %v2823
        %v4142 = vpack.c.b16 %v2826, %v2824
        %v4143 = vpack.c.b16 %v2829, %v2827
        %v4144 = vpack.c.b16 %v2830, %v2828
        %v4145 = vpack.c.b16 %v2833, %v2831
        %v4146 = vpack.c.b16 %v2834, %v2832
        %v4147 = vpack.c.b16 %v2837, %v2835
        %v4148 = vpack.c.b16 %v2838, %v2836
        %v4149 = vpack.c.b16 %v2841, %v2839
        %v4150 = vpack.c.b16 %v2842, %v2840
        %v4151 = vpack.c.b16 %v2845, %v2843
        %v4152 = vpack.c.b16 %v2846, %v2844
        %v4153 = vpack.c.b16 %v2849, %v2847
        %v4154 = vpack.c.b16 %v2850, %v2848
        %v4155 = vpack.c.b16 %v2853, %v2851
        %v4156 = vpack.c.b16 %v2854, %v2852
        %v4157 = vpack.c.b16 %v2857, %v2855
        %v4158 = vpack.c.b16 %v2858, %v2856
        %v4159 = vpack.c.b16 %v2861, %v2859
        %v4160 = vpack.c.b16 %v2862, %v2860
        %v4161 = vpack.c.b16 %v2865, %v2863
        %v4162 = vpack.c.b16 %v2866, %v2864
        %v4163 = vpack.c.b16 %v2869, %v2867
        %v4164 = vpack.c.b16 %v2870, %v2868
        %v4165 = vpack.c.b16 %v2873, %v2871
        %v4166 = vpack.c.b16 %v2874, %v2872
        %v4167 = vpack.c.b16 %v2877, %v2875
        %v4168 = vpack.c.b16 %v2878, %v2876
        %v4169 = vpack.c.b16 %v2881, %v2879
        %v4170 = vpack.c.b16 %v2882, %v2880
        %v4171 = vpack.c.b16 %v2885, %v2883
        %v4172 = vpack.c.b16 %v2886, %v2884
        %v4173 = vpack.c.b16 %v2889, %v2887
        %v4174 = vpack.c.b16 %v2890, %v2888
        %v4175 = vpack.c.b16 %v2893, %v2891
        %v4176 = vpack.c.b16 %v2894, %v2892
        %v4177 = vpack.c.b16 %v2897, %v2895
        %v4178 = vpack.c.b16 %v2898, %v2896
        %v4179 = vpack.c.b16 %v2901, %v2899
        %v4180 = vpack.c.b16 %v2902, %v2900
        %v4181 = vpack.c.b16 %v2905, %v2903
        %v4182 = vpack.c.b16 %v2906, %v2904
        %v4183 = vpack.c.b16 %v2909, %v2907
        %v4184 = vpack.c.b16 %v2910, %v2908
        %v4185 = vpack.c.b16 %v2913, %v2911
        %v4186 = vpack.c.b16 %v2914, %v2912
        %v4187 = vpack.c.b16 %v2917, %v2915
        %v4188 = vpack.c.b16 %v2918, %v2916
        %v4189 = vpack.c.b16 %v2921, %v2919
        %v4190 = vpack.c.b16 %v2922, %v2920
        %v4191 = vpack.c.b16 %v2925, %v2923
        %v4192 = vpack.c.b16 %v2926, %v2924
        %v4193 = vpack.c.b16 %v2929, %v2927
        %v4194 = vpack.c.b16 %v2930, %v2928
        %v4195 = vpack.c.b16 %v2933, %v2931
        %v4196 = vpack.c.b16 %v2934, %v2932
        %v4197 = vpack.c.b16 %v2937, %v2935
        %v4198 = vpack.c.b16 %v2938, %v2936
        %v4199 = vpack.c.b16 %v2941, %v2939
        %v4200 = vpack.c.b16 %v2942, %v2940
        %v4201 = vpack.c.b16 %v2945, %v2943
        %v4202 = vpack.c.b16 %v2946, %v2944
        %v4203 = vpack.c.b16 %v2949, %v2947
        %v4204 = vpack.c.b16 %v2950, %v2948
        %v4205 = vpack.c.b16 %v2953, %v2951
        %v4206 = vpack.c.b16 %v2954, %v2952
        %v4207 = vpack.c.b16 %v2957, %v2955
        %v4208 = vpack.c.b16 %v2958, %v2956
        %v4209 = vpack.c.b16 %v2961, %v2959
        %v4210 = vpack.c.b16 %v2962, %v2960
        %v4211 = vpack.c.b16 %v2965, %v2963
        %v4212 = vpack.c.b16 %v2966, %v2964
        %v4213 = vpack.c.b16 %v2969, %v2967
        %v4214 = vpack.c.b16 %v2970, %v2968
        %v4215 = vpack.c.b16 %v2973, %v2971
        %v4216 = vpack.c.b16 %v2974, %v2972
        %v4217 = vpack.c.b16 %v2977, %v2975
        %v4218 = vpack.c.b16 %v2978, %v2976
        %v4219 = vpack.c.b16 %v2981, %v2979
        %v4220 = vpack.c.b16 %v2982, %v2980
        %v4221 = vpack.c.b16 %v2985, %v2983
        %v4222 = vpack.c.b16 %v2986, %v2984
        %v4223 = vpack.c.b16 %v2989, %v2987
        %v4224 = vpack.c.b16 %v2990, %v2988
        %v4225 = vpack.c.b16 %v2993, %v2991
        %v4226 = vpack.c.b16 %v2994, %v2992
        %v4227 = vpack.c.b16 %v2997, %v2995
        %v4228 = vpack.c.b16 %v2998, %v2996
        %v4229 = vpack.c.b16 %v3001, %v2999
        %v4230 = vpack.c.b16 %v3002, %v3000
        %v4231 = vpack.c.b16 %v3005, %v3003
        %v4232 = vpack.c.b16 %v3006, %v3004
        %v4233 = vpack.c.b16 %v3009, %v3007
        %v4234 = vpack.c.b16 %v3010, %v3008
        %v4235 = vpack.c.b16 %v3013, %v3011
        %v4236 = vpack.c.b16 %v3014, %v3012
        %v4237 = vpack.c.b16 %v3017, %v3015
        %v4238 = vpack.c.b16 %v3018, %v3016
        %v4239 = vpack.c.b16 %v3021, %v3019
        %v4240 = vpack.c.b16 %v3022, %v3020
        %v4241 = vpack.c.b16 %v3025, %v3023
        %v4242 = vpack.c.b16 %v3026, %v3024
        %v4243 = vpack.c.b16 %v3029, %v3027
        %v4244 = vpack.c.b16 %v3030, %v3028
        %v4245 = vpack.c.b16 %v3033, %v3031
        %v4246 = vpack.c.b16 %v3034, %v3032
        %v4247 = vpack.c.b16 %v3037, %v3035
        %v4248 = vpack.c.b16 %v3038, %v3036
        %v4249 = vpack.c.b16 %v3041, %v3039
        %v4250 = vpack.c.b16 %v3042, %v3040
        %v4251 = vpack.c.b16 %v3045, %v3043
        %v4252 = vpack.c.b16 %v3046, %v3044
        %v4253 = vpack.c.b16 %v3049, %v3047
        %v4254 = vpack.c.b16 %v3050, %v3048
        %v4255 = vpack.c.b16 %v3053, %v3051
        %v4256 = vpack.c.b16 %v3054, %v3052
        %v4257 = vpack.c.b16 %v3057, %v3055
        %v4258 = vpack.c.b16 %v3058, %v3056
        %v4259 = vpack.c.b16 %v3061, %v3059
        %v4260 = vpack.c.b16 %v3062, %v3060
        %v4261 = vpack.c.b16 %v3065, %v3063
        %v4262 = vpack.c.b16 %v3066, %v3064
        %v4263 = vpack.c.b16 %v3069, %v3067
        %v4264 = vpack.c.b16 %v3070, %v3068
        %v4265 = vpack.c.b16 %v3073, %v3071
        %v4266 = vpack.c.b16 %v3074, %v3072
        %v4267 = vpack.c.b16 %v3077, %v3075
        %v4268 = vpack.c.b16 %v3078, %v3076
        %v4269 = vpack.c.b16 %v3081, %v3079
        %v4270 = vpack.c.b16 %v3082, %v3080
        %v4271 = vpack.c.b16 %v3085, %v3083
        %v4272 = vpack.c.b16 %v3086, %v3084
        %v4273 = vpack.c.b16 %v3089, %v3087
        %v4274 = vpack.c.b16 %v3090, %v3088
        %v4275 = vpack.c.b16 %v3093, %v3091
        %v4276 = vpack.c.b16 %v3094, %v3092
        %v4277 = vpack.c.b16 %v3097, %v3095
        %v4278 = vpack.c.b16 %v3098, %v3096
        %v4279 = vpack.c.b16 %v3101, %v3099
        %v4280 = vpack.c.b16 %v3102, %v3100
        %v4281 = vpack.c.b16 %v3105, %v3103
        %v4282 = vpack.c.b16 %v3106, %v3104
        %v4283 = vpack.c.b16 %v3109, %v3107
        %v4284 = vpack.c.b16 %v3110, %v3108
        %v4285 = vpack.c.b16 %v3113, %v3111
        %v4286 = vpack.c.b16 %v3114, %v3112
        %v4287 = vpack.c.b16 %v3117, %v3115
        %v4288 = vpack.c.b16 %v3118, %v3116
        %v4289 = vpack.c.b16 %v3121, %v3119
        %v4290 = vpack.c.b16 %v3122, %v3120
        %v4291 = vpack.c.b16 %v3125, %v3123
        %v4292 = vpack.c.b16 %v3126, %v3124
        %v4293 = vpack.c.b16 %v3129, %v3127
        %v4294 = vpack.c.b16 %v3130, %v3128
        %v4295 = vpack.c.b16 %v3133, %v3131
        %v4296 = vpack.c.b16 %v3134, %v3132
        %v4297 = vpack.c.b16 %v3137, %v3135
        %v4298 = vpack.c.b16 %v3138, %v3136
        %v4299 = vpack.c.b16 %v3141, %v3139
        %v4300 = vpack.c.b16 %v3142, %v3140
        %v4301 = vpack.c.b16 %v3145, %v3143
        %v4302 = vpack.c.b16 %v3146, %v3144
        %v4303 = vpack.c.b16 %v3149, %v3147
        %v4304 = vpack.c.b16 %v3150, %v3148
        %v4305 = vpack.c.b16 %v3153, %v3151
        %v4306 = vpack.c.b16 %v3154, %v3152
        %v4307 = vpack.c.b16 %v3157, %v3155
        %v4308 = vpack.c.b16 %v3158, %v3156
        %v4309 = vpack.c.b16 %v3161, %v3159
        %v4310 = vpack.c.b16 %v3162, %v3160
        %v4311 = vpack.c.b16 %v3165, %v3163
        %v4312 = vpack.c.b16 %v3166, %v3164
        %v4313 = vpack.c.b16 %v3169, %v3167
        %v4314 = vpack.c.b16 %v3170, %v3168
        %v4315 = vpack.c.b16 %v3173, %v3171
        %v4316 = vpack.c.b16 %v3174, %v3172
        %v4317 = vpack.c.b16 %v3177, %v3175
        %v4318 = vpack.c.b16 %v3178, %v3176
        %v4319 = vpack.c.b16 %v3181, %v3179
        %v4320 = vpack.c.b16 %v3182, %v3180
        %v4321 = vpack.c.b16 %v3185, %v3183
        %v4322 = vpack.c.b16 %v3186, %v3184
        %v4323 = vpack.c.b16 %v3189, %v3187
        %v4324 = vpack.c.b16 %v3190, %v3188
        %v4325 = vpack.c.b16 %v3193, %v3191
        %v4326 = vpack.c.b16 %v3194, %v3192
        %v4327 = vpack.c.b16 %v3197, %v3195
        %v4328 = vpack.c.b16 %v3198, %v3196
        %v4329 = vpack.c.b16 %v3201, %v3199
        %v4330 = vpack.c.b16 %v3202, %v3200
        %v4331 = vpack.c.b16 %v3205, %v3203
        %v4332 = vpack.c.b16 %v3206, %v3204
        %v4333 = vpack.c.b16 %v3209, %v3207
        %v4334 = vpack.c.b16 %v3210, %v3208
        %v4335 = vpack.c.b16 %v3213, %v3211
        %v4336 = vpack.c.b16 %v3214, %v3212
        %v4337 = vpack.c.b16 %v3217, %v3215
        %v4338 = vpack.c.b16 %v3218, %v3216
        %v4339 = vpack.c.b16 %v3221, %v3219
        %v4340 = vpack.c.b16 %v3222, %v3220
        %v4341 = vpack.c.b16 %v3225, %v3223
        %v4342 = vpack.c.b16 %v3226, %v3224
        %v4343 = vpack.c.b16 %v3229, %v3227
        %v4344 = vpack.c.b16 %v3230, %v3228
        %v4345 = vpack.c.b16 %v3233, %v3231
        %v4346 = vpack.c.b16 %v3234, %v3232
        %v4347 = vpack.c.b16 %v3237, %v3235
        %v4348 = vpack.c.b16 %v3238, %v3236
        %v4349 = vpack.c.b16 %v3241, %v3239
        %v4350 = vpack.c.b16 %v3242, %v3240
        %v4351 = vpack.c.b16 %v3245, %v3243
        %v4352 = vpack.c.b16 %v3246, %v3244
        %v4353 = vpack.c.b16 %v3249, %v3247
        %v4354 = vpack.c.b16 %v3250, %v3248
        %v4355 = vpack.c.b16 %v3253, %v3251
        %v4356 = vpack.c.b16 %v3254, %v3252
        %v4357 = vpack.c.b16 %v3257, %v3255
        %v4358 = vpack.c.b16 %v3258, %v3256
        %v4359 = vpack.c.b16 %v3261, %v3259
        %v4360 = vpack.c.b16 %v3262, %v3260
        %v4361 = vpack.c.b16 %v3265, %v3263
        %v4362 = vpack.c.b16 %v3266, %v3264
        %v4363 = vpack.c.b16 %v3269, %v3267
        %v4364 = vpack.c.b16 %v3270, %v3268
        %v4365 = vpack.c.b16 %v3273, %v3271
        %v4366 = vpack.c.b16 %v3274, %v3272
        %v4367 = vpack.c.b16 %v3277, %v3275
        %v4368 = vpack.c.b16 %v3278, %v3276
        %v4369 = vpack.c.b16 %v3281, %v3279
        %v4370 = vpack.c.b16 %v3282, %v3280
        %v4371 = vpack.c.b16 %v3285, %v3283
        %v4372 = vpack.c.b16 %v3286, %v3284
        %v4373 = vpack.c.b16 %v3289, %v3287
        %v4374 = vpack.c.b16 %v3290, %v3288
        %v4375 = vpack.c.b16 %v3293, %v3291
        %v4376 = vpack.c.b16 %v3294, %v3292
        %v4377 = vpack.c.b16 %v3297, %v3295
        %v4378 = vpack.c.b16 %v3298, %v3296
        %v4379 = vpack.c.b16 %v3301, %v3299
        %v4380 = vpack.c.b16 %v3302, %v3300
        %v4381 = vpack.c.b16 %v3305, %v3303
        %v4382 = vpack.c.b16 %v3306, %v3304
        %v4383 = vpack.c.b16 %v3309, %v3307
        %v4384 = vpack.c.b16 %v3310, %v3308
        %v4385 = vpack.c.b16 %v3313, %v3311
        %v4386 = vpack.c.b16 %v3314, %v3312
        %v4387 = vpack.c.b16 %v3317, %v3315
        %v4388 = vpack.c.b16 %v3318, %v3316
        %v4389 = vpack.c.b16 %v3321, %v3319
        %v4390 = vpack.c.b16 %v3322, %v3320
        %v4391 = vpack.c.b16 %v3325, %v3323
        %v4392 = vpack.c.b16 %v3326, %v3324
        %v4393 = vpack.c.b16 %v3329, %v3327
        %v4394 = vpack.c.b16 %v3330, %v3328
        %v4395 = vpack.c.b16 %v3333, %v3331
        %v4396 = vpack.c.b16 %v3334, %v3332
        %v4397 = vpack.c.b16 %v3337, %v3335
        %v4398 = vpack.c.b16 %v3338, %v3336
        %v4399 = vpack.c.b16 %v3341, %v3339
        %v4400 = vpack.c.b16 %v3342, %v3340
        %v4401 = vpack.c.b16 %v3345, %v3343
        %v4402 = vpack.c.b16 %v3346, %v3344
        %v4403 = vpack.c.b16 %v3349, %v3347
        %v4404 = vpack.c.b16 %v3350, %v3348
        %v4405 = vpack.c.b16 %v3353, %v3351
        %v4406 = vpack.c.b16 %v3354, %v3352
        %v4407 = vpack.c.b16 %v3357, %v3355
        %v4408 = vpack.c.b16 %v3358, %v3356
        %v4409 = vpack.c.b16 %v3361, %v3359
        %v4410 = vpack.c.b16 %v3362, %v3360
        %v4411 = vpack.c.b16 %v3365, %v3363
        %v4412 = vpack.c.b16 %v3366, %v3364
        %v4413 = vpack.c.b16 %v3369, %v3367
        %v4414 = vpack.c.b16 %v3370, %v3368
        %v4415 = vpack.c.b16 %v3373, %v3371
        %v4416 = vpack.c.b16 %v3374, %v3372
        %v4417 = vpack.c.b16 %v3377, %v3375
        %v4418 = vpack.c.b16 %v3378, %v3376
        %v4419 = vpack.c.b16 %v3381, %v3379
        %v4420 = vpack.c.b16 %v3382, %v3380
        %v4421 = vpack.c.b16 %v3385, %v3383
        %v4422 = vpack.c.b16 %v3386, %v3384
        %v4423 = vpack.c.b16 %v3389, %v3387
        %v4424 = vpack.c.b16 %v3390, %v3388
        %v4425 = vpack.c.b16 %v3393, %v3391
        %v4426 = vpack.c.b16 %v3394, %v3392
        %v4427 = vpack.c.b16 %v3397, %v3395
        %v4428 = vpack.c.b16 %v3398, %v3396
        %v4429 = vpack.c.b16 %v3401, %v3399
        %v4430 = vpack.c.b16 %v3402, %v3400
        %v4431 = vpack.c.b16 %v3405, %v3403
        %v4432 = vpack.c.b16 %v3406, %v3404
        %v4433 = vpack.c.b16 %v3409, %v3407
        %v4434 = vpack.c.b16 %v3410, %v3408
        %v4435 = vpack.c.b16 %v3413, %v3411
        %v4436 = vpack.c.b16 %v3414, %v3412
        %v4437 = vpack.c.b16 %v3417, %v3415
        %v4438 = vpack.c.b16 %v3418, %v3416
        %v4439 = vpack.c.b16 %v3421, %v3419
        %v4440 = vpack.c.b16 %v3422, %v3420
        %v4441 = vpack.c.b16 %v3425, %v3423
        %v4442 = vpack.c.b16 %v3426, %v3424
        %v4443 = vpack.c.b16 %v3429, %v3427
        %v4444 = vpack.c.b16 %v3430, %v3428
        %v4445 = vpack.c.b16 %v3433, %v3431
        %v4446 = vpack.c.b16 %v3434, %v3432
        %v4447 = vpack.c.b16 %v3437, %v3435
        %v4448 = vpack.c.b16 %v3438, %v3436
        %v4449 = vpack.c.b16 %v3441, %v3439
        %v4450 = vpack.c.b16 %v3442, %v3440
        %v4451 = vpack.c.b16 %v3445, %v3443
        %v4452 = vpack.c.b16 %v3446, %v3444
        %v4453 = vpack.c.b16 %v3449, %v3447
        %v4454 = vpack.c.b16 %v3450, %v3448
        %v4455 = vpack.c.b16 %v3453, %v3451
        %v4456 = vpack.c.b16 %v3454, %v3452
        %v4457 = vpack.c.b16 %v3457, %v3455
        %v4458 = vpack.c.b16 %v3458, %v3456
        %v4459 = vpack.c.b16 %v3461, %v3459
        %v4460 = vpack.c.b16 %v3462, %v3460
        %v4461 = vpack.c.b16 %v3465, %v3463
        %v4462 = vpack.c.b16 %v3466, %v3464
        %v4463 = vpack.c.b16 %v3469, %v3467
        %v4464 = vpack.c.b16 %v3470, %v3468
        %v4465 = vpack.c.b16 %v3473, %v3471
        %v4466 = vpack.c.b16 %v3474, %v3472
        %v4467 = vpack.c.b16 %v3477, %v3475
        %v4468 = vpack.c.b16 %v3478, %v3476
        %v4469 = vpack.c.b16 %v3481, %v3479
        %v4470 = vpack.c.b16 %v3482, %v3480
        %v4471 = vpack.c.b16 %v3485, %v3483
        %v4472 = vpack.c.b16 %v3486, %v3484
        %v4473 = vpack.c.b16 %v3489, %v3487
        %v4474 = vpack.c.b16 %v3490, %v3488
        %v4475 = vpack.c.b16 %v3493, %v3491
        %v4476 = vpack.c.b16 %v3494, %v3492
        %v4477 = vpack.c.b16 %v3497, %v3495
        %v4478 = vpack.c.b16 %v3498, %v3496
        %v4479 = vpack.c.b16 %v3501, %v3499
        %v4480 = vpack.c.b16 %v3502, %v3500
        %v4481 = vpack.c.b16 %v3505, %v3503
        %v4482 = vpack.c.b16 %v3506, %v3504
        %v4483 = vpack.c.b16 %v3509, %v3507
        %v4484 = vpack.c.b16 %v3510, %v3508
        %v4485 = vpack.c.b16 %v3513, %v3511
        %v4486 = vpack.c.b16 %v3514, %v3512
        %v4487 = vpack.c.b16 %v3517, %v3515
        %v4488 = vpack.c.b16 %v3518, %v3516
        %v4489 = vpack.c.b16 %v3521, %v3519
        %v4490 = vpack.c.b16 %v3522, %v3520
        %v4491 = vpack.c.b16 %v3525, %v3523
        %v4492 = vpack.c.b16 %v3526, %v3524
        %v4493 = vpack.c.b16 %v3529, %v3527
        %v4494 = vpack.c.b16 %v3530, %v3528
        %v4495 = vpack.c.b16 %v3533, %v3531
        %v4496 = vpack.c.b16 %v3534, %v3532
        %v4497 = vpack.c.b16 %v3537, %v3535
        %v4498 = vpack.c.b16 %v3538, %v3536
        %v4499 = vpack.c.b16 %v3541, %v3539
        %v4500 = vpack.c.b16 %v3542, %v3540
        %v4501 = vpack.c.b16 %v3545, %v3543
        %v4502 = vpack.c.b16 %v3546, %v3544
        %v4503 = vpack.c.b16 %v3549, %v3547
        %v4504 = vpack.c.b16 %v3550, %v3548
        %v4505 = vpack.c.b16 %v3553, %v3551
        %v4506 = vpack.c.b16 %v3554, %v3552
        %v4507 = vpack.c.b16 %v3557, %v3555
        %v4508 = vpack.c.b16 %v3558, %v3556
        %v4509 = vpack.c.b16 %v3561, %v3559
        %v4510 = vpack.c.b16 %v3562, %v3560
        %v4511 = vpack.c.b16 %v3565, %v3563
        %v4512 = vpack.c.b16 %v3566, %v3564
        %v4513 = vpack.c.b16 %v3569, %v3567
        %v4514 = vpack.c.b16 %v3570, %v3568
        %v4515 = vpack.c.b16 %v3573, %v3571
        %v4516 = vpack.c.b16 %v3574, %v3572
        %v4517 = vpack.c.b16 %v3577, %v3575
        %v4518 = vpack.c.b16 %v3578, %v3576
        %v4519 = vpack.c.b16 %v3581, %v3579
        %v4520 = vpack.c.b16 %v3582, %v3580
        %v4521 = vpack.c.b16 %v3585, %v3583
        %v4522 = vpack.c.b16 %v3586, %v3584
        %v4523 = vpack.c.b16 %v3589, %v3587
        %v4524 = vpack.c.b16 %v3590, %v3588
        %v4525 = vpack.c.b16 %v3593, %v3591
        %v4526 = vpack.c.b16 %v3594, %v3592
        %v4527 = vpack.c.b16 %v3597, %v3595
        %v4528 = vpack.c.b16 %v3598, %v3596
        %v4529 = vpack.c.b16 %v3601, %v3599
        %v4530 = vpack.c.b16 %v3602, %v3600
        %v4531 = vpack.c.b16 %v3605, %v3603
        %v4532 = vpack.c.b16 %v3606, %v3604
        %v4533 = vpack.c.b16 %v3609, %v3607
        %v4534 = vpack.c.b16 %v3610, %v3608
        %v4535 = vpack.c.b16 %v3613, %v3611
        %v4536 = vpack.c.b16 %v3614, %v3612
        %v4537 = vpack.c.b16 %v3617, %v3615
        %v4538 = vpack.c.b16 %v3618, %v3616
        %v4539 = vpack.c.b16 %v3621, %v3619
        %v4540 = vpack.c.b16 %v3622, %v3620
        %v4541 = vpack.c.b16 %v3625, %v3623
        %v4542 = vpack.c.b16 %v3626, %v3624
        %v4543 = vpack.c.b16 %v3629, %v3627
        %v4544 = vpack.c.b16 %v3630, %v3628
        %v4545 = vpack.c.b16 %v3633, %v3631
        %v4546 = vpack.c.b16 %v3634, %v3632
        %v4547 = vpack.c.b16 %v3637, %v3635
        %v4548 = vpack.c.b16 %v3638, %v3636
        %v4549 = vpack.c.b16 %v3641, %v3639
        %v4550 = vpack.c.b16 %v3642, %v3640
        %v4551 = vpack.c.b16 %v3645, %v3643
        %v4552 = vpack.c.b16 %v3646, %v3644
        %v4553 = vpack.c.b16 %v3649, %v3647
        %v4554 = vpack.c.b16 %v3650, %v3648
        %v4555 = vpack.c.b16 %v3653, %v3651
        %v4556 = vpack.c.b16 %v3654, %v3652
        %v4557 = vpack.c.b16 %v3657, %v3655
        %v4558 = vpack.c.b16 %v3658, %v3656
        %v4559 = vpack.c.b16 %v3661, %v3659
        %v4560 = vpack.c.b16 %v3662, %v3660
        %v4561 = vpack.c.b16 %v3665, %v3663
        %v4562 = vpack.c.b16 %v3666, %v3664
        %v4563 = vpack.c.b16 %v3669, %v3667
        %v4564 = vpack.c.b16 %v3670, %v3668
        %v4565 = vpack.c.b16 %v3673, %v3671
        %v4566 = vpack.c.b16 %v3674, %v3672
        %v4567 = vpack.c.b16 %v3677, %v3675
        %v4568 = vpack.c.b16 %v3678, %v3676
        %v4569 = vpack.c.b16 %v3681, %v3679
        %v4570 = vpack.c.b16 %v3682, %v3680
        %v4571 = vpack.c.b16 %v3685, %v3683
        %v4572 = vpack.c.b16 %v3686, %v3684
        %v4573 = vpack.c.b16 %v3689, %v3687
        %v4574 = vpack.c.b16 %v3690, %v3688
        %v4575 = vpack.c.b16 %v3693, %v3691
        %v4576 = vpack.c.b16 %v3694, %v3692
        %v4577 = vpack.c.b16 %v3697, %v3695
        %v4578 = vpack.c.b16 %v3698, %v3696
        %v4579 = vpack.c.b16 %v3701, %v3699
        %v4580 = vpack.c.b16 %v3702, %v3700
        %v4581 = vpack.c.b16 %v3705, %v3703
        %v4582 = vpack.c.b16 %v3706, %v3704
        %v4583 = vpack.c.b16 %v3709, %v3707
        %v4584 = vpack.c.b16 %v3710, %v3708
        %v4585 = vpack.c.b16 %v3713, %v3711
        %v4586 = vpack.c.b16 %v3714, %v3712
        %v4587 = vpack.c.b16 %v3717, %v3715
        %v4588 = vpack.c.b16 %v3718, %v3716
        %v4589 = vpack.c.b16 %v3721, %v3719
        %v4590 = vpack.c.b16 %v3722, %v3720
        %v4591 = vpack.c.b16 %v3725, %v3723
        %v4592 = vpack.c.b16 %v3726, %v3724
        %v4593 = vpack.c.b16 %v3729, %v3727
        %v4594 = vpack.c.b16 %v3730, %v3728
        %v4595 = vpack.c.b16 %v3733, %v3731
        %v4596 = vpack.c.b16 %v3734, %v3732
        %v4597 = vpack.c.b16 %v3737, %v3735
        %v4598 = vpack.c.b16 %v3738, %v3736
        %v4599 = vpack.c.b16 %v3741, %v3739
        %v4600 = vpack.c.b16 %v3742, %v3740
        %v4601 = vpack.c.b16 %v3745, %v3743
        %v4602 = vpack.c.b16 %v3746, %v3744
        %v4603 = vpack.c.b16 %v3749, %v3747
        %v4604 = vpack.c.b16 %v3750, %v3748
        %v4605 = vpack.c.b16 %v3753, %v3751
        %v4606 = vpack.c.b16 %v3754, %v3752
        %v4607 = vpack.c.b16 %v3757, %v3755
        %v4608 = vpack.c.b16 %v3758, %v3756
        %v4609 = vpack.c.b16 %v3761, %v3759
        %v4610 = vpack.c.b16 %v3762, %v3760
        %v4611 = vpack.c.b16 %v3765, %v3763
        %v4612 = vpack.c.b16 %v3766, %v3764
        %v4613 = vpack.c.b16 %v3769, %v3767
        %v4614 = vpack.c.b16 %v3770, %v3768
        %v4615 = vpack.c.b16 %v3773, %v3771
        %v4616 = vpack.c.b16 %v3774, %v3772
        %v4617 = vpack.c.b16 %v3777, %v3775
        %v4618 = vpack.c.b16 %v3778, %v3776
        %v4619 = vpack.c.b16 %v3781, %v3779
        %v4620 = vpack.c.b16 %v3782, %v3780
        %v4621 = vpack.c.b16 %v3785, %v3783
        %v4622 = vpack.c.b16 %v3786, %v3784
        %v4623 = vpack.c.b16 %v3789, %v3787
        %v4624 = vpack.c.b16 %v3790, %v3788
        %v4625 = vpack.c.b16 %v3793, %v3791
        %v4626 = vpack.c.b16 %v3794, %v3792
        %v4627 = vpack.c.b16 %v3797, %v3795
        %v4628 = vpack.c.b16 %v3798, %v3796
        %v4629 = vpack.c.b16 %v3801, %v3799
        %v4630 = vpack.c.b16 %v3802, %v3800
        %v4631 = vpack.c.b16 %v3805, %v3803
        %v4632 = vpack.c.b16 %v3806, %v3804
        %v4633 = vpack.c.b16 %v3809, %v3807
        %v4634 = vpack.c.b16 %v3810, %v3808
        %v4635 = vpack.c.b16 %v3813, %v3811
        %v4636 = vpack.c.b16 %v3814, %v3812
        %v4637 = vpack.c.b16 %v3817, %v3815
        %v4638 = vpack.c.b16 %v3818, %v3816
        %v4639 = vpack.c.b16 %v3821, %v3819
        %v4640 = vpack.c.b16 %v3822, %v3820
        %v4641 = vpack.c.b16 %v3825, %v3823
        %v4642 = vpack.c.b16 %v3826, %v3824
        %v4643 = vpack.c.b16 %v3829, %v3827
        %v4644 = vpack.c.b16 %v3830, %v3828
        %v4645 = vpack.c.b16 %v3833, %v3831
        %v4646 = vpack.c.b16 %v3834, %v3832
        %v4647 = vpack.c.b16 %v3837, %v3835
        %v4648 = vpack.c.b16 %v3838, %v3836
        %v4649 = vpack.c.b16 %v3841, %v3839
        %v4650 = vpack.c.b16 %v3842, %v3840
        %v4651 = vpack.c.b16 %v3845, %v3843
        %v4652 = vpack.c.b16 %v3846, %v3844
        %v4653 = vpack.c.b16 %v3849, %v3847
        %v4654 = vpack.c.b16 %v3850, %v3848
        %v4655 = vpack.c.b16 %v3853, %v3851
        %v4656 = vpack.c.b16 %v3854, %v3852
        %v4657 = vpack.c.b16 %v3857, %v3855
        %v4658 = vpack.c.b16 %v3858, %v3856
        %5459 = vmatprep.subr.bf16.mxu0 %v3874
        %5460 = vmatpush1.bf16.msra.mxu0 %v3873
        %5461 = vmatprep.subr.bf16.mxu0 %v3872
        %5462 = vmatpush1.bf16.msra.mxu0 %v3871
        %5463 = vmatprep.subr.bf16.mxu0 %v3870
        %5464 = vmatpush1.bf16.msra.mxu0 %v3869
        %5465 = vmatprep.subr.bf16.mxu0 %v3868
        %5466 = vmatpush1.bf16.msra.mxu0 %v3867
        %5467 = vmatprep.subr.bf16.mxu0 %v3866
        %5468 = vmatpush1.bf16.msra.mxu0 %v3865
        %5469 = vmatprep.subr.bf16.mxu0 %v3864
        %5470 = vmatpush1.bf16.msra.mxu0 %v3863
        %5471 = vmatprep.subr.bf16.mxu0 %v3862
        %5472 = vmatpush1.bf16.msra.mxu0 %v3861
        %5473 = vmatprep.subr.bf16.mxu0 %v3860
        %5474 = vmatpush1.bf16.msra.mxu0 %v3859
        %5475 = vmatprep.subr.bf16.mxu0 %v3890
        %5476 = vmatpush2.bf16.msra.mxu0 %v3889
        %5477 = vmatprep.subr.bf16.mxu0 %v3888
        %5478 = vmatpush2.bf16.msra.mxu0 %v3887
        %5479 = vmatprep.subr.bf16.mxu0 %v3886
        %5480 = vmatpush2.bf16.msra.mxu0 %v3885
        %5481 = vmatprep.subr.bf16.mxu0 %v3884
        %5482 = vmatpush2.bf16.msra.mxu0 %v3883
        %5483 = vmatprep.subr.bf16.mxu0 %v3882
        %5484 = vmatpush2.bf16.msra.mxu0 %v3881
        %5485 = vmatprep.subr.bf16.mxu0 %v3880
        %5486 = vmatpush2.bf16.msra.mxu0 %v3879
        %5487 = vmatprep.subr.bf16.mxu0 %v3878
        %5488 = vmatpush2.bf16.msra.mxu0 %v3877
        %5489 = vmatprep.subr.bf16.mxu0 %v3876
        %5490 = vmatpush2.bf16.msra.mxu0 %v3875
        %5491 = vmatprep.mubr.bf16.mxu0 %v1130
        %5492 = vmatmul.mubr.bf16.gmra.mxu0 %v1116
        %v5493 = vpop.f32.mrf.mxu0
        %v5494 = vadd.f32 %v1079, %v5493
        %v5495 = vpop.f32.mrf.mxu0
        %v5496 = vadd.f32 %v1083, %v5495
        %v5497 = vpop.f32.mrf.mxu0
        %v5498 = vpop.f32.mrf.mxu0
        %5499 = vdwg.mxu0
        %5500 = vmatprep.subr.bf16.mxu0 %v3906
        %5501 = vmatpush1.bf16.msra.mxu0 %v3905
        %5502 = vmatprep.subr.bf16.mxu0 %v3904
        %5503 = vmatpush1.bf16.msra.mxu0 %v3903
        %5504 = vmatprep.subr.bf16.mxu0 %v3902
        %5505 = vmatpush1.bf16.msra.mxu0 %v3901
        %5506 = vmatprep.subr.bf16.mxu0 %v3900
        %5507 = vmatpush1.bf16.msra.mxu0 %v3899
        %5508 = vmatprep.subr.bf16.mxu0 %v3898
        %5509 = vmatpush1.bf16.msra.mxu0 %v3897
        %5510 = vmatprep.subr.bf16.mxu0 %v3896
        %5511 = vmatpush1.bf16.msra.mxu0 %v3895
        %5512 = vmatprep.subr.bf16.mxu0 %v3894
        %5513 = vmatpush1.bf16.msra.mxu0 %v3893
        %5514 = vmatprep.subr.bf16.mxu0 %v3892
        %5515 = vmatpush1.bf16.msra.mxu0 %v3891
        %5516 = vmatprep.subr.bf16.mxu0 %v3922
        %5517 = vmatpush2.bf16.msra.mxu0 %v3921
        %5518 = vmatprep.subr.bf16.mxu0 %v3920
        %5519 = vmatpush2.bf16.msra.mxu0 %v3919
        %5520 = vmatprep.subr.bf16.mxu0 %v3918
        %5521 = vmatpush2.bf16.msra.mxu0 %v3917
        %5522 = vmatprep.subr.bf16.mxu0 %v3916
        %5523 = vmatpush2.bf16.msra.mxu0 %v3915
        %5524 = vmatprep.subr.bf16.mxu0 %v3914
        %5525 = vmatpush2.bf16.msra.mxu0 %v3913
        %5526 = vmatprep.subr.bf16.mxu0 %v3912
        %5527 = vmatpush2.bf16.msra.mxu0 %v3911
        %5528 = vmatprep.subr.bf16.mxu0 %v3910
        %5529 = vmatpush2.bf16.msra.mxu0 %v3909
        %5530 = vmatprep.subr.bf16.mxu0 %v3908
        %5531 = vmatpush2.bf16.msra.mxu0 %v3907
        %5532 = vmatprep.mubr.bf16.mxu0 %v1140
        %5533 = vmatmul.mubr.bf16.gmra.mxu0 %v1138
        %v5534 = vpop.f32.mrf.mxu0
        %v5535 = vadd.f32 %v5494, %v5534
        %v5536 = vpop.f32.mrf.mxu0
        %v5537 = vadd.f32 %v5496, %v5536
        %v5538 = vpop.f32.mrf.mxu0
        %v5539 = vpop.f32.mrf.mxu0
        %5540 = vdwg.mxu0
        %5541 = vmatprep.subr.bf16.mxu0 %v3938
        %5542 = vmatpush1.bf16.msra.mxu0 %v3937
        %5543 = vmatprep.subr.bf16.mxu0 %v3936
        %5544 = vmatpush1.bf16.msra.mxu0 %v3935
        %5545 = vmatprep.subr.bf16.mxu0 %v3934
        %5546 = vmatpush1.bf16.msra.mxu0 %v3933
        %5547 = vmatprep.subr.bf16.mxu0 %v3932
        %5548 = vmatpush1.bf16.msra.mxu0 %v3931
        %5549 = vmatprep.subr.bf16.mxu0 %v3930
        %5550 = vmatpush1.bf16.msra.mxu0 %v3929
        %5551 = vmatprep.subr.bf16.mxu0 %v3928
        %5552 = vmatpush1.bf16.msra.mxu0 %v3927
        %5553 = vmatprep.subr.bf16.mxu0 %v3926
        %5554 = vmatpush1.bf16.msra.mxu0 %v3925
        %5555 = vmatprep.subr.bf16.mxu0 %v3924
        %5556 = vmatpush1.bf16.msra.mxu0 %v3923
        %5557 = vmatprep.subr.bf16.mxu0 %v3954
        %5558 = vmatpush2.bf16.msra.mxu0 %v3953
        %5559 = vmatprep.subr.bf16.mxu0 %v3952
        %5560 = vmatpush2.bf16.msra.mxu0 %v3951
        %5561 = vmatprep.subr.bf16.mxu0 %v3950
        %5562 = vmatpush2.bf16.msra.mxu0 %v3949
        %5563 = vmatprep.subr.bf16.mxu0 %v3948
        %5564 = vmatpush2.bf16.msra.mxu0 %v3947
        %5565 = vmatprep.subr.bf16.mxu0 %v3946
        %5566 = vmatpush2.bf16.msra.mxu0 %v3945
        %5567 = vmatprep.subr.bf16.mxu0 %v3944
        %5568 = vmatpush2.bf16.msra.mxu0 %v3943
        %5569 = vmatprep.subr.bf16.mxu0 %v3942
        %5570 = vmatpush2.bf16.msra.mxu0 %v3941
        %5571 = vmatprep.subr.bf16.mxu0 %v3940
        %5572 = vmatpush2.bf16.msra.mxu0 %v3939
        %5573 = vmatprep.mubr.bf16.mxu0 %v1137
        %5574 = vmatmul.mubr.bf16.gmra.mxu0 %v1123
        %v5575 = vpop.f32.mrf.mxu0
        %v5576 = vadd.f32 %v5535, %v5575
        %v5577 = vpop.f32.mrf.mxu0
        %v5578 = vadd.f32 %v5537, %v5577
        %v5579 = vpop.f32.mrf.mxu0
        %v5580 = vpop.f32.mrf.mxu0
        %5581 = vdwg.mxu0
        %5582 = vmatprep.subr.bf16.mxu0 %v3970
        %5583 = vmatpush1.bf16.msra.mxu0 %v3969
        %5584 = vmatprep.subr.bf16.mxu0 %v3968
        %5585 = vmatpush1.bf16.msra.mxu0 %v3967
        %5586 = vmatprep.subr.bf16.mxu0 %v3966
        %5587 = vmatpush1.bf16.msra.mxu0 %v3965
        %5588 = vmatprep.subr.bf16.mxu0 %v3964
        %5589 = vmatpush1.bf16.msra.mxu0 %v3963
        %5590 = vmatprep.subr.bf16.mxu0 %v3962
        %5591 = vmatpush1.bf16.msra.mxu0 %v3961
        %5592 = vmatprep.subr.bf16.mxu0 %v3960
        %5593 = vmatpush1.bf16.msra.mxu0 %v3959
        %5594 = vmatprep.subr.bf16.mxu0 %v3958
        %5595 = vmatpush1.bf16.msra.mxu0 %v3957
        %5596 = vmatprep.subr.bf16.mxu0 %v3956
        %5597 = vmatpush1.bf16.msra.mxu0 %v3955
        %5598 = vmatprep.subr.bf16.mxu0 %v3986
        %5599 = vmatpush2.bf16.msra.mxu0 %v3985
        %5600 = vmatprep.subr.bf16.mxu0 %v3984
        %5601 = vmatpush2.bf16.msra.mxu0 %v3983
        %5602 = vmatprep.subr.bf16.mxu0 %v3982
        %5603 = vmatpush2.bf16.msra.mxu0 %v3981
        %5604 = vmatprep.subr.bf16.mxu0 %v3980
        %5605 = vmatpush2.bf16.msra.mxu0 %v3979
        %5606 = vmatprep.subr.bf16.mxu0 %v3978
        %5607 = vmatpush2.bf16.msra.mxu0 %v3977
        %5608 = vmatprep.subr.bf16.mxu0 %v3976
        %5609 = vmatpush2.bf16.msra.mxu0 %v3975
        %5610 = vmatprep.subr.bf16.mxu0 %v3974
        %5611 = vmatpush2.bf16.msra.mxu0 %v3973
        %5612 = vmatprep.subr.bf16.mxu0 %v3972
        %5613 = vmatpush2.bf16.msra.mxu0 %v3971
        %5614 = vmatprep.mubr.bf16.mxu0 %v1141
        %5615 = vmatmul.mubr.bf16.gmra.mxu0 %v1139
        %v5616 = vpop.f32.mrf.mxu0
        %v5617 = vadd.f32 %v5576, %v5616
        %v5618 = vpop.f32.mrf.mxu0
        %v5619 = vadd.f32 %v5578, %v5618
        %v5620 = vpop.f32.mrf.mxu0
        %v5621 = vpop.f32.mrf.mxu0
        %5622 = vdwg.mxu0
        %5623 = vmatprep.subr.bf16.mxu0 %v4002
        %5624 = vmatpush1.bf16.msra.mxu0 %v4001
        %5625 = vmatprep.subr.bf16.mxu0 %v4000
        %5626 = vmatpush1.bf16.msra.mxu0 %v3999
        %5627 = vmatprep.subr.bf16.mxu0 %v3998
        %5628 = vmatpush1.bf16.msra.mxu0 %v3997
        %5629 = vmatprep.subr.bf16.mxu0 %v3996
        %5630 = vmatpush1.bf16.msra.mxu0 %v3995
        %5631 = vmatprep.subr.bf16.mxu0 %v3994
        %5632 = vmatpush1.bf16.msra.mxu0 %v3993
        %5633 = vmatprep.subr.bf16.mxu0 %v3992
        %5634 = vmatpush1.bf16.msra.mxu0 %v3991
        %5635 = vmatprep.subr.bf16.mxu0 %v3990
        %5636 = vmatpush1.bf16.msra.mxu0 %v3989
        %5637 = vmatprep.subr.bf16.mxu0 %v3988
        %5638 = vmatpush1.bf16.msra.mxu0 %v3987
        %5639 = vmatprep.subr.bf16.mxu0 %v4018
        %5640 = vmatpush2.bf16.msra.mxu0 %v4017
        %5641 = vmatprep.subr.bf16.mxu0 %v4016
        %5642 = vmatpush2.bf16.msra.mxu0 %v4015
        %5643 = vmatprep.subr.bf16.mxu0 %v4014
        %5644 = vmatpush2.bf16.msra.mxu0 %v4013
        %5645 = vmatprep.subr.bf16.mxu0 %v4012
        %5646 = vmatpush2.bf16.msra.mxu0 %v4011
        %5647 = vmatprep.subr.bf16.mxu0 %v4010
        %5648 = vmatpush2.bf16.msra.mxu0 %v4009
        %5649 = vmatprep.subr.bf16.mxu0 %v4008
        %5650 = vmatpush2.bf16.msra.mxu0 %v4007
        %5651 = vmatprep.subr.bf16.mxu0 %v4006
        %5652 = vmatpush2.bf16.msra.mxu0 %v4005
        %5653 = vmatprep.subr.bf16.mxu0 %v4004
        %5654 = vmatpush2.bf16.msra.mxu0 %v4003
        %5655 = vmatprep.mubr.bf16.mxu0 %v1179
        %5656 = vmatmul.mubr.bf16.gmra.mxu0 %v1165
        %v5657 = vpop.f32.mrf.mxu0
        %v5658 = vadd.f32 %v5617, %v5657
        %v5659 = vpop.f32.mrf.mxu0
        %v5660 = vadd.f32 %v5619, %v5659
        %v5661 = vpop.f32.mrf.mxu0
        %v5662 = vpop.f32.mrf.mxu0
        %5663 = vdwg.mxu0
        %5664 = vmatprep.subr.bf16.mxu0 %v4034
        %5665 = vmatpush1.bf16.msra.mxu0 %v4033
        %5666 = vmatprep.subr.bf16.mxu0 %v4032
        %5667 = vmatpush1.bf16.msra.mxu0 %v4031
        %5668 = vmatprep.subr.bf16.mxu0 %v4030
        %5669 = vmatpush1.bf16.msra.mxu0 %v4029
        %5670 = vmatprep.subr.bf16.mxu0 %v4028
        %5671 = vmatpush1.bf16.msra.mxu0 %v4027
        %5672 = vmatprep.subr.bf16.mxu0 %v4026
        %5673 = vmatpush1.bf16.msra.mxu0 %v4025
        %5674 = vmatprep.subr.bf16.mxu0 %v4024
        %5675 = vmatpush1.bf16.msra.mxu0 %v4023
        %5676 = vmatprep.subr.bf16.mxu0 %v4022
        %5677 = vmatpush1.bf16.msra.mxu0 %v4021
        %5678 = vmatprep.subr.bf16.mxu0 %v4020
        %5679 = vmatpush1.bf16.msra.mxu0 %v4019
        %5680 = vmatprep.subr.bf16.mxu0 %v4050
        %5681 = vmatpush2.bf16.msra.mxu0 %v4049
        %5682 = vmatprep.subr.bf16.mxu0 %v4048
        %5683 = vmatpush2.bf16.msra.mxu0 %v4047
        %5684 = vmatprep.subr.bf16.mxu0 %v4046
        %5685 = vmatpush2.bf16.msra.mxu0 %v4045
        %5686 = vmatprep.subr.bf16.mxu0 %v4044
        %5687 = vmatpush2.bf16.msra.mxu0 %v4043
        %5688 = vmatprep.subr.bf16.mxu0 %v4042
        %5689 = vmatpush2.bf16.msra.mxu0 %v4041
        %5690 = vmatprep.subr.bf16.mxu0 %v4040
        %5691 = vmatpush2.bf16.msra.mxu0 %v4039
        %5692 = vmatprep.subr.bf16.mxu0 %v4038
        %5693 = vmatpush2.bf16.msra.mxu0 %v4037
        %5694 = vmatprep.subr.bf16.mxu0 %v4036
        %5695 = vmatpush2.bf16.msra.mxu0 %v4035
        %5696 = vmatprep.mubr.bf16.mxu0 %v1189
        %5697 = vmatmul.mubr.bf16.gmra.mxu0 %v1187
        %v5698 = vpop.f32.mrf.mxu0
        %v5699 = vadd.f32 %v5658, %v5698
        %v5700 = vpop.f32.mrf.mxu0
        %v5701 = vadd.f32 %v5660, %v5700
        %v5702 = vpop.f32.mrf.mxu0
        %v5703 = vpop.f32.mrf.mxu0
        %5704 = vdwg.mxu0
        %5705 = vmatprep.subr.bf16.mxu0 %v4066
        %5706 = vmatpush1.bf16.msra.mxu0 %v4065
        %5707 = vmatprep.subr.bf16.mxu0 %v4064
        %5708 = vmatpush1.bf16.msra.mxu0 %v4063
        %5709 = vmatprep.subr.bf16.mxu0 %v4062
        %5710 = vmatpush1.bf16.msra.mxu0 %v4061
        %5711 = vmatprep.subr.bf16.mxu0 %v4060
        %5712 = vmatpush1.bf16.msra.mxu0 %v4059
        %5713 = vmatprep.subr.bf16.mxu0 %v4058
        %5714 = vmatpush1.bf16.msra.mxu0 %v4057
        %5715 = vmatprep.subr.bf16.mxu0 %v4056
        %5716 = vmatpush1.bf16.msra.mxu0 %v4055
        %5717 = vmatprep.subr.bf16.mxu0 %v4054
        %5718 = vmatpush1.bf16.msra.mxu0 %v4053
        %5719 = vmatprep.subr.bf16.mxu0 %v4052
        %5720 = vmatpush1.bf16.msra.mxu0 %v4051
        %5721 = vmatprep.subr.bf16.mxu0 %v4082
        %5722 = vmatpush2.bf16.msra.mxu0 %v4081
        %5723 = vmatprep.subr.bf16.mxu0 %v4080
        %5724 = vmatpush2.bf16.msra.mxu0 %v4079
        %5725 = vmatprep.subr.bf16.mxu0 %v4078
        %5726 = vmatpush2.bf16.msra.mxu0 %v4077
        %5727 = vmatprep.subr.bf16.mxu0 %v4076
        %5728 = vmatpush2.bf16.msra.mxu0 %v4075
        %5729 = vmatprep.subr.bf16.mxu0 %v4074
        %5730 = vmatpush2.bf16.msra.mxu0 %v4073
        %5731 = vmatprep.subr.bf16.mxu0 %v4072
        %5732 = vmatpush2.bf16.msra.mxu0 %v4071
        %5733 = vmatprep.subr.bf16.mxu0 %v4070
        %5734 = vmatpush2.bf16.msra.mxu0 %v4069
        %5735 = vmatprep.subr.bf16.mxu0 %v4068
        %5736 = vmatpush2.bf16.msra.mxu0 %v4067
        %5737 = vmatprep.mubr.bf16.mxu0 %v1186
        %5738 = vmatmul.mubr.bf16.gmra.mxu0 %v1172
        %v5739 = vpop.f32.mrf.mxu0
        %v5740 = vadd.f32 %v5699, %v5739
        %v5741 = vpop.f32.mrf.mxu0
        %v5742 = vadd.f32 %v5701, %v5741
        %v5743 = vpop.f32.mrf.mxu0
        %v5744 = vpop.f32.mrf.mxu0
        %5745 = vdwg.mxu0
        %5746 = vmatprep.subr.bf16.mxu0 %v4098
        %5747 = vmatpush1.bf16.msra.mxu0 %v4097
        %5748 = vmatprep.subr.bf16.mxu0 %v4096
        %5749 = vmatpush1.bf16.msra.mxu0 %v4095
        %5750 = vmatprep.subr.bf16.mxu0 %v4094
        %5751 = vmatpush1.bf16.msra.mxu0 %v4093
        %5752 = vmatprep.subr.bf16.mxu0 %v4092
        %5753 = vmatpush1.bf16.msra.mxu0 %v4091
        %5754 = vmatprep.subr.bf16.mxu0 %v4090
        %5755 = vmatpush1.bf16.msra.mxu0 %v4089
        %5756 = vmatprep.subr.bf16.mxu0 %v4088
        %5757 = vmatpush1.bf16.msra.mxu0 %v4087
        %5758 = vmatprep.subr.bf16.mxu0 %v4086
        %5759 = vmatpush1.bf16.msra.mxu0 %v4085
        %5760 = vmatprep.subr.bf16.mxu0 %v4084
        %5761 = vmatpush1.bf16.msra.mxu0 %v4083
        %5762 = vmatprep.subr.bf16.mxu0 %v4114
        %5763 = vmatpush2.bf16.msra.mxu0 %v4113
        %5764 = vmatprep.subr.bf16.mxu0 %v4112
        %5765 = vmatpush2.bf16.msra.mxu0 %v4111
        %5766 = vmatprep.subr.bf16.mxu0 %v4110
        %5767 = vmatpush2.bf16.msra.mxu0 %v4109
        %5768 = vmatprep.subr.bf16.mxu0 %v4108
        %5769 = vmatpush2.bf16.msra.mxu0 %v4107
        %5770 = vmatprep.subr.bf16.mxu0 %v4106
        %5771 = vmatpush2.bf16.msra.mxu0 %v4105
        %5772 = vmatprep.subr.bf16.mxu0 %v4104
        %5773 = vmatpush2.bf16.msra.mxu0 %v4103
        %5774 = vmatprep.subr.bf16.mxu0 %v4102
        %5775 = vmatpush2.bf16.msra.mxu0 %v4101
        %5776 = vmatprep.subr.bf16.mxu0 %v4100
        %5777 = vmatpush2.bf16.msra.mxu0 %v4099
        %5778 = vmatprep.mubr.bf16.mxu0 %v1190
        %5779 = vmatmul.mubr.bf16.gmra.mxu0 %v1188
        %v5780 = vpop.f32.mrf.mxu0
        %v5781 = vadd.f32 %v5740, %v5780
        %v5782 = vpop.f32.mrf.mxu0
        %v5783 = vadd.f32 %v5742, %v5782
        %v5784 = vpop.f32.mrf.mxu0
        %v5785 = vpop.f32.mrf.mxu0
        %5786 = vdwg.mxu0
        %5787 = vmatprep.subr.bf16.mxu0 %v4130
        %5788 = vmatpush1.bf16.msra.mxu0 %v4129
        %5789 = vmatprep.subr.bf16.mxu0 %v4128
        %5790 = vmatpush1.bf16.msra.mxu0 %v4127
        %5791 = vmatprep.subr.bf16.mxu0 %v4126
        %5792 = vmatpush1.bf16.msra.mxu0 %v4125
        %5793 = vmatprep.subr.bf16.mxu0 %v4124
        %5794 = vmatpush1.bf16.msra.mxu0 %v4123
        %5795 = vmatprep.subr.bf16.mxu0 %v4122
        %5796 = vmatpush1.bf16.msra.mxu0 %v4121
        %5797 = vmatprep.subr.bf16.mxu0 %v4120
        %5798 = vmatpush1.bf16.msra.mxu0 %v4119
        %5799 = vmatprep.subr.bf16.mxu0 %v4118
        %5800 = vmatpush1.bf16.msra.mxu0 %v4117
        %5801 = vmatprep.subr.bf16.mxu0 %v4116
        %5802 = vmatpush1.bf16.msra.mxu0 %v4115
        %5803 = vmatprep.subr.bf16.mxu0 %v4146
        %5804 = vmatpush2.bf16.msra.mxu0 %v4145
        %5805 = vmatprep.subr.bf16.mxu0 %v4144
        %5806 = vmatpush2.bf16.msra.mxu0 %v4143
        %5807 = vmatprep.subr.bf16.mxu0 %v4142
        %5808 = vmatpush2.bf16.msra.mxu0 %v4141
        %5809 = vmatprep.subr.bf16.mxu0 %v4140
        %5810 = vmatpush2.bf16.msra.mxu0 %v4139
        %5811 = vmatprep.subr.bf16.mxu0 %v4138
        %5812 = vmatpush2.bf16.msra.mxu0 %v4137
        %5813 = vmatprep.subr.bf16.mxu0 %v4136
        %5814 = vmatpush2.bf16.msra.mxu0 %v4135
        %5815 = vmatprep.subr.bf16.mxu0 %v4134
        %5816 = vmatpush2.bf16.msra.mxu0 %v4133
        %5817 = vmatprep.subr.bf16.mxu0 %v4132
        %5818 = vmatpush2.bf16.msra.mxu0 %v4131
        %5819 = vmatprep.mubr.bf16.mxu0 %v1228
        %5820 = vmatmul.mubr.bf16.gmra.mxu0 %v1214
        %v5821 = vpop.f32.mrf.mxu0
        %v5822 = vadd.f32 %v5781, %v5821
        %v5823 = vpop.f32.mrf.mxu0
        %v5824 = vadd.f32 %v5783, %v5823
        %v5825 = vpop.f32.mrf.mxu0
        %v5826 = vpop.f32.mrf.mxu0
        %5827 = vdwg.mxu0
        %5828 = vmatprep.subr.bf16.mxu0 %v4162
        %5829 = vmatpush1.bf16.msra.mxu0 %v4161
        %5830 = vmatprep.subr.bf16.mxu0 %v4160
        %5831 = vmatpush1.bf16.msra.mxu0 %v4159
        %5832 = vmatprep.subr.bf16.mxu0 %v4158
        %5833 = vmatpush1.bf16.msra.mxu0 %v4157
        %5834 = vmatprep.subr.bf16.mxu0 %v4156
        %5835 = vmatpush1.bf16.msra.mxu0 %v4155
        %5836 = vmatprep.subr.bf16.mxu0 %v4154
        %5837 = vmatpush1.bf16.msra.mxu0 %v4153
        %5838 = vmatprep.subr.bf16.mxu0 %v4152
        %5839 = vmatpush1.bf16.msra.mxu0 %v4151
        %5840 = vmatprep.subr.bf16.mxu0 %v4150
        %5841 = vmatpush1.bf16.msra.mxu0 %v4149
        %5842 = vmatprep.subr.bf16.mxu0 %v4148
        %5843 = vmatpush1.bf16.msra.mxu0 %v4147
        %5844 = vmatprep.subr.bf16.mxu0 %v4178
        %5845 = vmatpush2.bf16.msra.mxu0 %v4177
        %5846 = vmatprep.subr.bf16.mxu0 %v4176
        %5847 = vmatpush2.bf16.msra.mxu0 %v4175
        %5848 = vmatprep.subr.bf16.mxu0 %v4174
        %5849 = vmatpush2.bf16.msra.mxu0 %v4173
        %5850 = vmatprep.subr.bf16.mxu0 %v4172
        %5851 = vmatpush2.bf16.msra.mxu0 %v4171
        %5852 = vmatprep.subr.bf16.mxu0 %v4170
        %5853 = vmatpush2.bf16.msra.mxu0 %v4169
        %5854 = vmatprep.subr.bf16.mxu0 %v4168
        %5855 = vmatpush2.bf16.msra.mxu0 %v4167
        %5856 = vmatprep.subr.bf16.mxu0 %v4166
        %5857 = vmatpush2.bf16.msra.mxu0 %v4165
        %5858 = vmatprep.subr.bf16.mxu0 %v4164
        %5859 = vmatpush2.bf16.msra.mxu0 %v4163
        %5860 = vmatprep.mubr.bf16.mxu0 %v1238
        %5861 = vmatmul.mubr.bf16.gmra.mxu0 %v1236
        %v5862 = vpop.f32.mrf.mxu0
        %v5863 = vadd.f32 %v5822, %v5862
        %v5864 = vpop.f32.mrf.mxu0
        %v5865 = vadd.f32 %v5824, %v5864
        %v5866 = vpop.f32.mrf.mxu0
        %v5867 = vpop.f32.mrf.mxu0
        %5868 = vdwg.mxu0
        %5869 = vmatprep.subr.bf16.mxu0 %v4194
        %5870 = vmatpush1.bf16.msra.mxu0 %v4193
        %5871 = vmatprep.subr.bf16.mxu0 %v4192
        %5872 = vmatpush1.bf16.msra.mxu0 %v4191
        %5873 = vmatprep.subr.bf16.mxu0 %v4190
        %5874 = vmatpush1.bf16.msra.mxu0 %v4189
        %5875 = vmatprep.subr.bf16.mxu0 %v4188
        %5876 = vmatpush1.bf16.msra.mxu0 %v4187
        %5877 = vmatprep.subr.bf16.mxu0 %v4186
        %5878 = vmatpush1.bf16.msra.mxu0 %v4185
        %5879 = vmatprep.subr.bf16.mxu0 %v4184
        %5880 = vmatpush1.bf16.msra.mxu0 %v4183
        %5881 = vmatprep.subr.bf16.mxu0 %v4182
        %5882 = vmatpush1.bf16.msra.mxu0 %v4181
        %5883 = vmatprep.subr.bf16.mxu0 %v4180
        %5884 = vmatpush1.bf16.msra.mxu0 %v4179
        %5885 = vmatprep.subr.bf16.mxu0 %v4210
        %5886 = vmatpush2.bf16.msra.mxu0 %v4209
        %5887 = vmatprep.subr.bf16.mxu0 %v4208
        %5888 = vmatpush2.bf16.msra.mxu0 %v4207
        %5889 = vmatprep.subr.bf16.mxu0 %v4206
        %5890 = vmatpush2.bf16.msra.mxu0 %v4205
        %5891 = vmatprep.subr.bf16.mxu0 %v4204
        %5892 = vmatpush2.bf16.msra.mxu0 %v4203
        %5893 = vmatprep.subr.bf16.mxu0 %v4202
        %5894 = vmatpush2.bf16.msra.mxu0 %v4201
        %5895 = vmatprep.subr.bf16.mxu0 %v4200
        %5896 = vmatpush2.bf16.msra.mxu0 %v4199
        %5897 = vmatprep.subr.bf16.mxu0 %v4198
        %5898 = vmatpush2.bf16.msra.mxu0 %v4197
        %5899 = vmatprep.subr.bf16.mxu0 %v4196
        %5900 = vmatpush2.bf16.msra.mxu0 %v4195
        %5901 = vmatprep.mubr.bf16.mxu0 %v1235
        %5902 = vmatmul.mubr.bf16.gmra.mxu0 %v1221
        %v5903 = vpop.f32.mrf.mxu0
        %v5904 = vadd.f32 %v5863, %v5903
        %v5905 = vpop.f32.mrf.mxu0
        %v5906 = vadd.f32 %v5865, %v5905
        %v5907 = vpop.f32.mrf.mxu0
        %v5908 = vpop.f32.mrf.mxu0
        %5909 = vdwg.mxu0
        %5910 = vmatprep.subr.bf16.mxu0 %v4226
        %5911 = vmatpush1.bf16.msra.mxu0 %v4225
        %5912 = vmatprep.subr.bf16.mxu0 %v4224
        %5913 = vmatpush1.bf16.msra.mxu0 %v4223
        %5914 = vmatprep.subr.bf16.mxu0 %v4222
        %5915 = vmatpush1.bf16.msra.mxu0 %v4221
        %5916 = vmatprep.subr.bf16.mxu0 %v4220
        %5917 = vmatpush1.bf16.msra.mxu0 %v4219
        %5918 = vmatprep.subr.bf16.mxu0 %v4218
        %5919 = vmatpush1.bf16.msra.mxu0 %v4217
        %5920 = vmatprep.subr.bf16.mxu0 %v4216
        %5921 = vmatpush1.bf16.msra.mxu0 %v4215
        %5922 = vmatprep.subr.bf16.mxu0 %v4214
        %5923 = vmatpush1.bf16.msra.mxu0 %v4213
        %5924 = vmatprep.subr.bf16.mxu0 %v4212
        %5925 = vmatpush1.bf16.msra.mxu0 %v4211
        %5926 = vmatprep.subr.bf16.mxu0 %v4242
        %5927 = vmatpush2.bf16.msra.mxu0 %v4241
        %5928 = vmatprep.subr.bf16.mxu0 %v4240
        %5929 = vmatpush2.bf16.msra.mxu0 %v4239
        %5930 = vmatprep.subr.bf16.mxu0 %v4238
        %5931 = vmatpush2.bf16.msra.mxu0 %v4237
        %5932 = vmatprep.subr.bf16.mxu0 %v4236
        %5933 = vmatpush2.bf16.msra.mxu0 %v4235
        %5934 = vmatprep.subr.bf16.mxu0 %v4234
        %5935 = vmatpush2.bf16.msra.mxu0 %v4233
        %5936 = vmatprep.subr.bf16.mxu0 %v4232
        %5937 = vmatpush2.bf16.msra.mxu0 %v4231
        %5938 = vmatprep.subr.bf16.mxu0 %v4230
        %5939 = vmatpush2.bf16.msra.mxu0 %v4229
        %5940 = vmatprep.subr.bf16.mxu0 %v4228
        %5941 = vmatpush2.bf16.msra.mxu0 %v4227
        %5942 = vmatprep.mubr.bf16.mxu0 %v1239
        %5943 = vmatmul.mubr.bf16.gmra.mxu0 %v1237
        %v5944 = vpop.f32.mrf.mxu0
        %v5945 = vadd.f32 %v5904, %v5944
        %v5946 = vpop.f32.mrf.mxu0
        %v5947 = vadd.f32 %v5906, %v5946
        %v5948 = vpop.f32.mrf.mxu0
        %v5949 = vpop.f32.mrf.mxu0
        %5950 = vdwg.mxu0
        %5951 = vmatprep.subr.bf16.mxu0 %v4258
        %5952 = vmatpush1.bf16.msra.mxu0 %v4257
        %5953 = vmatprep.subr.bf16.mxu0 %v4256
        %5954 = vmatpush1.bf16.msra.mxu0 %v4255
        %5955 = vmatprep.subr.bf16.mxu0 %v4254
        %5956 = vmatpush1.bf16.msra.mxu0 %v4253
        %5957 = vmatprep.subr.bf16.mxu0 %v4252
        %5958 = vmatpush1.bf16.msra.mxu0 %v4251
        %5959 = vmatprep.subr.bf16.mxu0 %v4250
        %5960 = vmatpush1.bf16.msra.mxu0 %v4249
        %5961 = vmatprep.subr.bf16.mxu0 %v4248
        %5962 = vmatpush1.bf16.msra.mxu0 %v4247
        %5963 = vmatprep.subr.bf16.mxu0 %v4246
        %5964 = vmatpush1.bf16.msra.mxu0 %v4245
        %5965 = vmatprep.subr.bf16.mxu0 %v4244
        %5966 = vmatpush1.bf16.msra.mxu0 %v4243
        %5967 = vmatprep.subr.bf16.mxu0 %v4274
        %5968 = vmatpush2.bf16.msra.mxu0 %v4273
        %5969 = vmatprep.subr.bf16.mxu0 %v4272
        %5970 = vmatpush2.bf16.msra.mxu0 %v4271
        %5971 = vmatprep.subr.bf16.mxu0 %v4270
        %5972 = vmatpush2.bf16.msra.mxu0 %v4269
        %5973 = vmatprep.subr.bf16.mxu0 %v4268
        %5974 = vmatpush2.bf16.msra.mxu0 %v4267
        %5975 = vmatprep.subr.bf16.mxu0 %v4266
        %5976 = vmatpush2.bf16.msra.mxu0 %v4265
        %5977 = vmatprep.subr.bf16.mxu0 %v4264
        %5978 = vmatpush2.bf16.msra.mxu0 %v4263
        %5979 = vmatprep.subr.bf16.mxu0 %v4262
        %5980 = vmatpush2.bf16.msra.mxu0 %v4261
        %5981 = vmatprep.subr.bf16.mxu0 %v4260
        %5982 = vmatpush2.bf16.msra.mxu0 %v4259
        %5983 = vmatprep.mubr.bf16.mxu0 %v1277
        %5984 = vmatmul.mubr.bf16.gmra.mxu0 %v1263
        %v5985 = vpop.f32.mrf.mxu0
        %v5986 = vadd.f32 %v5945, %v5985
        %v5987 = vpop.f32.mrf.mxu0
        %v5988 = vadd.f32 %v5947, %v5987
        %v5989 = vpop.f32.mrf.mxu0
        %v5990 = vpop.f32.mrf.mxu0
        %5991 = vdwg.mxu0
        %5992 = vmatprep.subr.bf16.mxu0 %v4290
        %5993 = vmatpush1.bf16.msra.mxu0 %v4289
        %5994 = vmatprep.subr.bf16.mxu0 %v4288
        %5995 = vmatpush1.bf16.msra.mxu0 %v4287
        %5996 = vmatprep.subr.bf16.mxu0 %v4286
        %5997 = vmatpush1.bf16.msra.mxu0 %v4285
        %5998 = vmatprep.subr.bf16.mxu0 %v4284
        %5999 = vmatpush1.bf16.msra.mxu0 %v4283
        %6000 = vmatprep.subr.bf16.mxu0 %v4282
        %6001 = vmatpush1.bf16.msra.mxu0 %v4281
        %6002 = vmatprep.subr.bf16.mxu0 %v4280
        %6003 = vmatpush1.bf16.msra.mxu0 %v4279
        %6004 = vmatprep.subr.bf16.mxu0 %v4278
        %6005 = vmatpush1.bf16.msra.mxu0 %v4277
        %6006 = vmatprep.subr.bf16.mxu0 %v4276
        %6007 = vmatpush1.bf16.msra.mxu0 %v4275
        %6008 = vmatprep.subr.bf16.mxu0 %v4306
        %6009 = vmatpush2.bf16.msra.mxu0 %v4305
        %6010 = vmatprep.subr.bf16.mxu0 %v4304
        %6011 = vmatpush2.bf16.msra.mxu0 %v4303
        %6012 = vmatprep.subr.bf16.mxu0 %v4302
        %6013 = vmatpush2.bf16.msra.mxu0 %v4301
        %6014 = vmatprep.subr.bf16.mxu0 %v4300
        %6015 = vmatpush2.bf16.msra.mxu0 %v4299
        %6016 = vmatprep.subr.bf16.mxu0 %v4298
        %6017 = vmatpush2.bf16.msra.mxu0 %v4297
        %6018 = vmatprep.subr.bf16.mxu0 %v4296
        %6019 = vmatpush2.bf16.msra.mxu0 %v4295
        %6020 = vmatprep.subr.bf16.mxu0 %v4294
        %6021 = vmatpush2.bf16.msra.mxu0 %v4293
        %6022 = vmatprep.subr.bf16.mxu0 %v4292
        %6023 = vmatpush2.bf16.msra.mxu0 %v4291
        %6024 = vmatprep.mubr.bf16.mxu0 %v1287
        %6025 = vmatmul.mubr.bf16.gmra.mxu0 %v1285
        %v6026 = vpop.f32.mrf.mxu0
        %v6027 = vadd.f32 %v5986, %v6026
        %v6028 = vpop.f32.mrf.mxu0
        %v6029 = vadd.f32 %v5988, %v6028
        %v6030 = vpop.f32.mrf.mxu0
        %v6031 = vpop.f32.mrf.mxu0
        %6032 = vdwg.mxu0
        %6033 = vmatprep.subr.bf16.mxu0 %v4322
        %6034 = vmatpush1.bf16.msra.mxu0 %v4321
        %6035 = vmatprep.subr.bf16.mxu0 %v4320
        %6036 = vmatpush1.bf16.msra.mxu0 %v4319
        %6037 = vmatprep.subr.bf16.mxu0 %v4318
        %6038 = vmatpush1.bf16.msra.mxu0 %v4317
        %6039 = vmatprep.subr.bf16.mxu0 %v4316
        %6040 = vmatpush1.bf16.msra.mxu0 %v4315
        %6041 = vmatprep.subr.bf16.mxu0 %v4314
        %6042 = vmatpush1.bf16.msra.mxu0 %v4313
        %6043 = vmatprep.subr.bf16.mxu0 %v4312
        %6044 = vmatpush1.bf16.msra.mxu0 %v4311
        %6045 = vmatprep.subr.bf16.mxu0 %v4310
        %6046 = vmatpush1.bf16.msra.mxu0 %v4309
        %6047 = vmatprep.subr.bf16.mxu0 %v4308
        %6048 = vmatpush1.bf16.msra.mxu0 %v4307
        %6049 = vmatprep.subr.bf16.mxu0 %v4338
        %6050 = vmatpush2.bf16.msra.mxu0 %v4337
        %6051 = vmatprep.subr.bf16.mxu0 %v4336
        %6052 = vmatpush2.bf16.msra.mxu0 %v4335
        %6053 = vmatprep.subr.bf16.mxu0 %v4334
        %6054 = vmatpush2.bf16.msra.mxu0 %v4333
        %6055 = vmatprep.subr.bf16.mxu0 %v4332
        %6056 = vmatpush2.bf16.msra.mxu0 %v4331
        %6057 = vmatprep.subr.bf16.mxu0 %v4330
        %6058 = vmatpush2.bf16.msra.mxu0 %v4329
        %6059 = vmatprep.subr.bf16.mxu0 %v4328
        %6060 = vmatpush2.bf16.msra.mxu0 %v4327
        %6061 = vmatprep.subr.bf16.mxu0 %v4326
        %6062 = vmatpush2.bf16.msra.mxu0 %v4325
        %6063 = vmatprep.subr.bf16.mxu0 %v4324
        %6064 = vmatpush2.bf16.msra.mxu0 %v4323
        %6065 = vmatprep.mubr.bf16.mxu0 %v1284
        %6066 = vmatmul.mubr.bf16.gmra.mxu0 %v1270
        %v6067 = vpop.f32.mrf.mxu0
        %v6068 = vadd.f32 %v6027, %v6067
        %v6069 = vpop.f32.mrf.mxu0
        %v6070 = vadd.f32 %v6029, %v6069
        %v6071 = vpop.f32.mrf.mxu0
        %v6072 = vpop.f32.mrf.mxu0
        %6073 = vdwg.mxu0
        %6074 = vmatprep.subr.bf16.mxu0 %v4354
        %6075 = vmatpush1.bf16.msra.mxu0 %v4353
        %6076 = vmatprep.subr.bf16.mxu0 %v4352
        %6077 = vmatpush1.bf16.msra.mxu0 %v4351
        %6078 = vmatprep.subr.bf16.mxu0 %v4350
        %6079 = vmatpush1.bf16.msra.mxu0 %v4349
        %6080 = vmatprep.subr.bf16.mxu0 %v4348
        %6081 = vmatpush1.bf16.msra.mxu0 %v4347
        %6082 = vmatprep.subr.bf16.mxu0 %v4346
        %6083 = vmatpush1.bf16.msra.mxu0 %v4345
        %6084 = vmatprep.subr.bf16.mxu0 %v4344
        %6085 = vmatpush1.bf16.msra.mxu0 %v4343
        %6086 = vmatprep.subr.bf16.mxu0 %v4342
        %6087 = vmatpush1.bf16.msra.mxu0 %v4341
        %6088 = vmatprep.subr.bf16.mxu0 %v4340
        %6089 = vmatpush1.bf16.msra.mxu0 %v4339
        %6090 = vmatprep.subr.bf16.mxu0 %v4370
        %6091 = vmatpush2.bf16.msra.mxu0 %v4369
        %6092 = vmatprep.subr.bf16.mxu0 %v4368
        %6093 = vmatpush2.bf16.msra.mxu0 %v4367
        %6094 = vmatprep.subr.bf16.mxu0 %v4366
        %6095 = vmatpush2.bf16.msra.mxu0 %v4365
        %6096 = vmatprep.subr.bf16.mxu0 %v4364
        %6097 = vmatpush2.bf16.msra.mxu0 %v4363
        %6098 = vmatprep.subr.bf16.mxu0 %v4362
        %6099 = vmatpush2.bf16.msra.mxu0 %v4361
        %6100 = vmatprep.subr.bf16.mxu0 %v4360
        %6101 = vmatpush2.bf16.msra.mxu0 %v4359
        %6102 = vmatprep.subr.bf16.mxu0 %v4358
        %6103 = vmatpush2.bf16.msra.mxu0 %v4357
        %6104 = vmatprep.subr.bf16.mxu0 %v4356
        %6105 = vmatpush2.bf16.msra.mxu0 %v4355
        %6106 = vmatprep.mubr.bf16.mxu0 %v1288
        %6107 = vmatmul.mubr.bf16.gmra.mxu0 %v1286
        %v6108 = vpop.f32.mrf.mxu0
        %v6109 = vadd.f32 %v6068, %v6108
        %v6110 = vpop.f32.mrf.mxu0
        %v6111 = vadd.f32 %v6070, %v6110
        %v6112 = vpop.f32.mrf.mxu0
        %v6113 = vpop.f32.mrf.mxu0
        %6114 = vdwg.mxu0
        %6115 = vmatprep.subr.bf16.mxu0 %v4386
        %6116 = vmatpush1.bf16.msra.mxu0 %v4385
        %6117 = vmatprep.subr.bf16.mxu0 %v4384
        %6118 = vmatpush1.bf16.msra.mxu0 %v4383
        %6119 = vmatprep.subr.bf16.mxu0 %v4382
        %6120 = vmatpush1.bf16.msra.mxu0 %v4381
        %6121 = vmatprep.subr.bf16.mxu0 %v4380
        %6122 = vmatpush1.bf16.msra.mxu0 %v4379
        %6123 = vmatprep.subr.bf16.mxu0 %v4378
        %6124 = vmatpush1.bf16.msra.mxu0 %v4377
        %6125 = vmatprep.subr.bf16.mxu0 %v4376
        %6126 = vmatpush1.bf16.msra.mxu0 %v4375
        %6127 = vmatprep.subr.bf16.mxu0 %v4374
        %6128 = vmatpush1.bf16.msra.mxu0 %v4373
        %6129 = vmatprep.subr.bf16.mxu0 %v4372
        %6130 = vmatpush1.bf16.msra.mxu0 %v4371
        %6131 = vmatprep.subr.bf16.mxu0 %v4402
        %6132 = vmatpush2.bf16.msra.mxu0 %v4401
        %6133 = vmatprep.subr.bf16.mxu0 %v4400
        %6134 = vmatpush2.bf16.msra.mxu0 %v4399
        %6135 = vmatprep.subr.bf16.mxu0 %v4398
        %6136 = vmatpush2.bf16.msra.mxu0 %v4397
        %6137 = vmatprep.subr.bf16.mxu0 %v4396
        %6138 = vmatpush2.bf16.msra.mxu0 %v4395
        %6139 = vmatprep.subr.bf16.mxu0 %v4394
        %6140 = vmatpush2.bf16.msra.mxu0 %v4393
        %6141 = vmatprep.subr.bf16.mxu0 %v4392
        %6142 = vmatpush2.bf16.msra.mxu0 %v4391
        %6143 = vmatprep.subr.bf16.mxu0 %v4390
        %6144 = vmatpush2.bf16.msra.mxu0 %v4389
        %6145 = vmatprep.subr.bf16.mxu0 %v4388
        %6146 = vmatpush2.bf16.msra.mxu0 %v4387
        %6147 = vmatprep.mubr.bf16.mxu0 %v1326
        %6148 = vmatmul.mubr.bf16.gmra.mxu0 %v1312
        %v6149 = vpop.f32.mrf.mxu0
        %v6150 = vadd.f32 %v6109, %v6149
        %v6151 = vpop.f32.mrf.mxu0
        %v6152 = vadd.f32 %v6111, %v6151
        %v6153 = vpop.f32.mrf.mxu0
        %v6154 = vpop.f32.mrf.mxu0
        %6155 = vdwg.mxu0
        %6156 = vmatprep.subr.bf16.mxu0 %v4418
        %6157 = vmatpush1.bf16.msra.mxu0 %v4417
        %6158 = vmatprep.subr.bf16.mxu0 %v4416
        %6159 = vmatpush1.bf16.msra.mxu0 %v4415
        %6160 = vmatprep.subr.bf16.mxu0 %v4414
        %6161 = vmatpush1.bf16.msra.mxu0 %v4413
        %6162 = vmatprep.subr.bf16.mxu0 %v4412
        %6163 = vmatpush1.bf16.msra.mxu0 %v4411
        %6164 = vmatprep.subr.bf16.mxu0 %v4410
        %6165 = vmatpush1.bf16.msra.mxu0 %v4409
        %6166 = vmatprep.subr.bf16.mxu0 %v4408
        %6167 = vmatpush1.bf16.msra.mxu0 %v4407
        %6168 = vmatprep.subr.bf16.mxu0 %v4406
        %6169 = vmatpush1.bf16.msra.mxu0 %v4405
        %6170 = vmatprep.subr.bf16.mxu0 %v4404
        %6171 = vmatpush1.bf16.msra.mxu0 %v4403
        %6172 = vmatprep.subr.bf16.mxu0 %v4434
        %6173 = vmatpush2.bf16.msra.mxu0 %v4433
        %6174 = vmatprep.subr.bf16.mxu0 %v4432
        %6175 = vmatpush2.bf16.msra.mxu0 %v4431
        %6176 = vmatprep.subr.bf16.mxu0 %v4430
        %6177 = vmatpush2.bf16.msra.mxu0 %v4429
        %6178 = vmatprep.subr.bf16.mxu0 %v4428
        %6179 = vmatpush2.bf16.msra.mxu0 %v4427
        %6180 = vmatprep.subr.bf16.mxu0 %v4426
        %6181 = vmatpush2.bf16.msra.mxu0 %v4425
        %6182 = vmatprep.subr.bf16.mxu0 %v4424
        %6183 = vmatpush2.bf16.msra.mxu0 %v4423
        %6184 = vmatprep.subr.bf16.mxu0 %v4422
        %6185 = vmatpush2.bf16.msra.mxu0 %v4421
        %6186 = vmatprep.subr.bf16.mxu0 %v4420
        %6187 = vmatpush2.bf16.msra.mxu0 %v4419
        %6188 = vmatprep.mubr.bf16.mxu0 %v1336
        %6189 = vmatmul.mubr.bf16.gmra.mxu0 %v1334
        %v6190 = vpop.f32.mrf.mxu0
        %v6191 = vadd.f32 %v6150, %v6190
        %v6192 = vpop.f32.mrf.mxu0
        %v6193 = vadd.f32 %v6152, %v6192
        %v6194 = vpop.f32.mrf.mxu0
        %v6195 = vpop.f32.mrf.mxu0
        %6196 = vdwg.mxu0
        %6197 = vmatprep.subr.bf16.mxu0 %v4450
        %6198 = vmatpush1.bf16.msra.mxu0 %v4449
        %6199 = vmatprep.subr.bf16.mxu0 %v4448
        %6200 = vmatpush1.bf16.msra.mxu0 %v4447
        %6201 = vmatprep.subr.bf16.mxu0 %v4446
        %6202 = vmatpush1.bf16.msra.mxu0 %v4445
        %6203 = vmatprep.subr.bf16.mxu0 %v4444
        %6204 = vmatpush1.bf16.msra.mxu0 %v4443
        %6205 = vmatprep.subr.bf16.mxu0 %v4442
        %6206 = vmatpush1.bf16.msra.mxu0 %v4441
        %6207 = vmatprep.subr.bf16.mxu0 %v4440
        %6208 = vmatpush1.bf16.msra.mxu0 %v4439
        %6209 = vmatprep.subr.bf16.mxu0 %v4438
        %6210 = vmatpush1.bf16.msra.mxu0 %v4437
        %6211 = vmatprep.subr.bf16.mxu0 %v4436
        %6212 = vmatpush1.bf16.msra.mxu0 %v4435
        %6213 = vmatprep.subr.bf16.mxu0 %v4466
        %6214 = vmatpush2.bf16.msra.mxu0 %v4465
        %6215 = vmatprep.subr.bf16.mxu0 %v4464
        %6216 = vmatpush2.bf16.msra.mxu0 %v4463
        %6217 = vmatprep.subr.bf16.mxu0 %v4462
        %6218 = vmatpush2.bf16.msra.mxu0 %v4461
        %6219 = vmatprep.subr.bf16.mxu0 %v4460
        %6220 = vmatpush2.bf16.msra.mxu0 %v4459
        %6221 = vmatprep.subr.bf16.mxu0 %v4458
        %6222 = vmatpush2.bf16.msra.mxu0 %v4457
        %6223 = vmatprep.subr.bf16.mxu0 %v4456
        %6224 = vmatpush2.bf16.msra.mxu0 %v4455
        %6225 = vmatprep.subr.bf16.mxu0 %v4454
        %6226 = vmatpush2.bf16.msra.mxu0 %v4453
        %6227 = vmatprep.subr.bf16.mxu0 %v4452
        %6228 = vmatpush2.bf16.msra.mxu0 %v4451
        %6229 = vmatprep.mubr.bf16.mxu0 %v1333
        %6230 = vmatmul.mubr.bf16.gmra.mxu0 %v1319
        %v6231 = vpop.f32.mrf.mxu0
        %v6232 = vadd.f32 %v6191, %v6231
        %v6233 = vpop.f32.mrf.mxu0
        %v6234 = vadd.f32 %v6193, %v6233
        %v6235 = vpop.f32.mrf.mxu0
        %v6236 = vpop.f32.mrf.mxu0
        %6237 = vdwg.mxu0
        %6238 = vmatprep.subr.bf16.mxu0 %v4482
        %6239 = vmatpush1.bf16.msra.mxu0 %v4481
        %6240 = vmatprep.subr.bf16.mxu0 %v4480
        %6241 = vmatpush1.bf16.msra.mxu0 %v4479
        %6242 = vmatprep.subr.bf16.mxu0 %v4478
        %6243 = vmatpush1.bf16.msra.mxu0 %v4477
        %6244 = vmatprep.subr.bf16.mxu0 %v4476
        %6245 = vmatpush1.bf16.msra.mxu0 %v4475
        %6246 = vmatprep.subr.bf16.mxu0 %v4474
        %6247 = vmatpush1.bf16.msra.mxu0 %v4473
        %6248 = vmatprep.subr.bf16.mxu0 %v4472
        %6249 = vmatpush1.bf16.msra.mxu0 %v4471
        %6250 = vmatprep.subr.bf16.mxu0 %v4470
        %6251 = vmatpush1.bf16.msra.mxu0 %v4469
        %6252 = vmatprep.subr.bf16.mxu0 %v4468
        %6253 = vmatpush1.bf16.msra.mxu0 %v4467
        %6254 = vmatprep.subr.bf16.mxu0 %v4498
        %6255 = vmatpush2.bf16.msra.mxu0 %v4497
        %6256 = vmatprep.subr.bf16.mxu0 %v4496
        %6257 = vmatpush2.bf16.msra.mxu0 %v4495
        %6258 = vmatprep.subr.bf16.mxu0 %v4494
        %6259 = vmatpush2.bf16.msra.mxu0 %v4493
        %6260 = vmatprep.subr.bf16.mxu0 %v4492
        %6261 = vmatpush2.bf16.msra.mxu0 %v4491
        %6262 = vmatprep.subr.bf16.mxu0 %v4490
        %6263 = vmatpush2.bf16.msra.mxu0 %v4489
        %6264 = vmatprep.subr.bf16.mxu0 %v4488
        %6265 = vmatpush2.bf16.msra.mxu0 %v4487
        %6266 = vmatprep.subr.bf16.mxu0 %v4486
        %6267 = vmatpush2.bf16.msra.mxu0 %v4485
        %6268 = vmatprep.subr.bf16.mxu0 %v4484
        %6269 = vmatpush2.bf16.msra.mxu0 %v4483
        %6270 = vmatprep.mubr.bf16.mxu0 %v1337
        %6271 = vmatmul.mubr.bf16.gmra.mxu0 %v1335
        %v6272 = vpop.f32.mrf.mxu0
        %v6273 = vadd.f32 %v6232, %v6272
        %v6274 = vpop.f32.mrf.mxu0
        %v6275 = vadd.f32 %v6234, %v6274
        %v6276 = vpop.f32.mrf.mxu0
        %v6277 = vpop.f32.mrf.mxu0
        %6278 = vdwg.mxu0
        %6279 = vmatprep.subr.bf16.mxu0 %v4514
        %6280 = vmatpush1.bf16.msra.mxu0 %v4513
        %6281 = vmatprep.subr.bf16.mxu0 %v4512
        %6282 = vmatpush1.bf16.msra.mxu0 %v4511
        %6283 = vmatprep.subr.bf16.mxu0 %v4510
        %6284 = vmatpush1.bf16.msra.mxu0 %v4509
        %6285 = vmatprep.subr.bf16.mxu0 %v4508
        %6286 = vmatpush1.bf16.msra.mxu0 %v4507
        %6287 = vmatprep.subr.bf16.mxu0 %v4506
        %6288 = vmatpush1.bf16.msra.mxu0 %v4505
        %6289 = vmatprep.subr.bf16.mxu0 %v4504
        %6290 = vmatpush1.bf16.msra.mxu0 %v4503
        %6291 = vmatprep.subr.bf16.mxu0 %v4502
        %6292 = vmatpush1.bf16.msra.mxu0 %v4501
        %6293 = vmatprep.subr.bf16.mxu0 %v4500
        %6294 = vmatpush1.bf16.msra.mxu0 %v4499
        %6295 = vmatprep.subr.bf16.mxu0 %v4530
        %6296 = vmatpush2.bf16.msra.mxu0 %v4529
        %6297 = vmatprep.subr.bf16.mxu0 %v4528
        %6298 = vmatpush2.bf16.msra.mxu0 %v4527
        %6299 = vmatprep.subr.bf16.mxu0 %v4526
        %6300 = vmatpush2.bf16.msra.mxu0 %v4525
        %6301 = vmatprep.subr.bf16.mxu0 %v4524
        %6302 = vmatpush2.bf16.msra.mxu0 %v4523
        %6303 = vmatprep.subr.bf16.mxu0 %v4522
        %6304 = vmatpush2.bf16.msra.mxu0 %v4521
        %6305 = vmatprep.subr.bf16.mxu0 %v4520
        %6306 = vmatpush2.bf16.msra.mxu0 %v4519
        %6307 = vmatprep.subr.bf16.mxu0 %v4518
        %6308 = vmatpush2.bf16.msra.mxu0 %v4517
        %6309 = vmatprep.subr.bf16.mxu0 %v4516
        %6310 = vmatpush2.bf16.msra.mxu0 %v4515
        %6311 = vmatprep.mubr.bf16.mxu0 %v1375
        %6312 = vmatmul.mubr.bf16.gmra.mxu0 %v1361
        %v6313 = vpop.f32.mrf.mxu0
        %v6314 = vadd.f32 %v6273, %v6313
        %v6315 = vpop.f32.mrf.mxu0
        %v6316 = vadd.f32 %v6275, %v6315
        %v6317 = vpop.f32.mrf.mxu0
        %v6318 = vpop.f32.mrf.mxu0
        %6319 = vdwg.mxu0
        %6320 = vmatprep.subr.bf16.mxu0 %v4546
        %6321 = vmatpush1.bf16.msra.mxu0 %v4545
        %6322 = vmatprep.subr.bf16.mxu0 %v4544
        %6323 = vmatpush1.bf16.msra.mxu0 %v4543
        %6324 = vmatprep.subr.bf16.mxu0 %v4542
        %6325 = vmatpush1.bf16.msra.mxu0 %v4541
        %6326 = vmatprep.subr.bf16.mxu0 %v4540
        %6327 = vmatpush1.bf16.msra.mxu0 %v4539
        %6328 = vmatprep.subr.bf16.mxu0 %v4538
        %6329 = vmatpush1.bf16.msra.mxu0 %v4537
        %6330 = vmatprep.subr.bf16.mxu0 %v4536
        %6331 = vmatpush1.bf16.msra.mxu0 %v4535
        %6332 = vmatprep.subr.bf16.mxu0 %v4534
        %6333 = vmatpush1.bf16.msra.mxu0 %v4533
        %6334 = vmatprep.subr.bf16.mxu0 %v4532
        %6335 = vmatpush1.bf16.msra.mxu0 %v4531
        %6336 = vmatprep.subr.bf16.mxu0 %v4562
        %6337 = vmatpush2.bf16.msra.mxu0 %v4561
        %6338 = vmatprep.subr.bf16.mxu0 %v4560
        %6339 = vmatpush2.bf16.msra.mxu0 %v4559
        %6340 = vmatprep.subr.bf16.mxu0 %v4558
        %6341 = vmatpush2.bf16.msra.mxu0 %v4557
        %6342 = vmatprep.subr.bf16.mxu0 %v4556
        %6343 = vmatpush2.bf16.msra.mxu0 %v4555
        %6344 = vmatprep.subr.bf16.mxu0 %v4554
        %6345 = vmatpush2.bf16.msra.mxu0 %v4553
        %6346 = vmatprep.subr.bf16.mxu0 %v4552
        %6347 = vmatpush2.bf16.msra.mxu0 %v4551
        %6348 = vmatprep.subr.bf16.mxu0 %v4550
        %6349 = vmatpush2.bf16.msra.mxu0 %v4549
        %6350 = vmatprep.subr.bf16.mxu0 %v4548
        %6351 = vmatpush2.bf16.msra.mxu0 %v4547
        %6352 = vmatprep.mubr.bf16.mxu0 %v1385
        %6353 = vmatmul.mubr.bf16.gmra.mxu0 %v1383
        %v6354 = vpop.f32.mrf.mxu0
        %v6355 = vadd.f32 %v6314, %v6354
        %v6356 = vpop.f32.mrf.mxu0
        %v6357 = vadd.f32 %v6316, %v6356
        %v6358 = vpop.f32.mrf.mxu0
        %v6359 = vpop.f32.mrf.mxu0
        %6360 = vdwg.mxu0
        %6361 = vmatprep.subr.bf16.mxu0 %v4578
        %6362 = vmatpush1.bf16.msra.mxu0 %v4577
        %6363 = vmatprep.subr.bf16.mxu0 %v4576
        %6364 = vmatpush1.bf16.msra.mxu0 %v4575
        %6365 = vmatprep.subr.bf16.mxu0 %v4574
        %6366 = vmatpush1.bf16.msra.mxu0 %v4573
        %6367 = vmatprep.subr.bf16.mxu0 %v4572
        %6368 = vmatpush1.bf16.msra.mxu0 %v4571
        %6369 = vmatprep.subr.bf16.mxu0 %v4570
        %6370 = vmatpush1.bf16.msra.mxu0 %v4569
        %6371 = vmatprep.subr.bf16.mxu0 %v4568
        %6372 = vmatpush1.bf16.msra.mxu0 %v4567
        %6373 = vmatprep.subr.bf16.mxu0 %v4566
        %6374 = vmatpush1.bf16.msra.mxu0 %v4565
        %6375 = vmatprep.subr.bf16.mxu0 %v4564
        %6376 = vmatpush1.bf16.msra.mxu0 %v4563
        %6377 = vmatprep.subr.bf16.mxu0 %v4594
        %6378 = vmatpush2.bf16.msra.mxu0 %v4593
        %6379 = vmatprep.subr.bf16.mxu0 %v4592
        %6380 = vmatpush2.bf16.msra.mxu0 %v4591
        %6381 = vmatprep.subr.bf16.mxu0 %v4590
        %6382 = vmatpush2.bf16.msra.mxu0 %v4589
        %6383 = vmatprep.subr.bf16.mxu0 %v4588
        %6384 = vmatpush2.bf16.msra.mxu0 %v4587
        %6385 = vmatprep.subr.bf16.mxu0 %v4586
        %6386 = vmatpush2.bf16.msra.mxu0 %v4585
        %6387 = vmatprep.subr.bf16.mxu0 %v4584
        %6388 = vmatpush2.bf16.msra.mxu0 %v4583
        %6389 = vmatprep.subr.bf16.mxu0 %v4582
        %6390 = vmatpush2.bf16.msra.mxu0 %v4581
        %6391 = vmatprep.subr.bf16.mxu0 %v4580
        %6392 = vmatpush2.bf16.msra.mxu0 %v4579
        %6393 = vmatprep.mubr.bf16.mxu0 %v1382
        %6394 = vmatmul.mubr.bf16.gmra.mxu0 %v1368
        %v6395 = vpop.f32.mrf.mxu0
        %v6396 = vadd.f32 %v6355, %v6395
        %v6397 = vpop.f32.mrf.mxu0
        %v6398 = vadd.f32 %v6357, %v6397
        %v6399 = vpop.f32.mrf.mxu0
        %v6400 = vpop.f32.mrf.mxu0
        %6401 = vdwg.mxu0
        %6402 = vmatprep.subr.bf16.mxu0 %v4610
        %6403 = vmatpush1.bf16.msra.mxu0 %v4609
        %6404 = vmatprep.subr.bf16.mxu0 %v4608
        %6405 = vmatpush1.bf16.msra.mxu0 %v4607
        %6406 = vmatprep.subr.bf16.mxu0 %v4606
        %6407 = vmatpush1.bf16.msra.mxu0 %v4605
        %6408 = vmatprep.subr.bf16.mxu0 %v4604
        %6409 = vmatpush1.bf16.msra.mxu0 %v4603
        %6410 = vmatprep.subr.bf16.mxu0 %v4602
        %6411 = vmatpush1.bf16.msra.mxu0 %v4601
        %6412 = vmatprep.subr.bf16.mxu0 %v4600
        %6413 = vmatpush1.bf16.msra.mxu0 %v4599
        %6414 = vmatprep.subr.bf16.mxu0 %v4598
        %6415 = vmatpush1.bf16.msra.mxu0 %v4597
        %6416 = vmatprep.subr.bf16.mxu0 %v4596
        %6417 = vmatpush1.bf16.msra.mxu0 %v4595
        %6418 = vmatprep.subr.bf16.mxu0 %v4626
        %6419 = vmatpush2.bf16.msra.mxu0 %v4625
        %6420 = vmatprep.subr.bf16.mxu0 %v4624
        %6421 = vmatpush2.bf16.msra.mxu0 %v4623
        %6422 = vmatprep.subr.bf16.mxu0 %v4622
        %6423 = vmatpush2.bf16.msra.mxu0 %v4621
        %6424 = vmatprep.subr.bf16.mxu0 %v4620
        %6425 = vmatpush2.bf16.msra.mxu0 %v4619
        %6426 = vmatprep.subr.bf16.mxu0 %v4618
        %6427 = vmatpush2.bf16.msra.mxu0 %v4617
        %6428 = vmatprep.subr.bf16.mxu0 %v4616
        %6429 = vmatpush2.bf16.msra.mxu0 %v4615
        %6430 = vmatprep.subr.bf16.mxu0 %v4614
        %6431 = vmatpush2.bf16.msra.mxu0 %v4613
        %6432 = vmatprep.subr.bf16.mxu0 %v4612
        %6433 = vmatpush2.bf16.msra.mxu0 %v4611
        %6434 = vmatprep.mubr.bf16.mxu0 %v1386
        %6435 = vmatmul.mubr.bf16.gmra.mxu0 %v1384
        %v6436 = vpop.f32.mrf.mxu0
        %v6437 = vadd.f32 %v6396, %v6436
        %v6438 = vpop.f32.mrf.mxu0
        %v6439 = vadd.f32 %v6398, %v6438
        %v6440 = vpop.f32.mrf.mxu0
        %v6441 = vpop.f32.mrf.mxu0
        %6442 = vdwg.mxu0
        %6443 = vmatprep.subr.bf16.mxu0 %v4642
        %6444 = vmatpush1.bf16.msra.mxu0 %v4641
        %6445 = vmatprep.subr.bf16.mxu0 %v4640
        %6446 = vmatpush1.bf16.msra.mxu0 %v4639
        %6447 = vmatprep.subr.bf16.mxu0 %v4638
        %6448 = vmatpush1.bf16.msra.mxu0 %v4637
        %6449 = vmatprep.subr.bf16.mxu0 %v4636
        %6450 = vmatpush1.bf16.msra.mxu0 %v4635
        %6451 = vmatprep.subr.bf16.mxu0 %v4634
        %6452 = vmatpush1.bf16.msra.mxu0 %v4633
        %6453 = vmatprep.subr.bf16.mxu0 %v4632
        %6454 = vmatpush1.bf16.msra.mxu0 %v4631
        %6455 = vmatprep.subr.bf16.mxu0 %v4630
        %6456 = vmatpush1.bf16.msra.mxu0 %v4629
        %6457 = vmatprep.subr.bf16.mxu0 %v4628
        %6458 = vmatpush1.bf16.msra.mxu0 %v4627
        %6459 = vmatprep.subr.bf16.mxu0 %v4658
        %6460 = vmatpush2.bf16.msra.mxu0 %v4657
        %6461 = vmatprep.subr.bf16.mxu0 %v4656
        %6462 = vmatpush2.bf16.msra.mxu0 %v4655
        %6463 = vmatprep.subr.bf16.mxu0 %v4654
        %6464 = vmatpush2.bf16.msra.mxu0 %v4653
        %6465 = vmatprep.subr.bf16.mxu0 %v4652
        %6466 = vmatpush2.bf16.msra.mxu0 %v4651
        %6467 = vmatprep.subr.bf16.mxu0 %v4650
        %6468 = vmatpush2.bf16.msra.mxu0 %v4649
        %6469 = vmatprep.subr.bf16.mxu0 %v4648
        %6470 = vmatpush2.bf16.msra.mxu0 %v4647
        %6471 = vmatprep.subr.bf16.mxu0 %v4646
        %6472 = vmatpush2.bf16.msra.mxu0 %v4645
        %6473 = vmatprep.subr.bf16.mxu0 %v4644
        %6474 = vmatpush2.bf16.msra.mxu0 %v4643
        %6475 = vmatprep.mubr.bf16.mxu0 %v1408
        %6476 = vmatmul.mubr.bf16.gmra.mxu0 %v1401
        %v6477 = vpop.f32.mrf.mxu0
        %v6478 = vadd.f32 %v6437, %v6477
        %v6479 = vpop.f32.mrf.mxu0
        %v6480 = vadd.f32 %v6439, %v6479
        %v6481 = vpop.f32.mrf.mxu0
        %v6482 = vpop.f32.mrf.mxu0
        %6483 = vdwg.mxu0
        %v6484 = vmax.f32 %v6478, 0.0
        %v6485 = vmax.f32 %v6480, 0.0
        %v6486 = vpack.c.bf16 %v6484, %v6484
        %v6487 = vpack.c.bf16 %v6485, %v6485
        %v6490 = vcombine.low %v6486, %v6487
        %v6492 = vunpack.c.l.s4 1966171168
        %v6493 = vunpack.c.0.s8 %v6492
        %v6494 = vlaneseq
        %v6495 = vshrl.u32 %v6494, 7
        %v6496 = vsub.s32 %v6493, %v6495
        %v6497 = vrot.slane %v6490, %v6496
        %v6499 = vunpack.c.l.s4 1966171168
        %v6500 = vunpack.c.0.s8 %v6499
        %v6501 = vlaneseq
        %v6502 = vshrl.u32 %v6501, 7
        %v6503 = vsub.s32 %v6500, %v6502
        %v6504 = vrot.slane %v6497, %v6503
        %6506 = vst [vmem:[%s263] sm:$0x3] %v6504
        %s6507 = smul.u32 %s24, 2
        %s6508 = sadd.s32 %s6507, %s25
        %s6509 = smul.u32 2, %s6508
        %p6510 = scmp.lt.s32.totalorder %s6509, 7
        %s6511 = scalar_select %p6510, %s6509, 7
        %s6512 = scalar_lea.vmem %s3, %s6511
        // Predicated region
        $region41: #{net_forward.1} parent=31 // pred_check
          %p6513 = pneg %p135
        $region42: #{net_forward.1} parent=31 // pred_check_branch
          %6515 = sbr.rel (%p6513) target = $region44
        $region43: #{net_forward.1} parent=31 // pred_region
          %s6516 = smul.u32 %s24, 2
          %s6517 = sadd.s32 %s6516, %s25
          %s6518 = smul.u32 2, %s6517
        $region44: #{net_forward.1} parent=31 // pred_fallthru
          _
      $region32: #{net_forward.1} parent=5 // pred_fallthru
        _
      %p6519 = scmp.le.s32.totalorder 2, %s15
      // Predicated region
      $region45: #{net_forward.1} parent=5 // pred_check
        %p6520 = pneg %p6519
      $region46: #{net_forward.1} parent=5 // pred_check_branch
        %6522 = sbr.rel (%p6520) target = $region48
      $region47: #{net_forward.1} parent=5 // pred_region
        %s6523 = ssub.s32 %s15, 2
        // Predicated region
        $region49: #{net_forward.1} parent=47 // pred_check
          %p6524 = pneg %p141
        $region50: #{net_forward.1} parent=47 // pred_check_branch
          %6526 = sbr.rel (%p6524) target = $region52
        $region51: #{net_forward.1} parent=47 // pred_region
          %s6527 = smul.u32 %s26, 2
          %s6528 = sadd.s32 %s6527, %s27
          %s6529 = smul.u32 2, %s6528
          %p6530 = scmp.lt.s32.totalorder %s6529, 7
          %s6531 = scalar_select %p6530, %s6529, 7
          %s6532 = scalar_lea.vmem %s3, %s6531
        $region52: #{net_forward.1} parent=47 // pred_fallthru
          _
      $region48: #{net_forward.1} parent=5 // pred_fallthru
        _
    $region6: #{net_forward.1} parent=1 // loop_footer
      %s19 = sadd.s32 1, %s15
    $region7: #{net_forward.1} parent=1 // loop_footer_branch
      %14 = sbr.rel target = $region3
    $region8: #{net_forward.1} parent=1 // loop_exit
      _
    %6533 = vsyncpa [#allocation3], 1
    %s6534 = scalar_lea.sflag [#allocation3], 1
    %6535 = vsyncpa %s6534, 1
    %6536 = vsyncpa [#allocation5], 1
    %s6537 = scalar_lea.sflag [#allocation5], 1
    %6538 = vsyncpa %s6537, 1

</llo_original>
